<compile_context>
chip_gen: v7x
topology: tpu7x:2x2x1
jax: 0.10.0
libtpu: 0.0.40
codegen_flags: <defaults>
</compile_context>

<pallas_src>
import math

import jax
import jax.numpy as jnp
from jax.experimental import pallas as pl
from jax.experimental.pallas import tpu as pltpu


def _round_up(x, m):
    return ((x + m - 1) // m) * m


# ---------------------------------------------------------------------------
# Fused InvertedResidual Pallas kernel
# ---------------------------------------------------------------------------

def _make_block_kernel(H, W, *, has_expand, use_res):
    """Builds the fused kernel: pw1 -> dw3x3 -> pw2 (+res), one image/step."""

    def kernel(*refs):
        if has_expand:
            (x_ref, w1_ref, b1_ref, dw_ref, b2_ref, w2_ref, b3_ref,
             o_ref, hid_scr) = refs
        else:
            (x_ref, dw_ref, b2_ref, w2_ref, b3_ref, o_ref, hid_scr) = refs

        xin = x_ref[0]                       # (H, W, Cin_p) f32
        cin_p = xin.shape[-1]
        ch = hid_scr.shape[-1]               # hidden_p (multiple of 128)

        # ---- 1x1 expansion conv: bf16 MXU, f32 accumulate, bias + ReLU6 ----
        if has_expand:
            x2d = xin.reshape(H * W, cin_p).astype(jnp.bfloat16)
            hid = jnp.dot(x2d, w1_ref[...],
                          preferred_element_type=jnp.float32)
            hid = jnp.clip(hid + b1_ref[...], 0.0, 6.0)
            hid3 = hid.reshape(H, W, ch)
        else:
            hid3 = xin                       # expand_ratio == 1: no pw1

        # ---- depthwise 3x3, stride 1, pad 1, fused BN bias + ReLU6 ----
        # Zero-padded hidden lives in VMEM scratch; take only 3 W (sublane)
        # shifted views and reuse them across the 3 dy (leading-axis) taps.
        hid_scr[...] = jnp.zeros_like(hid_scr)
        hid_scr[1:H + 1, 1:W + 1, :] = hid3
        wv = dw_ref[...]                                      # (9, ch) f32
        cols = [hid_scr[:, dx:dx + W, :] for dx in range(3)]  # (H+2, W, ch)
        acc = jnp.zeros((H, W, ch), jnp.float32)
        for dy in range(3):
            for dx in range(3):
                acc = acc + cols[dx][dy:dy + H] * wv[dy * 3 + dx]
        acc = jnp.clip(acc + b2_ref[0], 0.0, 6.0)

        # ---- 1x1 projection conv + bias + optional residual ----
        h2d = acc.reshape(H * W, ch).astype(jnp.bfloat16)
        out = jnp.dot(h2d, w2_ref[...], preferred_element_type=jnp.float32)
        out = out + b3_ref[...]
        if use_res:
            out = out + xin.reshape(H * W, cin_p)
        o_ref[0] = out.reshape(H, W, out.shape[-1])

    return kernel


def inverted_residual_forward(x_nchw, p):
    """Forward pass of one InvertedResidual block. x_nchw: (N, Cin, H, W)."""
    N, Cin, H, W = x_nchw.shape
    cin_p, hid_p, cout_p = p["cin_p"], p["hid_p"], p["cout_p"]

    # NCHW -> NHWC, pad channels to a lane-dense multiple of 128.
    x = jnp.transpose(x_nchw, (0, 2, 3, 1)).astype(jnp.float32)
    x = jnp.pad(x, ((0, 0), (0, 0), (0, 0), (0, cin_p - Cin)))

    kernel = _make_block_kernel(H, W, has_expand=p["has_expand"],
                                use_res=p["use_res"])

    args = [x]
    in_specs = [pl.BlockSpec((1, H, W, cin_p), lambda n: (n, 0, 0, 0))]
    if p["has_expand"]:
        args += [p["w1"], p["b1"]]
        in_specs += [pl.BlockSpec((cin_p, hid_p), lambda n: (0, 0)),
                     pl.BlockSpec((1, hid_p), lambda n: (0, 0))]
    args += [p["dw"], p["b2"], p["w2"], p["b3"]]
    in_specs += [pl.BlockSpec((9, hid_p), lambda n: (0, 0)),
                 pl.BlockSpec((1, hid_p), lambda n: (0, 0)),
                 pl.BlockSpec((hid_p, cout_p), lambda n: (0, 0)),
                 pl.BlockSpec((1, cout_p), lambda n: (0, 0))]

    wp = _round_up(W + 2, 8)   # sublane-aligned padded width for the scratch
    out = pl.pallas_call(
        kernel,
        out_shape=jax.ShapeDtypeStruct((N, H, W, cout_p), jnp.float32),
        grid=(N,),
        in_specs=in_specs,
        out_specs=pl.BlockSpec((1, H, W, cout_p), lambda n: (n, 0, 0, 0)),
        scratch_shapes=[pltpu.VMEM((H + 2, wp, hid_p), jnp.float32)],
        compiler_params=pltpu.CompilerParams(
            dimension_semantics=("parallel",)),
    )(*args)

    out = out[..., :p["oup"]]
    if p["stride"] == 2:
        # depthwise stride-2 == stride-1 then ::2 subsample (pw2 is 1x1).
        out = out[:, ::2, ::2, :]
    return jnp.transpose(out, (0, 3, 1, 2))   # back to NCHW


# ---------------------------------------------------------------------------
# Parameter construction (mirrors InvertedResidual._initialize_weights,
# BN folded in eval mode, scales folded into conv weights, channels padded).
# ---------------------------------------------------------------------------

def make_inverted_residual_params(key, inp, oup, stride, expand_ratio,
                                  omit_stride=False, no_res_connect=False,
                                  eps=1e-5):
    hidden = int(round(inp * expand_ratio))
    use_res = (not no_res_connect) and stride == 1 and inp == oup
    actual_stride = 1 if omit_stride else stride
    assert actual_stride in (1, 2)
    has_expand = expand_ratio != 1

    def bn_fold(c):
        # gamma=1, beta=0, running_mean=0, running_var=1 (fresh module).
        scale = jnp.ones((c,), jnp.float32) / jnp.sqrt(jnp.float32(1.0 + eps))
        bias = jnp.zeros((c,), jnp.float32)
        return scale, bias

    cin_p = _round_up(inp, 128)
    hid_p = _round_up(hidden, 128)
    cout_p = _round_up(oup, 128)

    p = dict(stride=actual_stride, oup=oup, use_res=use_res,
             has_expand=has_expand, cin_p=cin_p, hid_p=hid_p, cout_p=cout_p)

    if has_expand:
        key, k = jax.random.split(key)
        w1 = jax.random.normal(k, (inp, hidden), jnp.float32) \
            * jnp.float32(math.sqrt(2.0 / hidden))
        s1, b1 = bn_fold(hidden)
        w1 = w1 * s1[None, :]
        p["w1"] = jnp.pad(w1, ((0, cin_p - inp),
                               (0, hid_p - hidden))).astype(jnp.bfloat16)
        p["b1"] = jnp.pad(b1, (0, hid_p - hidden)).reshape(1, hid_p)

    key, k = jax.random.split(key)
    dw = jax.random.normal(k, (3, 3, hidden), jnp.float32) \
        * jnp.float32(math.sqrt(2.0 / (9 * hidden)))
    s2, b2 = bn_fold(hidden)
    dw = dw * s2[None, None, :]
    p["dw"] = jnp.pad(dw, ((0, 0), (0, 0),
                           (0, hid_p - hidden))).reshape(9, hid_p)
    p["b2"] = jnp.pad(b2, (0, hid_p - hidden)).reshape(1, hid_p)

    key, k = jax.random.split(key)
    w2 = jax.random.normal(k, (hidden, oup), jnp.float32) \
        * jnp.float32(math.sqrt(2.0 / oup))
    s3, b3 = bn_fold(oup)
    w2 = w2 * s3[None, :]
    p["w2"] = jnp.pad(w2, ((0, hid_p - hidden),
                           (0, cout_p - oup))).astype(jnp.bfloat16)
    p["b3"] = jnp.pad(b3, (0, cout_p - oup)).reshape(1, cout_p)
    return p


# ---------------------------------------------------------------------------
# Pure-JAX reference with identical numerics (bf16 MXU inputs, f32 accumulate)
# ---------------------------------------------------------------------------

def inverted_residual_reference(x_nchw, p):
    N, Cin, H, W = x_nchw.shape
    x = jnp.transpose(x_nchw, (0, 2, 3, 1)).astype(jnp.float32)
    xp = jnp.pad(x, ((0, 0), (0, 0), (0, 0), (0, p["cin_p"] - Cin)))
    if p["has_expand"]:
        hid = jnp.einsum("nhwc,cd->nhwd", xp.astype(jnp.bfloat16), p["w1"],
                         preferred_element_type=jnp.float32)
        hid = jnp.clip(hid + p["b1"][0], 0.0, 6.0)
    else:
        hid = xp
    hp = jnp.pad(hid, ((0, 0), (1, 1), (1, 1), (0, 0)))
    dw = p["dw"].reshape(3, 3, p["hid_p"])
    acc = jnp.zeros_like(hid)
    for dy in range(3):
        for dx in range(3):
            acc = acc + hp[:, dy:dy + H, dx:dx + W, :] * dw[dy, dx]
    acc = jnp.clip(acc + p["b2"][0], 0.0, 6.0)
    out = jnp.einsum("nhwc,cd->nhwd", acc.astype(jnp.bfloat16), p["w2"],
                     preferred_element_type=jnp.float32)
    out = out + p["b3"][0]
    if p["use_res"]:
        out = out + xp
    out = out[..., :p["oup"]]
    if p["stride"] == 2:
        out = out[:, ::2, ::2, :]
    return jnp.transpose(out, (0, 3, 1, 2))


# ---------------------------------------------------------------------------
# Main
# ---------------------------------------------------------------------------

if __name__ == "__main__":
    key = jax.random.PRNGKey(0)
    kx, ka, kb, kc = jax.random.split(key, 4)

    # NCHW input, like the PyTorch module.
    N, Cin, H, W = 2, 32, 16, 16
    x = jax.random.normal(kx, (N, Cin, H, W), jnp.float32)

    # Three representative InvertedResidual configurations.
    blk_a = make_inverted_residual_params(ka, inp=32, oup=32, stride=1,
                                          expand_ratio=6)   # residual path
    blk_b = make_inverted_residual_params(kb, inp=32, oup=16, stride=1,
                                          expand_ratio=1)   # no-expand path
    blk_c = make_inverted_residual_params(kc, inp=16, oup=24, stride=2,
                                          expand_ratio=6)   # stride-2 path

    fwd_a = jax.jit(lambda t: inverted_residual_forward(t, blk_a))
    fwd_b = jax.jit(lambda t: inverted_residual_forward(t, blk_b))
    fwd_c = jax.jit(lambda t: inverted_residual_forward(t, blk_c))

    ya = fwd_a(x)
    yb = fwd_b(ya)
    yc = fwd_c(yb)
    jax.block_until_ready(ya)
    jax.block_until_ready(yb)
    jax.block_until_ready(yc)

    assert ya.shape == (2, 32, 16, 16), ya.shape
    assert yb.shape == (2, 16, 16, 16), yb.shape
    assert yc.shape == (2, 24, 8, 8), yc.shape
    assert bool(jnp.all(jnp.isfinite(yc)))

    # Per-block correctness check against a pure-JAX reference using the
    # kernel's own inputs (isolates MXU/XLA accumulation-order differences).
    ra = inverted_residual_reference(x, blk_a)
    rb = inverted_residual_reference(ya, blk_b)
    rc = inverted_residual_reference(yb, blk_c)
    for got, ref in ((ya, ra), (yb, rb), (yc, rc)):
        err = float(jnp.max(jnp.abs(got - ref)))
        assert err < 2e-2, err

    print("KERNEL_OK")
</pallas_src>

<mosaic_0001>
module attributes {stable_mosaic.version = 11 : i64} {
  func.func @kernel(%arg0: i32, %arg1: memref<1x16x16x128xf32, #tpu.memory_space<vmem>>, %arg2: memref<128x256xbf16, #tpu.memory_space<vmem>>, %arg3: memref<1x256xf32, #tpu.memory_space<vmem>>, %arg4: memref<9x256xf32, #tpu.memory_space<vmem>>, %arg5: memref<1x256xf32, #tpu.memory_space<vmem>>, %arg6: memref<256x128xbf16, #tpu.memory_space<vmem>>, %arg7: memref<1x128xf32, #tpu.memory_space<vmem>>, %arg8: memref<1x16x16x128xf32, #tpu.memory_space<vmem>>, %arg9: memref<18x24x256xf32, #tpu.memory_space<vmem>>) attributes {dimension_semantics = [#tpu.dimension_semantics<parallel>], iteration_bounds = array<i64: 2>, scalar_prefetch = 0 : i64, scratch_operands = 1 : i64, tpu.core_type = #tpu.core_type<tc>, window_params = [{transform_indices = @transform_0, window_bounds = array<i64: 1, 16, 16, 128>}, {pipeline_mode = #tpu.pipeline_mode<synchronous>, transform_indices = @transform_1, window_bounds = array<i64: 128, 256>}, {pipeline_mode = #tpu.pipeline_mode<synchronous>, transform_indices = @transform_2, window_bounds = array<i64: 1, 256>}, {pipeline_mode = #tpu.pipeline_mode<synchronous>, transform_indices = @transform_3, window_bounds = array<i64: 9, 256>}, {pipeline_mode = #tpu.pipeline_mode<synchronous>, transform_indices = @transform_4, window_bounds = array<i64: 1, 256>}, {pipeline_mode = #tpu.pipeline_mode<synchronous>, transform_indices = @transform_5, window_bounds = array<i64: 256, 128>}, {pipeline_mode = #tpu.pipeline_mode<synchronous>, transform_indices = @transform_6, window_bounds = array<i64: 1, 128>}, {transform_indices = @transform_7, window_bounds = array<i64: 1, 16, 16, 128>}]} {
    %c0 = arith.constant 0 : index
    %c0_0 = arith.constant 0 : index
    %c0_1 = arith.constant 0 : index
    %c0_2 = arith.constant 0 : index
    %0 = vector.load %arg1[%c0, %c0_0, %c0_1, %c0_2] : memref<1x16x16x128xf32, #tpu.memory_space<vmem>>, vector<1x16x16x128xf32>
    %1 = vector.shape_cast %0 : vector<1x16x16x128xf32> to vector<16x16x128xf32>
    %2 = vector.shape_cast %1 : vector<16x16x128xf32> to vector<256x128xf32>
    %3 = arith.truncf %2 : vector<256x128xf32> to vector<256x128xbf16>
    %c0_3 = arith.constant 0 : index
    %c0_4 = arith.constant 0 : index
    %4 = vector.load %arg2[%c0_3, %c0_4] : memref<128x256xbf16, #tpu.memory_space<vmem>>, vector<128x256xbf16>
    %cst = arith.constant dense<0.000000e+00> : vector<256x256xf32>
    %5 = tpu.matmul %3, %4, %cst {dimension_numbers = #tpu.dot_dimension_numbers<[1], [0], [0], [1], [0, 0, 1, 1], [], []>} : vector<256x128xbf16>, vector<128x256xbf16>, vector<256x256xf32> -> vector<256x256xf32>
    %c0_5 = arith.constant 0 : index
    %c0_6 = arith.constant 0 : index
    %6 = vector.load %arg3[%c0_5, %c0_6] : memref<1x256xf32, #tpu.memory_space<vmem>>, vector<1x256xf32>
    %7 = vector.broadcast %6 : vector<1x256xf32> to vector<256x256xf32>
    %8 = arith.addf %5, %7 : vector<256x256xf32>
    %cst_7 = arith.constant 0.000000e+00 : f32
    %cst_8 = arith.constant 6.000000e+00 : f32
    %9 = vector.broadcast %cst_7 : f32 to vector<256x256xf32>
    %10 = arith.maximumf %9, %8 : vector<256x256xf32>
    %11 = vector.broadcast %cst_8 : f32 to vector<256x256xf32>
    %12 = arith.minimumf %11, %10 : vector<256x256xf32>
    %13 = vector.shape_cast %12 : vector<256x256xf32> to vector<16x16x256xf32>
    %cst_9 = arith.constant 0.000000e+00 : f32
    %14 = vector.broadcast %cst_9 : f32 to vector<18x24x256xf32>
    %c0_10 = arith.constant 0 : index
    %c0_11 = arith.constant 0 : index
    %c0_12 = arith.constant 0 : index
    %15 = vector.load %arg9[%c0_10, %c0_11, %c0_12] : memref<18x24x256xf32, #tpu.memory_space<vmem>>, vector<18x24x256xf32>
    tpu.vector_store %arg9[%c0_10, %c0_11, %c0_12], %14 {strides = array<i32>} : memref<18x24x256xf32, #tpu.memory_space<vmem>>, vector<18x24x256xf32>,
    %c1 = arith.constant 1 : index
    %c1_13 = arith.constant 1 : index
    %c0_14 = arith.constant 0 : index
    %16 = vector.load %arg9[%c1, %c1_13, %c0_14] : memref<18x24x256xf32, #tpu.memory_space<vmem>>, vector<16x16x256xf32>
    tpu.vector_store %arg9[%c1, %c1_13, %c0_14], %13 {strides = array<i32>} : memref<18x24x256xf32, #tpu.memory_space<vmem>>, vector<16x16x256xf32>,
    %c0_15 = arith.constant 0 : index
    %c0_16 = arith.constant 0 : index
    %17 = vector.load %arg4[%c0_15, %c0_16] : memref<9x256xf32, #tpu.memory_space<vmem>>, vector<9x256xf32>
    %c0_17 = arith.constant 0 : index
    %c0_18 = arith.constant 0 : index
    %c0_19 = arith.constant 0 : index
    %18 = vector.load %arg9[%c0_17, %c0_18, %c0_19] : memref<18x24x256xf32, #tpu.memory_space<vmem>>, vector<18x16x256xf32>
    %c0_20 = arith.constant 0 : index
    %c1_21 = arith.constant 1 : index
    %c0_22 = arith.constant 0 : index
    %19 = vector.load %arg9[%c0_20, %c1_21, %c0_22] : memref<18x24x256xf32, #tpu.memory_space<vmem>>, vector<18x16x256xf32>
    %c0_23 = arith.constant 0 : index
    %c2 = arith.constant 2 : index
    %c0_24 = arith.constant 0 : index
    %20 = vector.load %arg9[%c0_23, %c2, %c0_24] : memref<18x24x256xf32, #tpu.memory_space<vmem>>, vector<18x16x256xf32>
    %cst_25 = arith.constant 0.000000e+00 : f32
    %21 = vector.broadcast %cst_25 : f32 to vector<16x16x256xf32>
    %22 = vector.extract_strided_slice %18 {offsets = [0, 0, 0], sizes = [16, 16, 256], strides = [1, 1, 1]} : vector<18x16x256xf32> to vector<16x16x256xf32>
    %23 = vector.extract_strided_slice %17 {offsets = [0, 0], sizes = [1, 256], strides = [1, 1]} : vector<9x256xf32> to vector<1x256xf32>
    %24 = vector.shape_cast %23 : vector<1x256xf32> to vector<256xf32>
    %25 = vector.shape_cast %24 : vector<256xf32> to vector<1x1x256xf32>
    %26 = vector.broadcast %25 : vector<1x1x256xf32> to vector<16x16x256xf32>
    %27 = arith.mulf %22, %26 : vector<16x16x256xf32>
    %28 = arith.addf %21, %27 : vector<16x16x256xf32>
    %29 = vector.extract_strided_slice %19 {offsets = [0, 0, 0], sizes = [16, 16, 256], strides = [1, 1, 1]} : vector<18x16x256xf32> to vector<16x16x256xf32>
    %30 = vector.extract_strided_slice %17 {offsets = [1, 0], sizes = [1, 256], strides = [1, 1]} : vector<9x256xf32> to vector<1x256xf32>
    %31 = vector.shape_cast %30 : vector<1x256xf32> to vector<256xf32>
    %32 = vector.shape_cast %31 : vector<256xf32> to vector<1x1x256xf32>
    %33 = vector.broadcast %32 : vector<1x1x256xf32> to vector<16x16x256xf32>
    %34 = arith.mulf %29, %33 : vector<16x16x256xf32>
    %35 = arith.addf %28, %34 : vector<16x16x256xf32>
    %36 = vector.extract_strided_slice %20 {offsets = [0, 0, 0], sizes = [16, 16, 256], strides = [1, 1, 1]} : vector<18x16x256xf32> to vector<16x16x256xf32>
    %37 = vector.extract_strided_slice %17 {offsets = [2, 0], sizes = [1, 256], strides = [1, 1]} : vector<9x256xf32> to vector<1x256xf32>
    %38 = vector.shape_cast %37 : vector<1x256xf32> to vector<256xf32>
    %39 = vector.shape_cast %38 : vector<256xf32> to vector<1x1x256xf32>
    %40 = vector.broadcast %39 : vector<1x1x256xf32> to vector<16x16x256xf32>
    %41 = arith.mulf %36, %40 : vector<16x16x256xf32>
    %42 = arith.addf %35, %41 : vector<16x16x256xf32>
    %43 = vector.extract_strided_slice %18 {offsets = [1, 0, 0], sizes = [16, 16, 256], strides = [1, 1, 1]} : vector<18x16x256xf32> to vector<16x16x256xf32>
    %44 = vector.extract_strided_slice %17 {offsets = [3, 0], sizes = [1, 256], strides = [1, 1]} : vector<9x256xf32> to vector<1x256xf32>
    %45 = vector.shape_cast %44 : vector<1x256xf32> to vector<256xf32>
    %46 = vector.shape_cast %45 : vector<256xf32> to vector<1x1x256xf32>
    %47 = vector.broadcast %46 : vector<1x1x256xf32> to vector<16x16x256xf32>
    %48 = arith.mulf %43, %47 : vector<16x16x256xf32>
    %49 = arith.addf %42, %48 : vector<16x16x256xf32>
    %50 = vector.extract_strided_slice %19 {offsets = [1, 0, 0], sizes = [16, 16, 256], strides = [1, 1, 1]} : vector<18x16x256xf32> to vector<16x16x256xf32>
    %51 = vector.extract_strided_slice %17 {offsets = [4, 0], sizes = [1, 256], strides = [1, 1]} : vector<9x256xf32> to vector<1x256xf32>
    %52 = vector.shape_cast %51 : vector<1x256xf32> to vector<256xf32>
    %53 = vector.shape_cast %52 : vector<256xf32> to vector<1x1x256xf32>
    %54 = vector.broadcast %53 : vector<1x1x256xf32> to vector<16x16x256xf32>
    %55 = arith.mulf %50, %54 : vector<16x16x256xf32>
    %56 = arith.addf %49, %55 : vector<16x16x256xf32>
    %57 = vector.extract_strided_slice %20 {offsets = [1, 0, 0], sizes = [16, 16, 256], strides = [1, 1, 1]} : vector<18x16x256xf32> to vector<16x16x256xf32>
    %58 = vector.extract_strided_slice %17 {offsets = [5, 0], sizes = [1, 256], strides = [1, 1]} : vector<9x256xf32> to vector<1x256xf32>
    %59 = vector.shape_cast %58 : vector<1x256xf32> to vector<256xf32>
    %60 = vector.shape_cast %59 : vector<256xf32> to vector<1x1x256xf32>
    %61 = vector.broadcast %60 : vector<1x1x256xf32> to vector<16x16x256xf32>
    %62 = arith.mulf %57, %61 : vector<16x16x256xf32>
    %63 = arith.addf %56, %62 : vector<16x16x256xf32>
    %64 = vector.extract_strided_slice %18 {offsets = [2, 0, 0], sizes = [16, 16, 256], strides = [1, 1, 1]} : vector<18x16x256xf32> to vector<16x16x256xf32>
    %65 = vector.extract_strided_slice %17 {offsets = [6, 0], sizes = [1, 256], strides = [1, 1]} : vector<9x256xf32> to vector<1x256xf32>
    %66 = vector.shape_cast %65 : vector<1x256xf32> to vector<256xf32>
    %67 = vector.shape_cast %66 : vector<256xf32> to vector<1x1x256xf32>
    %68 = vector.broadcast %67 : vector<1x1x256xf32> to vector<16x16x256xf32>
    %69 = arith.mulf %64, %68 : vector<16x16x256xf32>
    %70 = arith.addf %63, %69 : vector<16x16x256xf32>
    %71 = vector.extract_strided_slice %19 {offsets = [2, 0, 0], sizes = [16, 16, 256], strides = [1, 1, 1]} : vector<18x16x256xf32> to vector<16x16x256xf32>
    %72 = vector.extract_strided_slice %17 {offsets = [7, 0], sizes = [1, 256], strides = [1, 1]} : vector<9x256xf32> to vector<1x256xf32>
    %73 = vector.shape_cast %72 : vector<1x256xf32> to vector<256xf32>
    %74 = vector.shape_cast %73 : vector<256xf32> to vector<1x1x256xf32>
    %75 = vector.broadcast %74 : vector<1x1x256xf32> to vector<16x16x256xf32>
    %76 = arith.mulf %71, %75 : vector<16x16x256xf32>
    %77 = arith.addf %70, %76 : vector<16x16x256xf32>
    %78 = vector.extract_strided_slice %20 {offsets = [2, 0, 0], sizes = [16, 16, 256], strides = [1, 1, 1]} : vector<18x16x256xf32> to vector<16x16x256xf32>
    %79 = vector.extract_strided_slice %17 {offsets = [8, 0], sizes = [1, 256], strides = [1, 1]} : vector<9x256xf32> to vector<1x256xf32>
    %80 = vector.shape_cast %79 : vector<1x256xf32> to vector<256xf32>
    %81 = vector.shape_cast %80 : vector<256xf32> to vector<1x1x256xf32>
    %82 = vector.broadcast %81 : vector<1x1x256xf32> to vector<16x16x256xf32>
    %83 = arith.mulf %78, %82 : vector<16x16x256xf32>
    %84 = arith.addf %77, %83 : vector<16x16x256xf32>
    %c0_26 = arith.constant 0 : index
    %c0_27 = arith.constant 0 : index
    %85 = vector.load %arg5[%c0_26, %c0_27] : memref<1x256xf32, #tpu.memory_space<vmem>>, vector<1x256xf32>
    %86 = vector.shape_cast %85 : vector<1x256xf32> to vector<256xf32>
    %87 = vector.shape_cast %86 : vector<256xf32> to vector<1x1x256xf32>
    %88 = vector.broadcast %87 : vector<1x1x256xf32> to vector<16x16x256xf32>
    %89 = arith.addf %84, %88 : vector<16x16x256xf32>
    %cst_28 = arith.constant 0.000000e+00 : f32
    %cst_29 = arith.constant 6.000000e+00 : f32
    %90 = vector.broadcast %cst_28 : f32 to vector<16x16x256xf32>
    %91 = arith.maximumf %90, %89 : vector<16x16x256xf32>
    %92 = vector.broadcast %cst_29 : f32 to vector<16x16x256xf32>
    %93 = arith.minimumf %92, %91 : vector<16x16x256xf32>
    %94 = vector.shape_cast %93 : vector<16x16x256xf32> to vector<256x256xf32>
    %95 = arith.truncf %94 : vector<256x256xf32> to vector<256x256xbf16>
    %c0_30 = arith.constant 0 : index
    %c0_31 = arith.constant 0 : index
    %96 = vector.load %arg6[%c0_30, %c0_31] : memref<256x128xbf16, #tpu.memory_space<vmem>>, vector<256x128xbf16>
    %cst_32 = arith.constant dense<0.000000e+00> : vector<256x128xf32>
    %97 = tpu.matmul %95, %96, %cst_32 {dimension_numbers = #tpu.dot_dimension_numbers<[1], [0], [0], [1], [0, 0, 1, 1], [], []>} : vector<256x256xbf16>, vector<256x128xbf16>, vector<256x128xf32> -> vector<256x128xf32>
    %c0_33 = arith.constant 0 : index
    %c0_34 = arith.constant 0 : index
    %98 = vector.load %arg7[%c0_33, %c0_34] : memref<1x128xf32, #tpu.memory_space<vmem>>, vector<1x128xf32>
    %99 = vector.broadcast %98 : vector<1x128xf32> to vector<256x128xf32>
    %100 = arith.addf %97, %99 : vector<256x128xf32>
    %101 = vector.shape_cast %1 : vector<16x16x128xf32> to vector<256x128xf32>
    %102 = arith.addf %100, %101 : vector<256x128xf32>
    %103 = vector.shape_cast %102 : vector<256x128xf32> to vector<16x16x128xf32>
    %c0_35 = arith.constant 0 : index
    %c0_36 = arith.constant 0 : index
    %c0_37 = arith.constant 0 : index
    %c0_38 = arith.constant 0 : index
    %104 = vector.load %arg8[%c0_35, %c0_36, %c0_37, %c0_38] : memref<1x16x16x128xf32, #tpu.memory_space<vmem>>, vector<1x16x16x128xf32>
    %105 = vector.shape_cast %104 : vector<1x16x16x128xf32> to vector<16x16x128xf32>
    %106 = vector.shape_cast %103 : vector<16x16x128xf32> to vector<1x16x16x128xf32>
    tpu.vector_store %arg8[%c0_35, %c0_36, %c0_37, %c0_38], %106 {strides = array<i32>} : memref<1x16x16x128xf32, #tpu.memory_space<vmem>>, vector<1x16x16x128xf32>,
    return
  }
  func.func @transform_0(%arg0: i32) -> (i32, i32, i32, i32) {
    %c0_i32 = arith.constant 0 : i32
    %c0_i32_0 = arith.constant 0 : i32
    %c0_i32_1 = arith.constant 0 : i32
    %c0_i32_2 = arith.constant 0 : i32
    return %arg0, %c0_i32, %c0_i32_0, %c0_i32_1 : i32, i32, i32, i32
  }
  func.func @transform_1(%arg0: i32) -> (i32, i32) {
    %c0_i32 = arith.constant 0 : i32
    %c0_i32_0 = arith.constant 0 : i32
    %c0_i32_1 = arith.constant 0 : i32
    return %c0_i32, %c0_i32_0 : i32, i32
  }
  func.func @transform_2(%arg0: i32) -> (i32, i32) {
    %c0_i32 = arith.constant 0 : i32
    %c0_i32_0 = arith.constant 0 : i32
    %c0_i32_1 = arith.constant 0 : i32
    return %c0_i32, %c0_i32_0 : i32, i32
  }
  func.func @transform_3(%arg0: i32) -> (i32, i32) {
    %c0_i32 = arith.constant 0 : i32
    %c0_i32_0 = arith.constant 0 : i32
    %c0_i32_1 = arith.constant 0 : i32
    return %c0_i32, %c0_i32_0 : i32, i32
  }
  func.func @transform_4(%arg0: i32) -> (i32, i32) {
    %c0_i32 = arith.constant 0 : i32
    %c0_i32_0 = arith.constant 0 : i32
    %c0_i32_1 = arith.constant 0 : i32
    return %c0_i32, %c0_i32_0 : i32, i32
  }
  func.func @transform_5(%arg0: i32) -> (i32, i32) {
    %c0_i32 = arith.constant 0 : i32
    %c0_i32_0 = arith.constant 0 : i32
    %c0_i32_1 = arith.constant 0 : i32
    return %c0_i32, %c0_i32_0 : i32, i32
  }
  func.func @transform_6(%arg0: i32) -> (i32, i32) {
    %c0_i32 = arith.constant 0 : i32
    %c0_i32_0 = arith.constant 0 : i32
    %c0_i32_1 = arith.constant 0 : i32
    return %c0_i32, %c0_i32_0 : i32, i32
  }
  func.func @transform_7(%arg0: i32) -> (i32, i32, i32, i32) {
    %c0_i32 = arith.constant 0 : i32
    %c0_i32_0 = arith.constant 0 : i32
    %c0_i32_1 = arith.constant 0 : i32
    %c0_i32_2 = arith.constant 0 : i32
    return %arg0, %c0_i32, %c0_i32_0, %c0_i32_1 : i32, i32, i32, i32
  }
}

</mosaic_0001>

<llo_original>
// kernel: _lambda_.1
$region0: #{_lambda_.1}
  #allocation0 [shape = 'u32[]', space=smem, size = 0x4, offset = 0x4, fixed_abs, tag = 'smem constant byte address 0x4 - core index']
  #allocation1 [shape = 'u32[144,128]{1,0:T(1,128)}', space=vmem, size = 0x12000, scoped, tag = 'internal scratch']
  #allocation2 [shape = 'f32[18,24,256]{2,1,0:T(8,128)}', space=vmem, size = 0x6c000, scoped, tag = 'scratch operand']
  %s0 = inlined_call_operand.vmem [shape: f32[2,16,16,128], index: 0, kind: input, shape index: {}]
  %s1 = inlined_call_operand.vmem [shape: bf16[128,256], index: 1, kind: input, shape index: {}]
  %s2 = inlined_call_operand.vmem [shape: f32[1,256], index: 2, kind: input, shape index: {}, may-alias: {2,4}]
  %s3 = inlined_call_operand.vmem [shape: f32[9,256], index: 3, kind: input, shape index: {}]
  %s4 = inlined_call_operand.vmem [shape: f32[1,256], index: 4, kind: input, shape index: {}, may-alias: {2,4}]
  %s5 = inlined_call_operand.vmem [shape: bf16[256,128], index: 5, kind: input, shape index: {}]
  %s6 = inlined_call_operand.vmem [shape: f32[1,128], index: 6, kind: input, shape index: {}]
  %s7 = inlined_call_operand.vmem [shape: f32[2,16,16,128], index: 7, kind: output, shape index: {}]
  %s8 = sld [smem:[#allocation0]]
  $region61: #{_lambda_.1} parent=0
    _
  %s10 = ssub.s32 1, %s8
  %s11 = scalar_select 0, %s10, %s8
  loop: start=0, step=1, limit=4
  $region2: #{_lambda_.1} parent=0 // loop_pre_header
    _
  $region3: #{_lambda_.1} parent=0 // loop_header
    %s13 = sphi 0, %s17
    %p14 = scmp.ge.s32.totalorder %s13, 4
    %s23 = sphi 0, %s25
    %s26 = sphi 0, %s23
    %s27 = sphi 0, %s26
    %s43 = sphi 0, %s27
    %s47 = sphi 0, %s47
    %s49 = sphi 0, %s47
    %s50 = sphi 0, %s49
    %s64 = sphi 0, %s50
    %s68 = sphi 0, %s68
    %s70 = sphi 0, %s68
    %s71 = sphi 0, %s70
    %s85 = sphi 0, %s71
    %s89 = sphi 0, %s89
    %s91 = sphi 0, %s89
    %s92 = sphi 0, %s91
    %s106 = sphi 0, %s92
    %s110 = sphi 0, %s110
    %s112 = sphi 0, %s110
    %s113 = sphi 0, %s112
    %s127 = sphi 0, %s113
    %s131 = sphi 0, %s131
    %s133 = sphi 0, %s131
    %s134 = sphi 0, %s133
    %s148 = sphi 0, %s134
    %s152 = sphi 0, %s152
    %s154 = sphi 0, %s152
    %s155 = sphi 0, %s154
    %s169 = sphi 0, %s155
    %s175 = sphi 0, %s177
    %s178 = sphi 0, %s175
    %s179 = sphi 0, %s178
    %s195 = sphi 0, %s179
  $region4: #{_lambda_.1} parent=0 // loop_header_branch
    %16 = sbr.rel (%p14) target = $region8
  $region5: #{_lambda_.1} parent=0 // loop_body
    %s18 = ssub.s32 %s13, 1
    %s19 = ssub.s32 %s13, 2
    %s20 = sadd.s32 %s13, 1
    %s21 = ssub.s32 %s13, %s20
    %p22 = scmp.eq.s32.totalorder %s21, 0
    %s24 = sadd.s32 %s23, 1
    %s25 = scalar_select %p22, %s23, %s24
    %p28 = pneg %p22
    %p29 = scmp.eq.s32.totalorder %s13, 1
    %p30 = por %p28, %p29
    %p31 = scmp.ne.s32.totalorder %s23, %s26
    %p32 = scmp.eq.s32.totalorder %s13, 0
    %p33 = por %p31, %p32
    %p34 = scmp.ne.s32.totalorder %s23, %s26
    %p35 = scmp.eq.s32.totalorder %s18, 1
    %p36 = por %p34, %p35
    %p37 = scmp.ne.s32.totalorder %s26, %s27
    %p38 = scmp.eq.s32.totalorder %s18, 0
    %p39 = por %p37, %p38
    %p40 = scmp.ne.s32.totalorder %s26, %s27
    %p41 = scmp.eq.s32.totalorder %s19, 1
    %p42 = por %p40, %p41
    %p44 = scmp.ne.s32.totalorder %s27, %s43
    %p45 = scmp.eq.s32.totalorder %s19, 0
    %p46 = por %p44, %p45
    %s48 = sadd.s32 %s47, 1
    %p51 = scmp.eq.s32.totalorder %s13, 1
    %p52 = scmp.ne.s32.totalorder %s47, %s49
    %p53 = scmp.eq.s32.totalorder %s13, 0
    %p54 = por %p52, %p53
    %p55 = scmp.ne.s32.totalorder %s47, %s49
    %p56 = scmp.eq.s32.totalorder %s18, 1
    %p57 = por %p55, %p56
    %p58 = scmp.ne.s32.totalorder %s49, %s50
    %p59 = scmp.eq.s32.totalorder %s18, 0
    %p60 = por %p58, %p59
    %p61 = scmp.ne.s32.totalorder %s49, %s50
    %p62 = scmp.eq.s32.totalorder %s19, 1
    %p63 = por %p61, %p62
    %p65 = scmp.ne.s32.totalorder %s50, %s64
    %p66 = scmp.eq.s32.totalorder %s19, 0
    %p67 = por %p65, %p66
    %s69 = sadd.s32 %s68, 1
    %p72 = scmp.eq.s32.totalorder %s13, 1
    %p73 = scmp.ne.s32.totalorder %s68, %s70
    %p74 = scmp.eq.s32.totalorder %s13, 0
    %p75 = por %p73, %p74
    %p76 = scmp.ne.s32.totalorder %s68, %s70
    %p77 = scmp.eq.s32.totalorder %s18, 1
    %p78 = por %p76, %p77
    %p79 = scmp.ne.s32.totalorder %s70, %s71
    %p80 = scmp.eq.s32.totalorder %s18, 0
    %p81 = por %p79, %p80
    %p82 = scmp.ne.s32.totalorder %s70, %s71
    %p83 = scmp.eq.s32.totalorder %s19, 1
    %p84 = por %p82, %p83
    %p86 = scmp.ne.s32.totalorder %s71, %s85
    %p87 = scmp.eq.s32.totalorder %s19, 0
    %p88 = por %p86, %p87
    %s90 = sadd.s32 %s89, 1
    %p93 = scmp.eq.s32.totalorder %s13, 1
    %p94 = scmp.ne.s32.totalorder %s89, %s91
    %p95 = scmp.eq.s32.totalorder %s13, 0
    %p96 = por %p94, %p95
    %p97 = scmp.ne.s32.totalorder %s89, %s91
    %p98 = scmp.eq.s32.totalorder %s18, 1
    %p99 = por %p97, %p98
    %p100 = scmp.ne.s32.totalorder %s91, %s92
    %p101 = scmp.eq.s32.totalorder %s18, 0
    %p102 = por %p100, %p101
    %p103 = scmp.ne.s32.totalorder %s91, %s92
    %p104 = scmp.eq.s32.totalorder %s19, 1
    %p105 = por %p103, %p104
    %p107 = scmp.ne.s32.totalorder %s92, %s106
    %p108 = scmp.eq.s32.totalorder %s19, 0
    %p109 = por %p107, %p108
    %s111 = sadd.s32 %s110, 1
    %p114 = scmp.eq.s32.totalorder %s13, 1
    %p115 = scmp.ne.s32.totalorder %s110, %s112
    %p116 = scmp.eq.s32.totalorder %s13, 0
    %p117 = por %p115, %p116
    %p118 = scmp.ne.s32.totalorder %s110, %s112
    %p119 = scmp.eq.s32.totalorder %s18, 1
    %p120 = por %p118, %p119
    %p121 = scmp.ne.s32.totalorder %s112, %s113
    %p122 = scmp.eq.s32.totalorder %s18, 0
    %p123 = por %p121, %p122
    %p124 = scmp.ne.s32.totalorder %s112, %s113
    %p125 = scmp.eq.s32.totalorder %s19, 1
    %p126 = por %p124, %p125
    %p128 = scmp.ne.s32.totalorder %s113, %s127
    %p129 = scmp.eq.s32.totalorder %s19, 0
    %p130 = por %p128, %p129
    %s132 = sadd.s32 %s131, 1
    %p135 = scmp.eq.s32.totalorder %s13, 1
    %p136 = scmp.ne.s32.totalorder %s131, %s133
    %p137 = scmp.eq.s32.totalorder %s13, 0
    %p138 = por %p136, %p137
    %p139 = scmp.ne.s32.totalorder %s131, %s133
    %p140 = scmp.eq.s32.totalorder %s18, 1
    %p141 = por %p139, %p140
    %p142 = scmp.ne.s32.totalorder %s133, %s134
    %p143 = scmp.eq.s32.totalorder %s18, 0
    %p144 = por %p142, %p143
    %p145 = scmp.ne.s32.totalorder %s133, %s134
    %p146 = scmp.eq.s32.totalorder %s19, 1
    %p147 = por %p145, %p146
    %p149 = scmp.ne.s32.totalorder %s134, %s148
    %p150 = scmp.eq.s32.totalorder %s19, 0
    %p151 = por %p149, %p150
    %s153 = sadd.s32 %s152, 1
    %p156 = scmp.eq.s32.totalorder %s13, 1
    %p157 = scmp.ne.s32.totalorder %s152, %s154
    %p158 = scmp.eq.s32.totalorder %s13, 0
    %p159 = por %p157, %p158
    %p160 = scmp.ne.s32.totalorder %s152, %s154
    %p161 = scmp.eq.s32.totalorder %s18, 1
    %p162 = por %p160, %p161
    %p163 = scmp.ne.s32.totalorder %s154, %s155
    %p164 = scmp.eq.s32.totalorder %s18, 0
    %p165 = por %p163, %p164
    %p166 = scmp.ne.s32.totalorder %s154, %s155
    %p167 = scmp.eq.s32.totalorder %s19, 1
    %p168 = por %p166, %p167
    %p170 = scmp.ne.s32.totalorder %s155, %s169
    %p171 = scmp.eq.s32.totalorder %s19, 0
    %p172 = por %p170, %p171
    %s173 = ssub.s32 %s13, %s20
    %p174 = scmp.eq.s32.totalorder %s173, 0
    %s176 = sadd.s32 %s175, 1
    %s177 = scalar_select %p174, %s175, %s176
    %p180 = pneg %p174
    %p181 = scmp.eq.s32.totalorder %s13, 1
    %p182 = por %p180, %p181
    %p183 = scmp.ne.s32.totalorder %s175, %s178
    %p184 = scmp.eq.s32.totalorder %s13, 0
    %p185 = por %p183, %p184
    %p186 = scmp.ne.s32.totalorder %s175, %s178
    %p187 = scmp.eq.s32.totalorder %s18, 1
    %p188 = por %p186, %p187
    %p189 = scmp.ne.s32.totalorder %s178, %s179
    %p190 = scmp.eq.s32.totalorder %s18, 0
    %p191 = por %p189, %p190
    %p192 = scmp.ne.s32.totalorder %s178, %s179
    %p193 = scmp.eq.s32.totalorder %s19, 1
    %p194 = por %p192, %p193
    %p196 = scmp.ne.s32.totalorder %s179, %s195
    %p197 = scmp.eq.s32.totalorder %s19, 0
    %p198 = por %p196, %p197
    %p199 = scmp.le.s32.totalorder 1, %s13
    %p200 = scmp.lt.s32.totalorder %s13, 3
    %p201 = pnand %p199, %p200
    %p202 = pneg %p201
    // Predicated region
    $region9: #{_lambda_.1} parent=5 // pred_check
      _
    $region10: #{_lambda_.1} parent=5 // pred_check_branch
      %204 = sbr.rel (%p201) target = $region12
    $region11: #{_lambda_.1} parent=5 // pred_region
      %s205 = ssub.s32 %s13, 1
      // Predicated region
      $region13: #{_lambda_.1} parent=11 // pred_check
        %p206 = pneg %p60
      $region14: #{_lambda_.1} parent=11 // pred_check_branch
        %208 = sbr.rel (%p206) target = $region16
      $region15: #{_lambda_.1} parent=11 // pred_region
        _
      $region16: #{_lambda_.1} parent=11 // pred_fallthru
        _
      // Predicated region
      $region17: #{_lambda_.1} parent=11 // pred_check
        %p209 = pneg %p81
      $region18: #{_lambda_.1} parent=11 // pred_check_branch
        %211 = sbr.rel (%p209) target = $region20
      $region19: #{_lambda_.1} parent=11 // pred_region
        _
      $region20: #{_lambda_.1} parent=11 // pred_fallthru
        _
      // Predicated region
      $region21: #{_lambda_.1} parent=11 // pred_check
        %p212 = pneg %p102
      $region22: #{_lambda_.1} parent=11 // pred_check_branch
        %214 = sbr.rel (%p212) target = $region24
      $region23: #{_lambda_.1} parent=11 // pred_region
        _
      $region24: #{_lambda_.1} parent=11 // pred_fallthru
        _
      // Predicated region
      $region25: #{_lambda_.1} parent=11 // pred_check
        %p215 = pneg %p123
      $region26: #{_lambda_.1} parent=11 // pred_check_branch
        %217 = sbr.rel (%p215) target = $region28
      $region27: #{_lambda_.1} parent=11 // pred_region
        _
      $region28: #{_lambda_.1} parent=11 // pred_fallthru
        _
      // Predicated region
      $region29: #{_lambda_.1} parent=11 // pred_check
        %p218 = pneg %p144
      $region30: #{_lambda_.1} parent=11 // pred_check_branch
        %220 = sbr.rel (%p218) target = $region32
      $region31: #{_lambda_.1} parent=11 // pred_region
        _
      $region32: #{_lambda_.1} parent=11 // pred_fallthru
        _
      // Predicated region
      $region33: #{_lambda_.1} parent=11 // pred_check
        %p221 = pneg %p165
      $region34: #{_lambda_.1} parent=11 // pred_check_branch
        %223 = sbr.rel (%p221) target = $region36
      $region35: #{_lambda_.1} parent=11 // pred_region
        _
      $region36: #{_lambda_.1} parent=11 // pred_fallthru
        _
    $region12: #{_lambda_.1} parent=5 // pred_fallthru
      _
    %p224 = scmp.lt.s32.totalorder %s13, 2
    // Predicated region
    $region37: #{_lambda_.1} parent=5 // pred_check
      %p225 = pneg %p224
    $region38: #{_lambda_.1} parent=5 // pred_check_branch
      %227 = sbr.rel (%p225) target = $region40
    $region39: #{_lambda_.1} parent=5 // pred_region
      // Predicated region
      $region41: #{_lambda_.1} parent=39 // pred_check
        %p228 = pneg %p33
      $region42: #{_lambda_.1} parent=39 // pred_check_branch
        %230 = sbr.rel (%p228) target = $region44
      $region43: #{_lambda_.1} parent=39 // pred_region
        %p231 = scmp.lt.s32.totalorder %s13, 1
        %s232 = scalar_select %p231, %s13, 1
        %s233 = smul.addr %s232, 32
        %s234 = smul.addr %s233, 8
        %s235 = scalar_lea.vmem %s0, %s234
      $region44: #{_lambda_.1} parent=39 // pred_fallthru
        _
    $region40: #{_lambda_.1} parent=5 // pred_fallthru
      _
    %p236 = scmp.le.s32.totalorder 1, %s13
    %p237 = scmp.lt.s32.totalorder %s13, 3
    %p238 = pnand %p236, %p237
    %p239 = pneg %p238
    // Predicated region
    $region45: #{_lambda_.1} parent=5 // pred_check
      _
    $region46: #{_lambda_.1} parent=5 // pred_check_branch
      %241 = sbr.rel (%p238) target = $region48
    $region47: #{_lambda_.1} parent=5 // pred_region
      %s242 = ssub.s32 %s13, 1
      %p243 = scmp.lt.s32.totalorder %s18, 1
      %s244 = scalar_select %p243, %s18, 1
      %s245 = smul.addr %s244, 32
      %s246 = smul.addr %s245, 8
      %s247 = scalar_lea.vmem %s0, %s246
      %p248 = pneg %p39
      %p249 = pneg %p36
      %p250 = pneg %p60
      %p251 = pneg %p57
      %p252 = pneg %p81
      %p253 = pneg %p78
      %p254 = pneg %p102
      %p255 = pneg %p99
      %p256 = pneg %p123
      %p257 = pneg %p120
      %p258 = pneg %p144
      %p259 = pneg %p141
      %p260 = pneg %p165
      %p261 = pneg %p162
      %p262 = pneg %p191
      %p263 = pneg %p188
      %p264 = scmp.lt.s32.totalorder %s18, 1
      %s265 = scalar_select %p264, %s18, 1
      %s266 = smul.addr %s265, 32
      %s267 = smul.addr %s266, 8
      %s268 = scalar_lea.vmem %s7, %s267
      %p269 = scmp.lt.s32.totalorder %s18, 1
      %s270 = scalar_select %p269, %s18, 1
      %s271 = smul.addr %s270, 32
      %s272 = smul.addr %s271, 8
      %s273 = scalar_lea.vmem %s0, %s272
      %p274 = scmp.lt.s32.totalorder %s18, 1
      %s275 = scalar_select %p274, %s18, 1
      %s276 = smul.addr %s275, 32
      %s277 = smul.addr %s276, 8
      %s278 = scalar_lea.vmem %s7, %s277
      %v280 = vld [vmem:[%s273] sm:$0xff]
      %v281 = vld [vmem:[%s273 + $0x8] sm:$0xff]
      %v282 = vld [vmem:[%s273 + $0x10] sm:$0xff]
      %v283 = vld [vmem:[%s273 + $0x18] sm:$0xff]
      %v284 = vld [vmem:[%s273 + $0x20] sm:$0xff]
      %v285 = vld [vmem:[%s273 + $0x28] sm:$0xff]
      %v286 = vld [vmem:[%s273 + $0x30] sm:$0xff]
      %v287 = vld [vmem:[%s273 + $0x38] sm:$0xff]
      %v288 = vld [vmem:[%s273 + $0x40] sm:$0xff]
      %v289 = vld [vmem:[%s273 + $0x48] sm:$0xff]
      %v290 = vld [vmem:[%s273 + $0x50] sm:$0xff]
      %v291 = vld [vmem:[%s273 + $0x58] sm:$0xff]
      %v292 = vld [vmem:[%s273 + $0x60] sm:$0xff]
      %v293 = vld [vmem:[%s273 + $0x68] sm:$0xff]
      %v294 = vld [vmem:[%s273 + $0x70] sm:$0xff]
      %v295 = vld [vmem:[%s273 + $0x78] sm:$0xff]
      %v296 = vld [vmem:[%s273 + $0x80] sm:$0xff]
      %v297 = vld [vmem:[%s273 + $0x88] sm:$0xff]
      %v298 = vld [vmem:[%s273 + $0x90] sm:$0xff]
      %v299 = vld [vmem:[%s273 + $0x98] sm:$0xff]
      %v300 = vld [vmem:[%s273 + $0xa0] sm:$0xff]
      %v301 = vld [vmem:[%s273 + $0xa8] sm:$0xff]
      %v302 = vld [vmem:[%s273 + $0xb0] sm:$0xff]
      %v303 = vld [vmem:[%s273 + $0xb8] sm:$0xff]
      %v304 = vld [vmem:[%s273 + $0xc0] sm:$0xff]
      %v305 = vld [vmem:[%s273 + $0xc8] sm:$0xff]
      %v306 = vld [vmem:[%s273 + $0xd0] sm:$0xff]
      %v307 = vld [vmem:[%s273 + $0xd8] sm:$0xff]
      %v308 = vld [vmem:[%s273 + $0xe0] sm:$0xff]
      %v309 = vld [vmem:[%s273 + $0xe8] sm:$0xff]
      %v310 = vld [vmem:[%s273 + $0xf0] sm:$0xff]
      %v311 = vld [vmem:[%s273 + $0xf8] sm:$0xff]
      %v312 = vpack.c.bf16 %v281, %v280
      %v313 = vpack.c.bf16 %v283, %v282
      %v314 = vpack.c.bf16 %v285, %v284
      %v315 = vpack.c.bf16 %v287, %v286
      %v316 = vpack.c.bf16 %v289, %v288
      %v317 = vpack.c.bf16 %v291, %v290
      %v318 = vpack.c.bf16 %v293, %v292
      %v319 = vpack.c.bf16 %v295, %v294
      %v320 = vpack.c.bf16 %v297, %v296
      %v321 = vpack.c.bf16 %v299, %v298
      %v322 = vpack.c.bf16 %v301, %v300
      %v323 = vpack.c.bf16 %v303, %v302
      %v324 = vpack.c.bf16 %v305, %v304
      %v325 = vpack.c.bf16 %v307, %v306
      %v326 = vpack.c.bf16 %v309, %v308
      %v327 = vpack.c.bf16 %v311, %v310
      %v328 = vld [vmem:[%s1] sm:$0xff]
      %v329 = vld [vmem:[%s1 + $0x8] sm:$0xff]
      %v330 = vld [vmem:[%s1 + $0x10] sm:$0xff]
      %v331 = vld [vmem:[%s1 + $0x18] sm:$0xff]
      %v332 = vld [vmem:[%s1 + $0x20] sm:$0xff]
      %v333 = vld [vmem:[%s1 + $0x28] sm:$0xff]
      %v334 = vld [vmem:[%s1 + $0x30] sm:$0xff]
      %v335 = vld [vmem:[%s1 + $0x38] sm:$0xff]
      %v336 = vld [vmem:[%s1 + $0x40] sm:$0xff]
      %v337 = vld [vmem:[%s1 + $0x48] sm:$0xff]
      %v338 = vld [vmem:[%s1 + $0x50] sm:$0xff]
      %v339 = vld [vmem:[%s1 + $0x58] sm:$0xff]
      %v340 = vld [vmem:[%s1 + $0x60] sm:$0xff]
      %v341 = vld [vmem:[%s1 + $0x68] sm:$0xff]
      %v342 = vld [vmem:[%s1 + $0x70] sm:$0xff]
      %v343 = vld [vmem:[%s1 + $0x78] sm:$0xff]
      %v344 = vld [vmem:[%s2] sm:$0x3]
      %v346 = vlaneseq
      %v347 = vshrl.u32 %v346, 7
      %v348 = vsub.s32 0, %v347
      %v349 = vrot.slane %v344, %v348
      %v350 = vlaneseq
      %v351 = vshrl.u32 %v350, 7
      %v352 = vsub.s32 1, %v351
      %v353 = vrot.slane %v344, %v352
      %v372 = vunpack.c.l.b16 %v328
      %v373 = vunpack.c.h.b16 %v328
      %v374 = vunpack.c.l.b16 %v329
      %v375 = vunpack.c.h.b16 %v329
      %v376 = vunpack.c.l.b16 %v330
      %v377 = vunpack.c.h.b16 %v330
      %v378 = vunpack.c.l.b16 %v331
      %v379 = vunpack.c.h.b16 %v331
      %v380 = vunpack.c.l.b16 %v332
      %v381 = vunpack.c.h.b16 %v332
      %v382 = vunpack.c.l.b16 %v333
      %v383 = vunpack.c.h.b16 %v333
      %v384 = vunpack.c.l.b16 %v334
      %v385 = vunpack.c.h.b16 %v334
      %v386 = vunpack.c.l.b16 %v335
      %v387 = vunpack.c.h.b16 %v335
      %v388 = vunpack.c.l.b16 %v336
      %v389 = vunpack.c.h.b16 %v336
      %v390 = vunpack.c.l.b16 %v337
      %v391 = vunpack.c.h.b16 %v337
      %v392 = vunpack.c.l.b16 %v338
      %v393 = vunpack.c.h.b16 %v338
      %v394 = vunpack.c.l.b16 %v339
      %v395 = vunpack.c.h.b16 %v339
      %v396 = vunpack.c.l.b16 %v340
      %v397 = vunpack.c.h.b16 %v340
      %v398 = vunpack.c.l.b16 %v341
      %v399 = vunpack.c.h.b16 %v341
      %v400 = vunpack.c.l.b16 %v342
      %v401 = vunpack.c.h.b16 %v342
      %v402 = vunpack.c.l.b16 %v343
      %v403 = vunpack.c.h.b16 %v343
      %v404 = vpack.c.b16 %v374, %v372
      %v405 = vpack.c.b16 %v375, %v373
      %v406 = vpack.c.b16 %v378, %v376
      %v407 = vpack.c.b16 %v379, %v377
      %v408 = vpack.c.b16 %v382, %v380
      %v409 = vpack.c.b16 %v383, %v381
      %v410 = vpack.c.b16 %v386, %v384
      %v411 = vpack.c.b16 %v387, %v385
      %v412 = vpack.c.b16 %v390, %v388
      %v413 = vpack.c.b16 %v391, %v389
      %v414 = vpack.c.b16 %v394, %v392
      %v415 = vpack.c.b16 %v395, %v393
      %v416 = vpack.c.b16 %v398, %v396
      %v417 = vpack.c.b16 %v399, %v397
      %v418 = vpack.c.b16 %v402, %v400
      %v419 = vpack.c.b16 %v403, %v401
      %436 = vmatprep.subr.bf16.mxu0 %v405
      %437 = vmatpush1.bf16.msra.mxu0 %v404
      %438 = vmatprep.subr.bf16.mxu0 %v407
      %439 = vmatpush1.bf16.msra.mxu0 %v406
      %440 = vmatprep.subr.bf16.mxu0 %v409
      %441 = vmatpush1.bf16.msra.mxu0 %v408
      %442 = vmatprep.subr.bf16.mxu0 %v411
      %443 = vmatpush1.bf16.msra.mxu0 %v410
      %444 = vmatprep.subr.bf16.mxu0 %v413
      %445 = vmatpush1.bf16.msra.mxu0 %v412
      %446 = vmatprep.subr.bf16.mxu0 %v415
      %447 = vmatpush1.bf16.msra.mxu0 %v414
      %448 = vmatprep.subr.bf16.mxu0 %v417
      %449 = vmatpush1.bf16.msra.mxu0 %v416
      %450 = vmatprep.subr.bf16.mxu0 %v419
      %451 = vmatpush1.bf16.msra.mxu0 %v418
      %452 = vmatprep.subr.bf16.mxu0 0
      %453 = vmatpush1.bf16.msra.mxu0 0
      %454 = vmatprep.subr.bf16.mxu0 0
      %455 = vmatpush1.bf16.msra.mxu0 0
      %456 = vmatprep.subr.bf16.mxu0 0
      %457 = vmatpush1.bf16.msra.mxu0 0
      %458 = vmatprep.subr.bf16.mxu0 0
      %459 = vmatpush1.bf16.msra.mxu0 0
      %460 = vmatprep.subr.bf16.mxu0 0
      %461 = vmatpush1.bf16.msra.mxu0 0
      %462 = vmatprep.subr.bf16.mxu0 0
      %463 = vmatpush1.bf16.msra.mxu0 0
      %464 = vmatprep.subr.bf16.mxu0 0
      %465 = vmatpush1.bf16.msra.mxu0 0
      %466 = vmatprep.subr.bf16.mxu0 0
      %467 = vmatpush1.bf16.msra.mxu0 0
      %468 = vmatprep.mubr.bf16.mxu0 0
      %469 = vmatmul.mubr.bf16.gmra.mrb[0].mxu0 %v312
      %v470 = vpop.f32.mrb[0].mxu0
      %v471 = vadd.f32 %v349, %v470
      %v472 = vpop.f32.mrb[0].mxu0
      %v473 = vadd.f32 %v353, %v472
      %v474 = vpop.f32.mrb[0].mxu0
      %v475 = vadd.f32 %v349, %v474
      %v476 = vpop.f32.mrb[0].mxu0
      %v477 = vadd.f32 %v353, %v476
      %478 = vmatprep.mubr.bf16.mxu0 0
      %479 = vmatmul.mubr.bf16.gmra.mrb[0].mxu0 %v313
      %v480 = vpop.f32.mrb[0].mxu0
      %v481 = vadd.f32 %v349, %v480
      %v482 = vpop.f32.mrb[0].mxu0
      %v483 = vadd.f32 %v353, %v482
      %v484 = vpop.f32.mrb[0].mxu0
      %v485 = vadd.f32 %v349, %v484
      %v486 = vpop.f32.mrb[0].mxu0
      %v487 = vadd.f32 %v353, %v486
      %488 = vmatprep.mubr.bf16.mxu0 0
      %489 = vmatmul.mubr.bf16.gmra.mrb[0].mxu0 %v314
      %v490 = vpop.f32.mrb[0].mxu0
      %v491 = vadd.f32 %v349, %v490
      %v492 = vpop.f32.mrb[0].mxu0
      %v493 = vadd.f32 %v353, %v492
      %v494 = vpop.f32.mrb[0].mxu0
      %v495 = vadd.f32 %v349, %v494
      %v496 = vpop.f32.mrb[0].mxu0
      %v497 = vadd.f32 %v353, %v496
      %498 = vmatprep.mubr.bf16.mxu0 0
      %499 = vmatmul.mubr.bf16.gmra.mrb[0].mxu0 %v315
      %v500 = vpop.f32.mrb[0].mxu0
      %v501 = vadd.f32 %v349, %v500
      %v502 = vpop.f32.mrb[0].mxu0
      %v503 = vadd.f32 %v353, %v502
      %v504 = vpop.f32.mrb[0].mxu0
      %v505 = vadd.f32 %v349, %v504
      %v506 = vpop.f32.mrb[0].mxu0
      %v507 = vadd.f32 %v353, %v506
      %508 = vmatprep.mubr.bf16.mxu0 0
      %509 = vmatmul.mubr.bf16.gmra.mrb[0].mxu0 %v316
      %v510 = vpop.f32.mrb[0].mxu0
      %v511 = vadd.f32 %v349, %v510
      %v512 = vpop.f32.mrb[0].mxu0
      %v513 = vadd.f32 %v353, %v512
      %v514 = vpop.f32.mrb[0].mxu0
      %v515 = vadd.f32 %v349, %v514
      %v516 = vpop.f32.mrb[0].mxu0
      %v517 = vadd.f32 %v353, %v516
      %518 = vmatprep.mubr.bf16.mxu0 0
      %519 = vmatmul.mubr.bf16.gmra.mrb[0].mxu0 %v317
      %v520 = vpop.f32.mrb[0].mxu0
      %v521 = vadd.f32 %v349, %v520
      %v522 = vpop.f32.mrb[0].mxu0
      %v523 = vadd.f32 %v353, %v522
      %v524 = vpop.f32.mrb[0].mxu0
      %v525 = vadd.f32 %v349, %v524
      %v526 = vpop.f32.mrb[0].mxu0
      %v527 = vadd.f32 %v353, %v526
      %528 = vmatprep.mubr.bf16.mxu0 0
      %529 = vmatmul.mubr.bf16.gmra.mrb[0].mxu0 %v318
      %v530 = vpop.f32.mrb[0].mxu0
      %v531 = vadd.f32 %v349, %v530
      %v532 = vpop.f32.mrb[0].mxu0
      %v533 = vadd.f32 %v353, %v532
      %v534 = vpop.f32.mrb[0].mxu0
      %v535 = vadd.f32 %v349, %v534
      %v536 = vpop.f32.mrb[0].mxu0
      %v537 = vadd.f32 %v353, %v536
      %538 = vmatprep.mubr.bf16.mxu0 0
      %539 = vmatmul.mubr.bf16.gmra.mrb[0].mxu0 %v319
      %v540 = vpop.f32.mrb[0].mxu0
      %v541 = vadd.f32 %v349, %v540
      %v542 = vpop.f32.mrb[0].mxu0
      %v543 = vadd.f32 %v353, %v542
      %v544 = vpop.f32.mrb[0].mxu0
      %v545 = vadd.f32 %v349, %v544
      %v546 = vpop.f32.mrb[0].mxu0
      %v547 = vadd.f32 %v353, %v546
      %548 = vmatprep.mubr.bf16.mxu0 0
      %549 = vmatmul.mubr.bf16.gmra.mrb[0].mxu0 %v320
      %v550 = vpop.f32.mrb[0].mxu0
      %v551 = vadd.f32 %v349, %v550
      %v552 = vpop.f32.mrb[0].mxu0
      %v553 = vadd.f32 %v353, %v552
      %v554 = vpop.f32.mrb[0].mxu0
      %v555 = vadd.f32 %v349, %v554
      %v556 = vpop.f32.mrb[0].mxu0
      %v557 = vadd.f32 %v353, %v556
      %558 = vmatprep.mubr.bf16.mxu0 0
      %559 = vmatmul.mubr.bf16.gmra.mrb[0].mxu0 %v321
      %v560 = vpop.f32.mrb[0].mxu0
      %v561 = vadd.f32 %v349, %v560
      %v562 = vpop.f32.mrb[0].mxu0
      %v563 = vadd.f32 %v353, %v562
      %v564 = vpop.f32.mrb[0].mxu0
      %v565 = vadd.f32 %v349, %v564
      %v566 = vpop.f32.mrb[0].mxu0
      %v567 = vadd.f32 %v353, %v566
      %568 = vmatprep.mubr.bf16.mxu0 0
      %569 = vmatmul.mubr.bf16.gmra.mrb[0].mxu0 %v322
      %v570 = vpop.f32.mrb[0].mxu0
      %v571 = vadd.f32 %v349, %v570
      %v572 = vpop.f32.mrb[0].mxu0
      %v573 = vadd.f32 %v353, %v572
      %v574 = vpop.f32.mrb[0].mxu0
      %v575 = vadd.f32 %v349, %v574
      %v576 = vpop.f32.mrb[0].mxu0
      %v577 = vadd.f32 %v353, %v576
      %578 = vmatprep.mubr.bf16.mxu0 0
      %579 = vmatmul.mubr.bf16.gmra.mrb[0].mxu0 %v323
      %v580 = vpop.f32.mrb[0].mxu0
      %v581 = vadd.f32 %v349, %v580
      %v582 = vpop.f32.mrb[0].mxu0
      %v583 = vadd.f32 %v353, %v582
      %v584 = vpop.f32.mrb[0].mxu0
      %v585 = vadd.f32 %v349, %v584
      %v586 = vpop.f32.mrb[0].mxu0
      %v587 = vadd.f32 %v353, %v586
      %588 = vmatprep.mubr.bf16.mxu0 0
      %589 = vmatmul.mubr.bf16.gmra.mrb[0].mxu0 %v324
      %v590 = vpop.f32.mrb[0].mxu0
      %v591 = vadd.f32 %v349, %v590
      %v592 = vpop.f32.mrb[0].mxu0
      %v593 = vadd.f32 %v353, %v592
      %v594 = vpop.f32.mrb[0].mxu0
      %v595 = vadd.f32 %v349, %v594
      %v596 = vpop.f32.mrb[0].mxu0
      %v597 = vadd.f32 %v353, %v596
      %598 = vmatprep.mubr.bf16.mxu0 0
      %599 = vmatmul.mubr.bf16.gmra.mrb[0].mxu0 %v325
      %v600 = vpop.f32.mrb[0].mxu0
      %v601 = vadd.f32 %v349, %v600
      %v602 = vpop.f32.mrb[0].mxu0
      %v603 = vadd.f32 %v353, %v602
      %v604 = vpop.f32.mrb[0].mxu0
      %v605 = vadd.f32 %v349, %v604
      %v606 = vpop.f32.mrb[0].mxu0
      %v607 = vadd.f32 %v353, %v606
      %608 = vmatprep.mubr.bf16.mxu0 0
      %609 = vmatmul.mubr.bf16.gmra.mrb[0].mxu0 %v326
      %v610 = vpop.f32.mrb[0].mxu0
      %v611 = vadd.f32 %v349, %v610
      %v612 = vpop.f32.mrb[0].mxu0
      %v613 = vadd.f32 %v353, %v612
      %v614 = vpop.f32.mrb[0].mxu0
      %v615 = vadd.f32 %v349, %v614
      %v616 = vpop.f32.mrb[0].mxu0
      %v617 = vadd.f32 %v353, %v616
      %618 = vmatprep.mubr.bf16.mxu0 0
      %619 = vmatmul.mubr.bf16.gmra.mrb[0].mxu0 %v327
      %v620 = vpop.f32.mrb[0].mxu0
      %v621 = vadd.f32 %v349, %v620
      %v622 = vpop.f32.mrb[0].mxu0
      %v623 = vadd.f32 %v353, %v622
      %v624 = vpop.f32.mrb[0].mxu0
      %v625 = vadd.f32 %v349, %v624
      %v626 = vpop.f32.mrb[0].mxu0
      %v627 = vadd.f32 %v353, %v626
      %628 = vdwg.mxu0
      %v629 = vmax.f32 %v471, 0.0
      %v630 = vmax.f32 %v473, 0.0
      %v631 = vmax.f32 %v475, 0.0
      %v632 = vmax.f32 %v477, 0.0
      %v633 = vmax.f32 %v481, 0.0
      %v634 = vmax.f32 %v483, 0.0
      %v635 = vmax.f32 %v485, 0.0
      %v636 = vmax.f32 %v487, 0.0
      %v637 = vmax.f32 %v491, 0.0
      %v638 = vmax.f32 %v493, 0.0
      %v639 = vmax.f32 %v495, 0.0
      %v640 = vmax.f32 %v497, 0.0
      %v641 = vmax.f32 %v501, 0.0
      %v642 = vmax.f32 %v503, 0.0
      %v643 = vmax.f32 %v505, 0.0
      %v644 = vmax.f32 %v507, 0.0
      %v645 = vmax.f32 %v511, 0.0
      %v646 = vmax.f32 %v513, 0.0
      %v647 = vmax.f32 %v515, 0.0
      %v648 = vmax.f32 %v517, 0.0
      %v649 = vmax.f32 %v521, 0.0
      %v650 = vmax.f32 %v523, 0.0
      %v651 = vmax.f32 %v525, 0.0
      %v652 = vmax.f32 %v527, 0.0
      %v653 = vmax.f32 %v531, 0.0
      %v654 = vmax.f32 %v533, 0.0
      %v655 = vmax.f32 %v535, 0.0
      %v656 = vmax.f32 %v537, 0.0
      %v657 = vmax.f32 %v541, 0.0
      %v658 = vmax.f32 %v543, 0.0
      %v659 = vmax.f32 %v545, 0.0
      %v660 = vmax.f32 %v547, 0.0
      %v661 = vmax.f32 %v551, 0.0
      %v662 = vmax.f32 %v553, 0.0
      %v663 = vmax.f32 %v555, 0.0
      %v664 = vmax.f32 %v557, 0.0
      %v665 = vmax.f32 %v561, 0.0
      %v666 = vmax.f32 %v563, 0.0
      %v667 = vmax.f32 %v565, 0.0
      %v668 = vmax.f32 %v567, 0.0
      %v669 = vmax.f32 %v571, 0.0
      %v670 = vmax.f32 %v573, 0.0
      %v671 = vmax.f32 %v575, 0.0
      %v672 = vmax.f32 %v577, 0.0
      %v673 = vmax.f32 %v581, 0.0
      %v674 = vmax.f32 %v583, 0.0
      %v675 = vmax.f32 %v585, 0.0
      %v676 = vmax.f32 %v587, 0.0
      %v677 = vmax.f32 %v591, 0.0
      %v678 = vmax.f32 %v593, 0.0
      %v679 = vmax.f32 %v595, 0.0
      %v680 = vmax.f32 %v597, 0.0
      %v681 = vmax.f32 %v601, 0.0
      %v682 = vmax.f32 %v603, 0.0
      %v683 = vmax.f32 %v605, 0.0
      %v684 = vmax.f32 %v607, 0.0
      %v685 = vmax.f32 %v611, 0.0
      %v686 = vmax.f32 %v613, 0.0
      %v687 = vmax.f32 %v615, 0.0
      %v688 = vmax.f32 %v617, 0.0
      %v689 = vmax.f32 %v621, 0.0
      %v690 = vmax.f32 %v623, 0.0
      %v691 = vmax.f32 %v625, 0.0
      %v692 = vmax.f32 %v627, 0.0
      %v693 = vmin.f32 %v629, 6.0
      %v694 = vmin.f32 %v630, 6.0
      %v695 = vmin.f32 %v631, 6.0
      %v696 = vmin.f32 %v632, 6.0
      %v697 = vmin.f32 %v633, 6.0
      %v698 = vmin.f32 %v634, 6.0
      %v699 = vmin.f32 %v635, 6.0
      %v700 = vmin.f32 %v636, 6.0
      %v701 = vmin.f32 %v637, 6.0
      %v702 = vmin.f32 %v638, 6.0
      %v703 = vmin.f32 %v639, 6.0
      %v704 = vmin.f32 %v640, 6.0
      %v705 = vmin.f32 %v641, 6.0
      %v706 = vmin.f32 %v642, 6.0
      %v707 = vmin.f32 %v643, 6.0
      %v708 = vmin.f32 %v644, 6.0
      %v709 = vmin.f32 %v645, 6.0
      %v710 = vmin.f32 %v646, 6.0
      %v711 = vmin.f32 %v647, 6.0
      %v712 = vmin.f32 %v648, 6.0
      %v713 = vmin.f32 %v649, 6.0
      %v714 = vmin.f32 %v650, 6.0
      %v715 = vmin.f32 %v651, 6.0
      %v716 = vmin.f32 %v652, 6.0
      %v717 = vmin.f32 %v653, 6.0
      %v718 = vmin.f32 %v654, 6.0
      %v719 = vmin.f32 %v655, 6.0
      %v720 = vmin.f32 %v656, 6.0
      %v721 = vmin.f32 %v657, 6.0
      %v722 = vmin.f32 %v658, 6.0
      %v723 = vmin.f32 %v659, 6.0
      %v724 = vmin.f32 %v660, 6.0
      %v725 = vmin.f32 %v661, 6.0
      %v726 = vmin.f32 %v662, 6.0
      %v727 = vmin.f32 %v663, 6.0
      %v728 = vmin.f32 %v664, 6.0
      %v729 = vmin.f32 %v665, 6.0
      %v730 = vmin.f32 %v666, 6.0
      %v731 = vmin.f32 %v667, 6.0
      %v732 = vmin.f32 %v668, 6.0
      %v733 = vmin.f32 %v669, 6.0
      %v734 = vmin.f32 %v670, 6.0
      %v735 = vmin.f32 %v671, 6.0
      %v736 = vmin.f32 %v672, 6.0
      %v737 = vmin.f32 %v673, 6.0
      %v738 = vmin.f32 %v674, 6.0
      %v739 = vmin.f32 %v675, 6.0
      %v740 = vmin.f32 %v676, 6.0
      %v741 = vmin.f32 %v677, 6.0
      %v742 = vmin.f32 %v678, 6.0
      %v743 = vmin.f32 %v679, 6.0
      %v744 = vmin.f32 %v680, 6.0
      %v745 = vmin.f32 %v681, 6.0
      %v746 = vmin.f32 %v682, 6.0
      %v747 = vmin.f32 %v683, 6.0
      %v748 = vmin.f32 %v684, 6.0
      %v749 = vmin.f32 %v685, 6.0
      %v750 = vmin.f32 %v686, 6.0
      %v751 = vmin.f32 %v687, 6.0
      %v752 = vmin.f32 %v688, 6.0
      %v753 = vmin.f32 %v689, 6.0
      %v754 = vmin.f32 %v690, 6.0
      %v755 = vmin.f32 %v691, 6.0
      %v756 = vmin.f32 %v692, 6.0
      %757 = vst [vmem:[#allocation2] sm:$0xff] 0.0
      %758 = vst [vmem:[#allocation2 + $0x8] sm:$0xff] 0.0
      %759 = vst [vmem:[#allocation2 + $0x10] sm:$0xff] 0.0
      %760 = vst [vmem:[#allocation2 + $0x18] sm:$0xff] 0.0
      %761 = vst [vmem:[#allocation2 + $0x20] sm:$0xff] 0.0
      %762 = vst [vmem:[#allocation2 + $0x28] sm:$0xff] 0.0
      %763 = vst [vmem:[#allocation2 + $0x30] sm:$0xff] 0.0
      %764 = vst [vmem:[#allocation2 + $0x38] sm:$0xff] 0.0
      %765 = vst [vmem:[#allocation2 + $0x40] sm:$0xff] 0.0
      %766 = vst [vmem:[#allocation2 + $0x48] sm:$0xff] 0.0
      %767 = vst [vmem:[#allocation2 + $0x50] sm:$0xff] 0.0
      %768 = vst [vmem:[#allocation2 + $0x58] sm:$0xff] 0.0
      %769 = vst [vmem:[#allocation2 + $0x60] sm:$0xff] 0.0
      %770 = vst [vmem:[#allocation2 + $0x68] sm:$0xff] 0.0
      %771 = vst [vmem:[#allocation2 + $0x70] sm:$0xff] 0.0
      %772 = vst [vmem:[#allocation2 + $0x78] sm:$0xff] 0.0
      %773 = vst [vmem:[#allocation2 + $0x80] sm:$0xff] 0.0
      %774 = vst [vmem:[#allocation2 + $0x88] sm:$0xff] 0.0
      %775 = vst [vmem:[#allocation2 + $0x90] sm:$0xff] 0.0
      %776 = vst [vmem:[#allocation2 + $0x98] sm:$0xff] 0.0
      %777 = vst [vmem:[#allocation2 + $0xa0] sm:$0xff] 0.0
      %778 = vst [vmem:[#allocation2 + $0xa8] sm:$0xff] 0.0
      %779 = vst [vmem:[#allocation2 + $0xb0] sm:$0xff] 0.0
      %780 = vst [vmem:[#allocation2 + $0xb8] sm:$0xff] 0.0
      %781 = vst [vmem:[#allocation2 + $0xc0] sm:$0xff] 0.0
      %782 = vst [vmem:[#allocation2 + $0xc8] sm:$0xff] 0.0
      %783 = vst [vmem:[#allocation2 + $0xd0] sm:$0xff] 0.0
      %784 = vst [vmem:[#allocation2 + $0xd8] sm:$0xff] 0.0
      %785 = vst [vmem:[#allocation2 + $0xe0] sm:$0xff] 0.0
      %786 = vst [vmem:[#allocation2 + $0xe8] sm:$0xff] 0.0
      %787 = vst [vmem:[#allocation2 + $0xf0] sm:$0xff] 0.0
      %788 = vst [vmem:[#allocation2 + $0xf8] sm:$0xff] 0.0
      %789 = vst [vmem:[#allocation2 + $0x100] sm:$0xff] 0.0
      %790 = vst [vmem:[#allocation2 + $0x108] sm:$0xff] 0.0
      %791 = vst [vmem:[#allocation2 + $0x110] sm:$0xff] 0.0
      %792 = vst [vmem:[#allocation2 + $0x118] sm:$0xff] 0.0
      %793 = vst [vmem:[#allocation2 + $0x120] sm:$0xff] 0.0
      %794 = vst [vmem:[#allocation2 + $0x128] sm:$0xff] 0.0
      %795 = vst [vmem:[#allocation2 + $0x130] sm:$0xff] 0.0
      %796 = vst [vmem:[#allocation2 + $0x138] sm:$0xff] 0.0
      %797 = vst [vmem:[#allocation2 + $0x140] sm:$0xff] 0.0
      %798 = vst [vmem:[#allocation2 + $0x148] sm:$0xff] 0.0
      %799 = vst [vmem:[#allocation2 + $0x150] sm:$0xff] 0.0
      %800 = vst [vmem:[#allocation2 + $0x158] sm:$0xff] 0.0
      %801 = vst [vmem:[#allocation2 + $0x160] sm:$0xff] 0.0
      %802 = vst [vmem:[#allocation2 + $0x168] sm:$0xff] 0.0
      %803 = vst [vmem:[#allocation2 + $0x170] sm:$0xff] 0.0
      %804 = vst [vmem:[#allocation2 + $0x178] sm:$0xff] 0.0
      %805 = vst [vmem:[#allocation2 + $0x180] sm:$0xff] 0.0
      %806 = vst [vmem:[#allocation2 + $0x188] sm:$0xff] 0.0
      %807 = vst [vmem:[#allocation2 + $0x190] sm:$0xff] 0.0
      %808 = vst [vmem:[#allocation2 + $0x198] sm:$0xff] 0.0
      %809 = vst [vmem:[#allocation2 + $0x1a0] sm:$0xff] 0.0
      %810 = vst [vmem:[#allocation2 + $0x1a8] sm:$0xff] 0.0
      %811 = vst [vmem:[#allocation2 + $0x1b0] sm:$0xff] 0.0
      %812 = vst [vmem:[#allocation2 + $0x1b8] sm:$0xff] 0.0
      %813 = vst [vmem:[#allocation2 + $0x1c0] sm:$0xff] 0.0
      %814 = vst [vmem:[#allocation2 + $0x1c8] sm:$0xff] 0.0
      %815 = vst [vmem:[#allocation2 + $0x1d0] sm:$0xff] 0.0
      %816 = vst [vmem:[#allocation2 + $0x1d8] sm:$0xff] 0.0
      %817 = vst [vmem:[#allocation2 + $0x1e0] sm:$0xff] 0.0
      %818 = vst [vmem:[#allocation2 + $0x1e8] sm:$0xff] 0.0
      %819 = vst [vmem:[#allocation2 + $0x1f0] sm:$0xff] 0.0
      %820 = vst [vmem:[#allocation2 + $0x1f8] sm:$0xff] 0.0
      %821 = vst [vmem:[#allocation2 + $0x200] sm:$0xff] 0.0
      %822 = vst [vmem:[#allocation2 + $0x208] sm:$0xff] 0.0
      %823 = vst [vmem:[#allocation2 + $0x210] sm:$0xff] 0.0
      %824 = vst [vmem:[#allocation2 + $0x218] sm:$0xff] 0.0
      %825 = vst [vmem:[#allocation2 + $0x220] sm:$0xff] 0.0
      %826 = vst [vmem:[#allocation2 + $0x228] sm:$0xff] 0.0
      %827 = vst [vmem:[#allocation2 + $0x230] sm:$0xff] 0.0
      %828 = vst [vmem:[#allocation2 + $0x238] sm:$0xff] 0.0
      %829 = vst [vmem:[#allocation2 + $0x240] sm:$0xff] 0.0
      %830 = vst [vmem:[#allocation2 + $0x248] sm:$0xff] 0.0
      %831 = vst [vmem:[#allocation2 + $0x250] sm:$0xff] 0.0
      %832 = vst [vmem:[#allocation2 + $0x258] sm:$0xff] 0.0
      %833 = vst [vmem:[#allocation2 + $0x260] sm:$0xff] 0.0
      %834 = vst [vmem:[#allocation2 + $0x268] sm:$0xff] 0.0
      %835 = vst [vmem:[#allocation2 + $0x270] sm:$0xff] 0.0
      %836 = vst [vmem:[#allocation2 + $0x278] sm:$0xff] 0.0
      %837 = vst [vmem:[#allocation2 + $0x280] sm:$0xff] 0.0
      %838 = vst [vmem:[#allocation2 + $0x288] sm:$0xff] 0.0
      %839 = vst [vmem:[#allocation2 + $0x290] sm:$0xff] 0.0
      %840 = vst [vmem:[#allocation2 + $0x298] sm:$0xff] 0.0
      %841 = vst [vmem:[#allocation2 + $0x2a0] sm:$0xff] 0.0
      %842 = vst [vmem:[#allocation2 + $0x2a8] sm:$0xff] 0.0
      %843 = vst [vmem:[#allocation2 + $0x2b0] sm:$0xff] 0.0
      %844 = vst [vmem:[#allocation2 + $0x2b8] sm:$0xff] 0.0
      %845 = vst [vmem:[#allocation2 + $0x2c0] sm:$0xff] 0.0
      %846 = vst [vmem:[#allocation2 + $0x2c8] sm:$0xff] 0.0
      %847 = vst [vmem:[#allocation2 + $0x2d0] sm:$0xff] 0.0
      %848 = vst [vmem:[#allocation2 + $0x2d8] sm:$0xff] 0.0
      %849 = vst [vmem:[#allocation2 + $0x2e0] sm:$0xff] 0.0
      %850 = vst [vmem:[#allocation2 + $0x2e8] sm:$0xff] 0.0
      %851 = vst [vmem:[#allocation2 + $0x2f0] sm:$0xff] 0.0
      %852 = vst [vmem:[#allocation2 + $0x2f8] sm:$0xff] 0.0
      %853 = vst [vmem:[#allocation2 + $0x300] sm:$0xff] 0.0
      %854 = vst [vmem:[#allocation2 + $0x308] sm:$0xff] 0.0
      %855 = vst [vmem:[#allocation2 + $0x310] sm:$0xff] 0.0
      %856 = vst [vmem:[#allocation2 + $0x318] sm:$0xff] 0.0
      %857 = vst [vmem:[#allocation2 + $0x320] sm:$0xff] 0.0
      %858 = vst [vmem:[#allocation2 + $0x328] sm:$0xff] 0.0
      %859 = vst [vmem:[#allocation2 + $0x330] sm:$0xff] 0.0
      %860 = vst [vmem:[#allocation2 + $0x338] sm:$0xff] 0.0
      %861 = vst [vmem:[#allocation2 + $0x340] sm:$0xff] 0.0
      %862 = vst [vmem:[#allocation2 + $0x348] sm:$0xff] 0.0
      %863 = vst [vmem:[#allocation2 + $0x350] sm:$0xff] 0.0
      %864 = vst [vmem:[#allocation2 + $0x358] sm:$0xff] 0.0
      %vm929 = vcmask 1040384
      %v930 = vrot.slane %v693, 7
      %v931 = vrot.slane %v694, 7
      %v932 = vrot.slane %v695, 7
      %v933 = vsel %vm929, %v930, %v932
      %v934 = vrot.slane %v696, 7
      %v935 = vsel %vm929, %v931, %v934
      %v936 = vrot.slane %v697, 7
      %v937 = vrot.slane %v698, 7
      %v938 = vrot.slane %v699, 7
      %v939 = vsel %vm929, %v936, %v938
      %v940 = vrot.slane %v700, 7
      %v941 = vsel %vm929, %v937, %v940
      %v942 = vrot.slane %v701, 7
      %v943 = vrot.slane %v702, 7
      %v944 = vrot.slane %v703, 7
      %v945 = vsel %vm929, %v942, %v944
      %v946 = vrot.slane %v704, 7
      %v947 = vsel %vm929, %v943, %v946
      %v948 = vrot.slane %v705, 7
      %v949 = vrot.slane %v706, 7
      %v950 = vrot.slane %v707, 7
      %v951 = vsel %vm929, %v948, %v950
      %v952 = vrot.slane %v708, 7
      %v953 = vsel %vm929, %v949, %v952
      %v954 = vrot.slane %v709, 7
      %v955 = vrot.slane %v710, 7
      %v956 = vrot.slane %v711, 7
      %v957 = vsel %vm929, %v954, %v956
      %v958 = vrot.slane %v712, 7
      %v959 = vsel %vm929, %v955, %v958
      %v960 = vrot.slane %v713, 7
      %v961 = vrot.slane %v714, 7
      %v962 = vrot.slane %v715, 7
      %v963 = vsel %vm929, %v960, %v962
      %v964 = vrot.slane %v716, 7
      %v965 = vsel %vm929, %v961, %v964
      %v966 = vrot.slane %v717, 7
      %v967 = vrot.slane %v718, 7
      %v968 = vrot.slane %v719, 7
      %v969 = vsel %vm929, %v966, %v968
      %v970 = vrot.slane %v720, 7
      %v971 = vsel %vm929, %v967, %v970
      %v972 = vrot.slane %v721, 7
      %v973 = vrot.slane %v722, 7
      %v974 = vrot.slane %v723, 7
      %v975 = vsel %vm929, %v972, %v974
      %v976 = vrot.slane %v724, 7
      %v977 = vsel %vm929, %v973, %v976
      %v978 = vrot.slane %v725, 7
      %v979 = vrot.slane %v726, 7
      %v980 = vrot.slane %v727, 7
      %v981 = vsel %vm929, %v978, %v980
      %v982 = vrot.slane %v728, 7
      %v983 = vsel %vm929, %v979, %v982
      %v984 = vrot.slane %v729, 7
      %v985 = vrot.slane %v730, 7
      %v986 = vrot.slane %v731, 7
      %v987 = vsel %vm929, %v984, %v986
      %v988 = vrot.slane %v732, 7
      %v989 = vsel %vm929, %v985, %v988
      %v990 = vrot.slane %v733, 7
      %v991 = vrot.slane %v734, 7
      %v992 = vrot.slane %v735, 7
      %v993 = vsel %vm929, %v990, %v992
      %v994 = vrot.slane %v736, 7
      %v995 = vsel %vm929, %v991, %v994
      %v996 = vrot.slane %v737, 7
      %v997 = vrot.slane %v738, 7
      %v998 = vrot.slane %v739, 7
      %v999 = vsel %vm929, %v996, %v998
      %v1000 = vrot.slane %v740, 7
      %v1001 = vsel %vm929, %v997, %v1000
      %v1002 = vrot.slane %v741, 7
      %v1003 = vrot.slane %v742, 7
      %v1004 = vrot.slane %v743, 7
      %v1005 = vsel %vm929, %v1002, %v1004
      %v1006 = vrot.slane %v744, 7
      %v1007 = vsel %vm929, %v1003, %v1006
      %v1008 = vrot.slane %v745, 7
      %v1009 = vrot.slane %v746, 7
      %v1010 = vrot.slane %v747, 7
      %v1011 = vsel %vm929, %v1008, %v1010
      %v1012 = vrot.slane %v748, 7
      %v1013 = vsel %vm929, %v1009, %v1012
      %v1014 = vrot.slane %v749, 7
      %v1015 = vrot.slane %v750, 7
      %v1016 = vrot.slane %v751, 7
      %v1017 = vsel %vm929, %v1014, %v1016
      %v1018 = vrot.slane %v752, 7
      %v1019 = vsel %vm929, %v1015, %v1018
      %v1020 = vrot.slane %v753, 7
      %v1021 = vrot.slane %v754, 7
      %v1022 = vrot.slane %v755, 7
      %v1023 = vsel %vm929, %v1020, %v1022
      %v1024 = vrot.slane %v756, 7
      %v1025 = vsel %vm929, %v1021, %v1024
      %s1122 = scalar_lea.vmem [#allocation2], 48
      %1123 = vst [vmem:[%s1122] sm:$0xfe] %v930
      %1124 = vst [vmem:[%s1122 + $0x8] sm:$0xfe] %v931
      %1125 = vst [vmem:[%s1122 + $0x10] sm:$0xff] %v933
      %1126 = vst [vmem:[%s1122 + $0x18] sm:$0xff] %v935
      %1127 = vst [vmem:[%s1122 + $0x20] sm:$0x1] %v932
      %1128 = vst [vmem:[%s1122 + $0x28] sm:$0x1] %v934
      %1129 = vst [vmem:[%s1122 + $0x30] sm:$0xfe] %v936
      %1130 = vst [vmem:[%s1122 + $0x38] sm:$0xfe] %v937
      %1131 = vst [vmem:[%s1122 + $0x40] sm:$0xff] %v939
      %1132 = vst [vmem:[%s1122 + $0x48] sm:$0xff] %v941
      %1133 = vst [vmem:[%s1122 + $0x50] sm:$0x1] %v938
      %1134 = vst [vmem:[%s1122 + $0x58] sm:$0x1] %v940
      %1135 = vst [vmem:[%s1122 + $0x60] sm:$0xfe] %v942
      %1136 = vst [vmem:[%s1122 + $0x68] sm:$0xfe] %v943
      %1137 = vst [vmem:[%s1122 + $0x70] sm:$0xff] %v945
      %1138 = vst [vmem:[%s1122 + $0x78] sm:$0xff] %v947
      %1139 = vst [vmem:[%s1122 + $0x80] sm:$0x1] %v944
      %1140 = vst [vmem:[%s1122 + $0x88] sm:$0x1] %v946
      %1141 = vst [vmem:[%s1122 + $0x90] sm:$0xfe] %v948
      %1142 = vst [vmem:[%s1122 + $0x98] sm:$0xfe] %v949
      %1143 = vst [vmem:[%s1122 + $0xa0] sm:$0xff] %v951
      %1144 = vst [vmem:[%s1122 + $0xa8] sm:$0xff] %v953
      %1145 = vst [vmem:[%s1122 + $0xb0] sm:$0x1] %v950
      %1146 = vst [vmem:[%s1122 + $0xb8] sm:$0x1] %v952
      %1147 = vst [vmem:[%s1122 + $0xc0] sm:$0xfe] %v954
      %1148 = vst [vmem:[%s1122 + $0xc8] sm:$0xfe] %v955
      %1149 = vst [vmem:[%s1122 + $0xd0] sm:$0xff] %v957
      %1150 = vst [vmem:[%s1122 + $0xd8] sm:$0xff] %v959
      %1151 = vst [vmem:[%s1122 + $0xe0] sm:$0x1] %v956
      %1152 = vst [vmem:[%s1122 + $0xe8] sm:$0x1] %v958
      %1153 = vst [vmem:[%s1122 + $0xf0] sm:$0xfe] %v960
      %1154 = vst [vmem:[%s1122 + $0xf8] sm:$0xfe] %v961
      %1155 = vst [vmem:[%s1122 + $0x100] sm:$0xff] %v963
      %1156 = vst [vmem:[%s1122 + $0x108] sm:$0xff] %v965
      %1157 = vst [vmem:[%s1122 + $0x110] sm:$0x1] %v962
      %1158 = vst [vmem:[%s1122 + $0x118] sm:$0x1] %v964
      %1159 = vst [vmem:[%s1122 + $0x120] sm:$0xfe] %v966
      %1160 = vst [vmem:[%s1122 + $0x128] sm:$0xfe] %v967
      %1161 = vst [vmem:[%s1122 + $0x130] sm:$0xff] %v969
      %1162 = vst [vmem:[%s1122 + $0x138] sm:$0xff] %v971
      %1163 = vst [vmem:[%s1122 + $0x140] sm:$0x1] %v968
      %1164 = vst [vmem:[%s1122 + $0x148] sm:$0x1] %v970
      %1165 = vst [vmem:[%s1122 + $0x150] sm:$0xfe] %v972
      %1166 = vst [vmem:[%s1122 + $0x158] sm:$0xfe] %v973
      %1167 = vst [vmem:[%s1122 + $0x160] sm:$0xff] %v975
      %1168 = vst [vmem:[%s1122 + $0x168] sm:$0xff] %v977
      %1169 = vst [vmem:[%s1122 + $0x170] sm:$0x1] %v974
      %1170 = vst [vmem:[%s1122 + $0x178] sm:$0x1] %v976
      %1171 = vst [vmem:[%s1122 + $0x180] sm:$0xfe] %v978
      %1172 = vst [vmem:[%s1122 + $0x188] sm:$0xfe] %v979
      %1173 = vst [vmem:[%s1122 + $0x190] sm:$0xff] %v981
      %1174 = vst [vmem:[%s1122 + $0x198] sm:$0xff] %v983
      %1175 = vst [vmem:[%s1122 + $0x1a0] sm:$0x1] %v980
      %1176 = vst [vmem:[%s1122 + $0x1a8] sm:$0x1] %v982
      %1177 = vst [vmem:[%s1122 + $0x1b0] sm:$0xfe] %v984
      %1178 = vst [vmem:[%s1122 + $0x1b8] sm:$0xfe] %v985
      %1179 = vst [vmem:[%s1122 + $0x1c0] sm:$0xff] %v987
      %1180 = vst [vmem:[%s1122 + $0x1c8] sm:$0xff] %v989
      %1181 = vst [vmem:[%s1122 + $0x1d0] sm:$0x1] %v986
      %1182 = vst [vmem:[%s1122 + $0x1d8] sm:$0x1] %v988
      %1183 = vst [vmem:[%s1122 + $0x1e0] sm:$0xfe] %v990
      %1184 = vst [vmem:[%s1122 + $0x1e8] sm:$0xfe] %v991
      %1185 = vst [vmem:[%s1122 + $0x1f0] sm:$0xff] %v993
      %1186 = vst [vmem:[%s1122 + $0x1f8] sm:$0xff] %v995
      %1187 = vst [vmem:[%s1122 + $0x200] sm:$0x1] %v992
      %1188 = vst [vmem:[%s1122 + $0x208] sm:$0x1] %v994
      %1189 = vst [vmem:[%s1122 + $0x210] sm:$0xfe] %v996
      %1190 = vst [vmem:[%s1122 + $0x218] sm:$0xfe] %v997
      %1191 = vst [vmem:[%s1122 + $0x220] sm:$0xff] %v999
      %1192 = vst [vmem:[%s1122 + $0x228] sm:$0xff] %v1001
      %1193 = vst [vmem:[%s1122 + $0x230] sm:$0x1] %v998
      %1194 = vst [vmem:[%s1122 + $0x238] sm:$0x1] %v1000
      %1195 = vst [vmem:[%s1122 + $0x240] sm:$0xfe] %v1002
      %1196 = vst [vmem:[%s1122 + $0x248] sm:$0xfe] %v1003
      %1197 = vst [vmem:[%s1122 + $0x250] sm:$0xff] %v1005
      %1198 = vst [vmem:[%s1122 + $0x258] sm:$0xff] %v1007
      %1199 = vst [vmem:[%s1122 + $0x260] sm:$0x1] %v1004
      %1200 = vst [vmem:[%s1122 + $0x268] sm:$0x1] %v1006
      %1201 = vst [vmem:[%s1122 + $0x270] sm:$0xfe] %v1008
      %1202 = vst [vmem:[%s1122 + $0x278] sm:$0xfe] %v1009
      %1203 = vst [vmem:[%s1122 + $0x280] sm:$0xff] %v1011
      %1204 = vst [vmem:[%s1122 + $0x288] sm:$0xff] %v1013
      %1205 = vst [vmem:[%s1122 + $0x290] sm:$0x1] %v1010
      %1206 = vst [vmem:[%s1122 + $0x298] sm:$0x1] %v1012
      %1207 = vst [vmem:[%s1122 + $0x2a0] sm:$0xfe] %v1014
      %1208 = vst [vmem:[%s1122 + $0x2a8] sm:$0xfe] %v1015
      %1209 = vst [vmem:[%s1122 + $0x2b0] sm:$0xff] %v1017
      %1210 = vst [vmem:[%s1122 + $0x2b8] sm:$0xff] %v1019
      %1211 = vst [vmem:[%s1122 + $0x2c0] sm:$0x1] %v1016
      %1212 = vst [vmem:[%s1122 + $0x2c8] sm:$0x1] %v1018
      %1213 = vst [vmem:[%s1122 + $0x2d0] sm:$0xfe] %v1020
      %1214 = vst [vmem:[%s1122 + $0x2d8] sm:$0xfe] %v1021
      %1215 = vst [vmem:[%s1122 + $0x2e0] sm:$0xff] %v1023
      %1216 = vst [vmem:[%s1122 + $0x2e8] sm:$0xff] %v1025
      %1217 = vst [vmem:[%s1122 + $0x2f0] sm:$0x1] %v1022
      %1218 = vst [vmem:[%s1122 + $0x2f8] sm:$0x1] %v1024
      %v1219 = vld [vmem:[%s3] sm:$0xff]
      %v1220 = vld [vmem:[%s3 + $0x8] sm:$0xff]
      %v1221 = vld [vmem:[%s3 + $0x10] sm:$0x1]
      %v1222 = vld [vmem:[%s3 + $0x18] sm:$0x1]
      %v1223 = vld [vmem:[#allocation2] sm:$0xff]
      %v1224 = vld [vmem:[#allocation2 + $0x8] sm:$0xff]
      %v1225 = vld [vmem:[#allocation2 + $0x10] sm:$0xff]
      %v1226 = vld [vmem:[#allocation2 + $0x18] sm:$0xff]
      %v1227 = vld [vmem:[#allocation2 + $0x30] sm:$0xff]
      %v1228 = vld [vmem:[#allocation2 + $0x38] sm:$0xff]
      %v1229 = vld [vmem:[#allocation2 + $0x40] sm:$0xff]
      %v1230 = vld [vmem:[#allocation2 + $0x48] sm:$0xff]
      %v1231 = vld [vmem:[#allocation2 + $0x60] sm:$0xff]
      %v1232 = vld [vmem:[#allocation2 + $0x68] sm:$0xff]
      %v1233 = vld [vmem:[#allocation2 + $0x70] sm:$0xff]
      %v1234 = vld [vmem:[#allocation2 + $0x78] sm:$0xff]
      %v1235 = vld [vmem:[#allocation2 + $0x90] sm:$0xff]
      %v1236 = vld [vmem:[#allocation2 + $0x98] sm:$0xff]
      %v1237 = vld [vmem:[#allocation2 + $0xa0] sm:$0xff]
      %v1238 = vld [vmem:[#allocation2 + $0xa8] sm:$0xff]
      %v1239 = vld [vmem:[#allocation2 + $0xc0] sm:$0xff]
      %v1240 = vld [vmem:[#allocation2 + $0xc8] sm:$0xff]
      %v1241 = vld [vmem:[#allocation2 + $0xd0] sm:$0xff]
      %v1242 = vld [vmem:[#allocation2 + $0xd8] sm:$0xff]
      %v1243 = vld [vmem:[#allocation2 + $0xf0] sm:$0xff]
      %v1244 = vld [vmem:[#allocation2 + $0xf8] sm:$0xff]
      %v1245 = vld [vmem:[#allocation2 + $0x100] sm:$0xff]
      %v1246 = vld [vmem:[#allocation2 + $0x108] sm:$0xff]
      %v1247 = vld [vmem:[#allocation2 + $0x120] sm:$0xff]
      %v1248 = vld [vmem:[#allocation2 + $0x128] sm:$0xff]
      %v1249 = vld [vmem:[#allocation2 + $0x130] sm:$0xff]
      %v1250 = vld [vmem:[#allocation2 + $0x138] sm:$0xff]
      %v1251 = vld [vmem:[#allocation2 + $0x150] sm:$0xff]
      %v1252 = vld [vmem:[#allocation2 + $0x158] sm:$0xff]
      %v1253 = vld [vmem:[#allocation2 + $0x160] sm:$0xff]
      %v1254 = vld [vmem:[#allocation2 + $0x168] sm:$0xff]
      %v1255 = vld [vmem:[#allocation2 + $0x180] sm:$0xff]
      %v1256 = vld [vmem:[#allocation2 + $0x188] sm:$0xff]
      %v1257 = vld [vmem:[#allocation2 + $0x190] sm:$0xff]
      %v1258 = vld [vmem:[#allocation2 + $0x198] sm:$0xff]
      %v1259 = vld [vmem:[#allocation2 + $0x1b0] sm:$0xff]
      %v1260 = vld [vmem:[#allocation2 + $0x1b8] sm:$0xff]
      %v1261 = vld [vmem:[#allocation2 + $0x1c0] sm:$0xff]
      %v1262 = vld [vmem:[#allocation2 + $0x1c8] sm:$0xff]
      %v1263 = vld [vmem:[#allocation2 + $0x1e0] sm:$0xff]
      %v1264 = vld [vmem:[#allocation2 + $0x1e8] sm:$0xff]
      %v1265 = vld [vmem:[#allocation2 + $0x1f0] sm:$0xff]
      %v1266 = vld [vmem:[#allocation2 + $0x1f8] sm:$0xff]
      %v1267 = vld [vmem:[#allocation2 + $0x210] sm:$0xff]
      %v1268 = vld [vmem:[#allocation2 + $0x218] sm:$0xff]
      %v1269 = vld [vmem:[#allocation2 + $0x220] sm:$0xff]
      %v1270 = vld [vmem:[#allocation2 + $0x228] sm:$0xff]
      %v1271 = vld [vmem:[#allocation2 + $0x240] sm:$0xff]
      %v1272 = vld [vmem:[#allocation2 + $0x248] sm:$0xff]
      %v1273 = vld [vmem:[#allocation2 + $0x250] sm:$0xff]
      %v1274 = vld [vmem:[#allocation2 + $0x258] sm:$0xff]
      %v1275 = vld [vmem:[#allocation2 + $0x270] sm:$0xff]
      %v1276 = vld [vmem:[#allocation2 + $0x278] sm:$0xff]
      %v1277 = vld [vmem:[#allocation2 + $0x280] sm:$0xff]
      %v1278 = vld [vmem:[#allocation2 + $0x288] sm:$0xff]
      %v1279 = vld [vmem:[#allocation2 + $0x2a0] sm:$0xff]
      %v1280 = vld [vmem:[#allocation2 + $0x2a8] sm:$0xff]
      %v1281 = vld [vmem:[#allocation2 + $0x2b0] sm:$0xff]
      %v1282 = vld [vmem:[#allocation2 + $0x2b8] sm:$0xff]
      %v1283 = vld [vmem:[#allocation2 + $0x2d0] sm:$0xff]
      %v1284 = vld [vmem:[#allocation2 + $0x2d8] sm:$0xff]
      %v1285 = vld [vmem:[#allocation2 + $0x2e0] sm:$0xff]
      %v1286 = vld [vmem:[#allocation2 + $0x2e8] sm:$0xff]
      %v1287 = vld [vmem:[#allocation2 + $0x300] sm:$0xff]
      %v1288 = vld [vmem:[#allocation2 + $0x308] sm:$0xff]
      %v1289 = vld [vmem:[#allocation2 + $0x310] sm:$0xff]
      %v1290 = vld [vmem:[#allocation2 + $0x318] sm:$0xff]
      %v1291 = vld [vmem:[#allocation2 + $0x330] sm:$0xff]
      %v1292 = vld [vmem:[#allocation2 + $0x338] sm:$0xff]
      %v1293 = vld [vmem:[#allocation2 + $0x340] sm:$0xff]
      %v1294 = vld [vmem:[#allocation2 + $0x348] sm:$0xff]
      %v1295 = vld [vmem:[#allocation2] sm:$0xfe]
      %v1296 = vld [vmem:[#allocation2 + $0x8] sm:$0xfe]
      %v1297 = vld [vmem:[#allocation2 + $0x10] sm:$0xff]
      %v1298 = vld [vmem:[#allocation2 + $0x18] sm:$0xff]
      %v1299 = vld [vmem:[#allocation2 + $0x20] sm:$0x1]
      %v1300 = vld [vmem:[#allocation2 + $0x28] sm:$0x1]
      %v1301 = vld [vmem:[#allocation2 + $0x30] sm:$0xfe]
      %v1302 = vld [vmem:[#allocation2 + $0x38] sm:$0xfe]
      %v1303 = vld [vmem:[#allocation2 + $0x40] sm:$0xff]
      %v1304 = vld [vmem:[#allocation2 + $0x48] sm:$0xff]
      %v1305 = vld [vmem:[#allocation2 + $0x50] sm:$0x1]
      %v1306 = vld [vmem:[#allocation2 + $0x58] sm:$0x1]
      %v1307 = vld [vmem:[#allocation2 + $0x60] sm:$0xfe]
      %v1308 = vld [vmem:[#allocation2 + $0x68] sm:$0xfe]
      %v1309 = vld [vmem:[#allocation2 + $0x70] sm:$0xff]
      %v1310 = vld [vmem:[#allocation2 + $0x78] sm:$0xff]
      %v1311 = vld [vmem:[#allocation2 + $0x80] sm:$0x1]
      %v1312 = vld [vmem:[#allocation2 + $0x88] sm:$0x1]
      %v1313 = vld [vmem:[#allocation2 + $0x90] sm:$0xfe]
      %v1314 = vld [vmem:[#allocation2 + $0x98] sm:$0xfe]
      %v1315 = vld [vmem:[#allocation2 + $0xa0] sm:$0xff]
      %v1316 = vld [vmem:[#allocation2 + $0xa8] sm:$0xff]
      %v1317 = vld [vmem:[#allocation2 + $0xb0] sm:$0x1]
      %v1318 = vld [vmem:[#allocation2 + $0xb8] sm:$0x1]
      %v1319 = vld [vmem:[#allocation2 + $0xc0] sm:$0xfe]
      %v1320 = vld [vmem:[#allocation2 + $0xc8] sm:$0xfe]
      %v1321 = vld [vmem:[#allocation2 + $0xd0] sm:$0xff]
      %v1322 = vld [vmem:[#allocation2 + $0xd8] sm:$0xff]
      %v1323 = vld [vmem:[#allocation2 + $0xe0] sm:$0x1]
      %v1324 = vld [vmem:[#allocation2 + $0xe8] sm:$0x1]
      %v1325 = vld [vmem:[#allocation2 + $0xf0] sm:$0xfe]
      %v1326 = vld [vmem:[#allocation2 + $0xf8] sm:$0xfe]
      %v1327 = vld [vmem:[#allocation2 + $0x100] sm:$0xff]
      %v1328 = vld [vmem:[#allocation2 + $0x108] sm:$0xff]
      %v1329 = vld [vmem:[#allocation2 + $0x110] sm:$0x1]
      %v1330 = vld [vmem:[#allocation2 + $0x118] sm:$0x1]
      %v1331 = vld [vmem:[#allocation2 + $0x120] sm:$0xfe]
      %v1332 = vld [vmem:[#allocation2 + $0x128] sm:$0xfe]
      %v1333 = vld [vmem:[#allocation2 + $0x130] sm:$0xff]
      %v1334 = vld [vmem:[#allocation2 + $0x138] sm:$0xff]
      %v1335 = vld [vmem:[#allocation2 + $0x140] sm:$0x1]
      %v1336 = vld [vmem:[#allocation2 + $0x148] sm:$0x1]
      %v1337 = vld [vmem:[#allocation2 + $0x150] sm:$0xfe]
      %v1338 = vld [vmem:[#allocation2 + $0x158] sm:$0xfe]
      %v1339 = vld [vmem:[#allocation2 + $0x160] sm:$0xff]
      %v1340 = vld [vmem:[#allocation2 + $0x168] sm:$0xff]
      %v1341 = vld [vmem:[#allocation2 + $0x170] sm:$0x1]
      %v1342 = vld [vmem:[#allocation2 + $0x178] sm:$0x1]
      %v1343 = vld [vmem:[#allocation2 + $0x180] sm:$0xfe]
      %v1344 = vld [vmem:[#allocation2 + $0x188] sm:$0xfe]
      %v1345 = vld [vmem:[#allocation2 + $0x190] sm:$0xff]
      %v1346 = vld [vmem:[#allocation2 + $0x198] sm:$0xff]
      %v1347 = vld [vmem:[#allocation2 + $0x1a0] sm:$0x1]
      %v1348 = vld [vmem:[#allocation2 + $0x1a8] sm:$0x1]
      %v1349 = vld [vmem:[#allocation2 + $0x1b0] sm:$0xfe]
      %v1350 = vld [vmem:[#allocation2 + $0x1b8] sm:$0xfe]
      %v1351 = vld [vmem:[#allocation2 + $0x1c0] sm:$0xff]
      %v1352 = vld [vmem:[#allocation2 + $0x1c8] sm:$0xff]
      %v1353 = vld [vmem:[#allocation2 + $0x1d0] sm:$0x1]
      %v1354 = vld [vmem:[#allocation2 + $0x1d8] sm:$0x1]
      %v1355 = vld [vmem:[#allocation2 + $0x1e0] sm:$0xfe]
      %v1356 = vld [vmem:[#allocation2 + $0x1e8] sm:$0xfe]
      %v1357 = vld [vmem:[#allocation2 + $0x1f0] sm:$0xff]
      %v1358 = vld [vmem:[#allocation2 + $0x1f8] sm:$0xff]
      %v1359 = vld [vmem:[#allocation2 + $0x200] sm:$0x1]
      %v1360 = vld [vmem:[#allocation2 + $0x208] sm:$0x1]
      %v1361 = vld [vmem:[#allocation2 + $0x210] sm:$0xfe]
      %v1362 = vld [vmem:[#allocation2 + $0x218] sm:$0xfe]
      %v1363 = vld [vmem:[#allocation2 + $0x220] sm:$0xff]
      %v1364 = vld [vmem:[#allocation2 + $0x228] sm:$0xff]
      %v1365 = vld [vmem:[#allocation2 + $0x230] sm:$0x1]
      %v1366 = vld [vmem:[#allocation2 + $0x238] sm:$0x1]
      %v1367 = vld [vmem:[#allocation2 + $0x240] sm:$0xfe]
      %v1368 = vld [vmem:[#allocation2 + $0x248] sm:$0xfe]
      %v1369 = vld [vmem:[#allocation2 + $0x250] sm:$0xff]
      %v1370 = vld [vmem:[#allocation2 + $0x258] sm:$0xff]
      %v1371 = vld [vmem:[#allocation2 + $0x260] sm:$0x1]
      %v1372 = vld [vmem:[#allocation2 + $0x268] sm:$0x1]
      %v1373 = vld [vmem:[#allocation2 + $0x270] sm:$0xfe]
      %v1374 = vld [vmem:[#allocation2 + $0x278] sm:$0xfe]
      %v1375 = vld [vmem:[#allocation2 + $0x280] sm:$0xff]
      %v1376 = vld [vmem:[#allocation2 + $0x288] sm:$0xff]
      %v1377 = vld [vmem:[#allocation2 + $0x290] sm:$0x1]
      %v1378 = vld [vmem:[#allocation2 + $0x298] sm:$0x1]
      %v1379 = vld [vmem:[#allocation2 + $0x2a0] sm:$0xfe]
      %v1380 = vld [vmem:[#allocation2 + $0x2a8] sm:$0xfe]
      %v1381 = vld [vmem:[#allocation2 + $0x2b0] sm:$0xff]
      %v1382 = vld [vmem:[#allocation2 + $0x2b8] sm:$0xff]
      %v1383 = vld [vmem:[#allocation2 + $0x2c0] sm:$0x1]
      %v1384 = vld [vmem:[#allocation2 + $0x2c8] sm:$0x1]
      %v1385 = vld [vmem:[#allocation2 + $0x2d0] sm:$0xfe]
      %v1386 = vld [vmem:[#allocation2 + $0x2d8] sm:$0xfe]
      %v1387 = vld [vmem:[#allocation2 + $0x2e0] sm:$0xff]
      %v1388 = vld [vmem:[#allocation2 + $0x2e8] sm:$0xff]
      %v1389 = vld [vmem:[#allocation2 + $0x2f0] sm:$0x1]
      %v1390 = vld [vmem:[#allocation2 + $0x2f8] sm:$0x1]
      %v1391 = vld [vmem:[#allocation2 + $0x300] sm:$0xfe]
      %v1392 = vld [vmem:[#allocation2 + $0x308] sm:$0xfe]
      %v1393 = vld [vmem:[#allocation2 + $0x310] sm:$0xff]
      %v1394 = vld [vmem:[#allocation2 + $0x318] sm:$0xff]
      %v1395 = vld [vmem:[#allocation2 + $0x320] sm:$0x1]
      %v1396 = vld [vmem:[#allocation2 + $0x328] sm:$0x1]
      %v1397 = vld [vmem:[#allocation2 + $0x330] sm:$0xfe]
      %v1398 = vld [vmem:[#allocation2 + $0x338] sm:$0xfe]
      %v1399 = vld [vmem:[#allocation2 + $0x340] sm:$0xff]
      %v1400 = vld [vmem:[#allocation2 + $0x348] sm:$0xff]
      %v1401 = vld [vmem:[#allocation2 + $0x350] sm:$0x1]
      %v1402 = vld [vmem:[#allocation2 + $0x358] sm:$0x1]
      %v1403 = vld [vmem:[#allocation2] sm:$0xfc]
      %v1404 = vld [vmem:[#allocation2 + $0x8] sm:$0xfc]
      %v1405 = vld [vmem:[#allocation2 + $0x20] sm:$0x3]
      %v1406 = vld [vmem:[#allocation2 + $0x28] sm:$0x3]
      %v1407 = vld [vmem:[#allocation2 + $0x30] sm:$0xfc]
      %v1408 = vld [vmem:[#allocation2 + $0x38] sm:$0xfc]
      %v1409 = vld [vmem:[#allocation2 + $0x50] sm:$0x3]
      %v1410 = vld [vmem:[#allocation2 + $0x58] sm:$0x3]
      %v1411 = vld [vmem:[#allocation2 + $0x60] sm:$0xfc]
      %v1412 = vld [vmem:[#allocation2 + $0x68] sm:$0xfc]
      %v1413 = vld [vmem:[#allocation2 + $0x80] sm:$0x3]
      %v1414 = vld [vmem:[#allocation2 + $0x88] sm:$0x3]
      %v1415 = vld [vmem:[#allocation2 + $0x90] sm:$0xfc]
      %v1416 = vld [vmem:[#allocation2 + $0x98] sm:$0xfc]
      %v1417 = vld [vmem:[#allocation2 + $0xb0] sm:$0x3]
      %v1418 = vld [vmem:[#allocation2 + $0xb8] sm:$0x3]
      %v1419 = vld [vmem:[#allocation2 + $0xc0] sm:$0xfc]
      %v1420 = vld [vmem:[#allocation2 + $0xc8] sm:$0xfc]
      %v1421 = vld [vmem:[#allocation2 + $0xe0] sm:$0x3]
      %v1422 = vld [vmem:[#allocation2 + $0xe8] sm:$0x3]
      %v1423 = vld [vmem:[#allocation2 + $0xf0] sm:$0xfc]
      %v1424 = vld [vmem:[#allocation2 + $0xf8] sm:$0xfc]
      %v1425 = vld [vmem:[#allocation2 + $0x110] sm:$0x3]
      %v1426 = vld [vmem:[#allocation2 + $0x118] sm:$0x3]
      %v1427 = vld [vmem:[#allocation2 + $0x120] sm:$0xfc]
      %v1428 = vld [vmem:[#allocation2 + $0x128] sm:$0xfc]
      %v1429 = vld [vmem:[#allocation2 + $0x140] sm:$0x3]
      %v1430 = vld [vmem:[#allocation2 + $0x148] sm:$0x3]
      %v1431 = vld [vmem:[#allocation2 + $0x150] sm:$0xfc]
      %v1432 = vld [vmem:[#allocation2 + $0x158] sm:$0xfc]
      %v1433 = vld [vmem:[#allocation2 + $0x170] sm:$0x3]
      %v1434 = vld [vmem:[#allocation2 + $0x178] sm:$0x3]
      %v1435 = vld [vmem:[#allocation2 + $0x180] sm:$0xfc]
      %v1436 = vld [vmem:[#allocation2 + $0x188] sm:$0xfc]
      %v1437 = vld [vmem:[#allocation2 + $0x1a0] sm:$0x3]
      %v1438 = vld [vmem:[#allocation2 + $0x1a8] sm:$0x3]
      %v1439 = vld [vmem:[#allocation2 + $0x1b0] sm:$0xfc]
      %v1440 = vld [vmem:[#allocation2 + $0x1b8] sm:$0xfc]
      %v1441 = vld [vmem:[#allocation2 + $0x1d0] sm:$0x3]
      %v1442 = vld [vmem:[#allocation2 + $0x1d8] sm:$0x3]
      %v1443 = vld [vmem:[#allocation2 + $0x1e0] sm:$0xfc]
      %v1444 = vld [vmem:[#allocation2 + $0x1e8] sm:$0xfc]
      %v1445 = vld [vmem:[#allocation2 + $0x200] sm:$0x3]
      %v1446 = vld [vmem:[#allocation2 + $0x208] sm:$0x3]
      %v1447 = vld [vmem:[#allocation2 + $0x210] sm:$0xfc]
      %v1448 = vld [vmem:[#allocation2 + $0x218] sm:$0xfc]
      %v1449 = vld [vmem:[#allocation2 + $0x230] sm:$0x3]
      %v1450 = vld [vmem:[#allocation2 + $0x238] sm:$0x3]
      %v1451 = vld [vmem:[#allocation2 + $0x240] sm:$0xfc]
      %v1452 = vld [vmem:[#allocation2 + $0x248] sm:$0xfc]
      %v1453 = vld [vmem:[#allocation2 + $0x260] sm:$0x3]
      %v1454 = vld [vmem:[#allocation2 + $0x268] sm:$0x3]
      %v1455 = vld [vmem:[#allocation2 + $0x270] sm:$0xfc]
      %v1456 = vld [vmem:[#allocation2 + $0x278] sm:$0xfc]
      %v1457 = vld [vmem:[#allocation2 + $0x290] sm:$0x3]
      %v1458 = vld [vmem:[#allocation2 + $0x298] sm:$0x3]
      %v1459 = vld [vmem:[#allocation2 + $0x2a0] sm:$0xfc]
      %v1460 = vld [vmem:[#allocation2 + $0x2a8] sm:$0xfc]
      %v1461 = vld [vmem:[#allocation2 + $0x2c0] sm:$0x3]
      %v1462 = vld [vmem:[#allocation2 + $0x2c8] sm:$0x3]
      %v1463 = vld [vmem:[#allocation2 + $0x2d0] sm:$0xfc]
      %v1464 = vld [vmem:[#allocation2 + $0x2d8] sm:$0xfc]
      %v1465 = vld [vmem:[#allocation2 + $0x2f0] sm:$0x3]
      %v1466 = vld [vmem:[#allocation2 + $0x2f8] sm:$0x3]
      %v1467 = vld [vmem:[#allocation2 + $0x300] sm:$0xfc]
      %v1468 = vld [vmem:[#allocation2 + $0x308] sm:$0xfc]
      %v1469 = vld [vmem:[#allocation2 + $0x320] sm:$0x3]
      %v1470 = vld [vmem:[#allocation2 + $0x328] sm:$0x3]
      %v1471 = vld [vmem:[#allocation2 + $0x330] sm:$0xfc]
      %v1472 = vld [vmem:[#allocation2 + $0x338] sm:$0xfc]
      %v1473 = vld [vmem:[#allocation2 + $0x350] sm:$0x3]
      %v1474 = vld [vmem:[#allocation2 + $0x358] sm:$0x3]
      %v1475 = vlaneseq
      %v1476 = vshrl.u32 %v1475, 7
      %v1477 = vsub.s32 0, %v1476
      %v1478 = vrot.slane %v1219, %v1477
      %v1479 = vlaneseq
      %v1480 = vshrl.u32 %v1479, 7
      %v1481 = vsub.s32 0, %v1480
      %v1482 = vrot.slane %v1220, %v1481
      %v1483 = vmul.f32 %v1223, %v1478
      %v1484 = vmul.f32 %v1224, %v1482
      %v1485 = vmul.f32 %v1225, %v1478
      %v1486 = vmul.f32 %v1226, %v1482
      %v1487 = vmul.f32 %v1227, %v1478
      %v1488 = vmul.f32 %v1228, %v1482
      %v1489 = vmul.f32 %v1229, %v1478
      %v1490 = vmul.f32 %v1230, %v1482
      %v1491 = vmul.f32 %v1231, %v1478
      %v1492 = vmul.f32 %v1232, %v1482
      %v1493 = vmul.f32 %v1233, %v1478
      %v1494 = vmul.f32 %v1234, %v1482
      %v1495 = vmul.f32 %v1235, %v1478
      %v1496 = vmul.f32 %v1236, %v1482
      %v1497 = vmul.f32 %v1237, %v1478
      %v1498 = vmul.f32 %v1238, %v1482
      %v1499 = vmul.f32 %v1239, %v1478
      %v1500 = vmul.f32 %v1240, %v1482
      %v1501 = vmul.f32 %v1241, %v1478
      %v1502 = vmul.f32 %v1242, %v1482
      %v1503 = vmul.f32 %v1243, %v1478
      %v1504 = vmul.f32 %v1244, %v1482
      %v1505 = vmul.f32 %v1245, %v1478
      %v1506 = vmul.f32 %v1246, %v1482
      %v1507 = vmul.f32 %v1247, %v1478
      %v1508 = vmul.f32 %v1248, %v1482
      %v1509 = vmul.f32 %v1249, %v1478
      %v1510 = vmul.f32 %v1250, %v1482
      %v1511 = vmul.f32 %v1251, %v1478
      %v1512 = vmul.f32 %v1252, %v1482
      %v1513 = vmul.f32 %v1253, %v1478
      %v1514 = vmul.f32 %v1254, %v1482
      %v1515 = vmul.f32 %v1255, %v1478
      %v1516 = vmul.f32 %v1256, %v1482
      %v1517 = vmul.f32 %v1257, %v1478
      %v1518 = vmul.f32 %v1258, %v1482
      %v1519 = vmul.f32 %v1259, %v1478
      %v1520 = vmul.f32 %v1260, %v1482
      %v1521 = vmul.f32 %v1261, %v1478
      %v1522 = vmul.f32 %v1262, %v1482
      %v1523 = vmul.f32 %v1263, %v1478
      %v1524 = vmul.f32 %v1264, %v1482
      %v1525 = vmul.f32 %v1265, %v1478
      %v1526 = vmul.f32 %v1266, %v1482
      %v1527 = vmul.f32 %v1267, %v1478
      %v1528 = vmul.f32 %v1268, %v1482
      %v1529 = vmul.f32 %v1269, %v1478
      %v1530 = vmul.f32 %v1270, %v1482
      %v1531 = vmul.f32 %v1271, %v1478
      %v1532 = vmul.f32 %v1272, %v1482
      %v1533 = vmul.f32 %v1273, %v1478
      %v1534 = vmul.f32 %v1274, %v1482
      %v1535 = vmul.f32 %v1275, %v1478
      %v1536 = vmul.f32 %v1276, %v1482
      %v1537 = vmul.f32 %v1277, %v1478
      %v1538 = vmul.f32 %v1278, %v1482
      %v1539 = vmul.f32 %v1279, %v1478
      %v1540 = vmul.f32 %v1280, %v1482
      %v1541 = vmul.f32 %v1281, %v1478
      %v1542 = vmul.f32 %v1282, %v1482
      %v1543 = vmul.f32 %v1283, %v1478
      %v1544 = vmul.f32 %v1284, %v1482
      %v1545 = vmul.f32 %v1285, %v1478
      %v1546 = vmul.f32 %v1286, %v1482
      %v1547 = vadd.f32 %v1483, 0.0
      %v1548 = vadd.f32 %v1484, 0.0
      %v1549 = vadd.f32 %v1485, 0.0
      %v1550 = vadd.f32 %v1486, 0.0
      %v1551 = vadd.f32 %v1487, 0.0
      %v1552 = vadd.f32 %v1488, 0.0
      %v1553 = vadd.f32 %v1489, 0.0
      %v1554 = vadd.f32 %v1490, 0.0
      %v1555 = vadd.f32 %v1491, 0.0
      %v1556 = vadd.f32 %v1492, 0.0
      %v1557 = vadd.f32 %v1493, 0.0
      %v1558 = vadd.f32 %v1494, 0.0
      %v1559 = vadd.f32 %v1495, 0.0
      %v1560 = vadd.f32 %v1496, 0.0
      %v1561 = vadd.f32 %v1497, 0.0
      %v1562 = vadd.f32 %v1498, 0.0
      %v1563 = vadd.f32 %v1499, 0.0
      %v1564 = vadd.f32 %v1500, 0.0
      %v1565 = vadd.f32 %v1501, 0.0
      %v1566 = vadd.f32 %v1502, 0.0
      %v1567 = vadd.f32 %v1503, 0.0
      %v1568 = vadd.f32 %v1504, 0.0
      %v1569 = vadd.f32 %v1505, 0.0
      %v1570 = vadd.f32 %v1506, 0.0
      %v1571 = vadd.f32 %v1507, 0.0
      %v1572 = vadd.f32 %v1508, 0.0
      %v1573 = vadd.f32 %v1509, 0.0
      %v1574 = vadd.f32 %v1510, 0.0
      %v1575 = vadd.f32 %v1511, 0.0
      %v1576 = vadd.f32 %v1512, 0.0
      %v1577 = vadd.f32 %v1513, 0.0
      %v1578 = vadd.f32 %v1514, 0.0
      %v1579 = vadd.f32 %v1515, 0.0
      %v1580 = vadd.f32 %v1516, 0.0
      %v1581 = vadd.f32 %v1517, 0.0
      %v1582 = vadd.f32 %v1518, 0.0
      %v1583 = vadd.f32 %v1519, 0.0
      %v1584 = vadd.f32 %v1520, 0.0
      %v1585 = vadd.f32 %v1521, 0.0
      %v1586 = vadd.f32 %v1522, 0.0
      %v1587 = vadd.f32 %v1523, 0.0
      %v1588 = vadd.f32 %v1524, 0.0
      %v1589 = vadd.f32 %v1525, 0.0
      %v1590 = vadd.f32 %v1526, 0.0
      %v1591 = vadd.f32 %v1527, 0.0
      %v1592 = vadd.f32 %v1528, 0.0
      %v1593 = vadd.f32 %v1529, 0.0
      %v1594 = vadd.f32 %v1530, 0.0
      %v1595 = vadd.f32 %v1531, 0.0
      %v1596 = vadd.f32 %v1532, 0.0
      %v1597 = vadd.f32 %v1533, 0.0
      %v1598 = vadd.f32 %v1534, 0.0
      %v1599 = vadd.f32 %v1535, 0.0
      %v1600 = vadd.f32 %v1536, 0.0
      %v1601 = vadd.f32 %v1537, 0.0
      %v1602 = vadd.f32 %v1538, 0.0
      %v1603 = vadd.f32 %v1539, 0.0
      %v1604 = vadd.f32 %v1540, 0.0
      %v1605 = vadd.f32 %v1541, 0.0
      %v1606 = vadd.f32 %v1542, 0.0
      %v1607 = vadd.f32 %v1543, 0.0
      %v1608 = vadd.f32 %v1544, 0.0
      %v1609 = vadd.f32 %v1545, 0.0
      %v1610 = vadd.f32 %v1546, 0.0
      %v1611 = vlaneseq
      %v1612 = vshrl.u32 %v1611, 7
      %v1613 = vsub.s32 1, %v1612
      %v1614 = vrot.slane %v1219, %v1613
      %v1615 = vlaneseq
      %v1616 = vshrl.u32 %v1615, 7
      %v1617 = vsub.s32 1, %v1616
      %v1618 = vrot.slane %v1220, %v1617
      %v1619 = vmul.f32 %v1295, %v1614
      %v1620 = vmul.f32 %v1296, %v1618
      %v1621 = vmul.f32 %v1297, %v1614
      %v1622 = vmul.f32 %v1298, %v1618
      %v1623 = vmul.f32 %v1299, %v1614
      %v1624 = vmul.f32 %v1300, %v1618
      %v1625 = vmul.f32 %v1301, %v1614
      %v1626 = vmul.f32 %v1302, %v1618
      %v1627 = vmul.f32 %v1303, %v1614
      %v1628 = vmul.f32 %v1304, %v1618
      %v1629 = vmul.f32 %v1305, %v1614
      %v1630 = vmul.f32 %v1306, %v1618
      %v1631 = vmul.f32 %v1307, %v1614
      %v1632 = vmul.f32 %v1308, %v1618
      %v1633 = vmul.f32 %v1309, %v1614
      %v1634 = vmul.f32 %v1310, %v1618
      %v1635 = vmul.f32 %v1311, %v1614
      %v1636 = vmul.f32 %v1312, %v1618
      %v1637 = vmul.f32 %v1313, %v1614
      %v1638 = vmul.f32 %v1314, %v1618
      %v1639 = vmul.f32 %v1315, %v1614
      %v1640 = vmul.f32 %v1316, %v1618
      %v1641 = vmul.f32 %v1317, %v1614
      %v1642 = vmul.f32 %v1318, %v1618
      %v1643 = vmul.f32 %v1319, %v1614
      %v1644 = vmul.f32 %v1320, %v1618
      %v1645 = vmul.f32 %v1321, %v1614
      %v1646 = vmul.f32 %v1322, %v1618
      %v1647 = vmul.f32 %v1323, %v1614
      %v1648 = vmul.f32 %v1324, %v1618
      %v1649 = vmul.f32 %v1325, %v1614
      %v1650 = vmul.f32 %v1326, %v1618
      %v1651 = vmul.f32 %v1327, %v1614
      %v1652 = vmul.f32 %v1328, %v1618
      %v1653 = vmul.f32 %v1329, %v1614
      %v1654 = vmul.f32 %v1330, %v1618
      %v1655 = vmul.f32 %v1331, %v1614
      %v1656 = vmul.f32 %v1332, %v1618
      %v1657 = vmul.f32 %v1333, %v1614
      %v1658 = vmul.f32 %v1334, %v1618
      %v1659 = vmul.f32 %v1335, %v1614
      %v1660 = vmul.f32 %v1336, %v1618
      %v1661 = vmul.f32 %v1337, %v1614
      %v1662 = vmul.f32 %v1338, %v1618
      %v1663 = vmul.f32 %v1339, %v1614
      %v1664 = vmul.f32 %v1340, %v1618
      %v1665 = vmul.f32 %v1341, %v1614
      %v1666 = vmul.f32 %v1342, %v1618
      %v1667 = vmul.f32 %v1343, %v1614
      %v1668 = vmul.f32 %v1344, %v1618
      %v1669 = vmul.f32 %v1345, %v1614
      %v1670 = vmul.f32 %v1346, %v1618
      %v1671 = vmul.f32 %v1347, %v1614
      %v1672 = vmul.f32 %v1348, %v1618
      %v1673 = vmul.f32 %v1349, %v1614
      %v1674 = vmul.f32 %v1350, %v1618
      %v1675 = vmul.f32 %v1351, %v1614
      %v1676 = vmul.f32 %v1352, %v1618
      %v1677 = vmul.f32 %v1353, %v1614
      %v1678 = vmul.f32 %v1354, %v1618
      %v1679 = vmul.f32 %v1355, %v1614
      %v1680 = vmul.f32 %v1356, %v1618
      %v1681 = vmul.f32 %v1357, %v1614
      %v1682 = vmul.f32 %v1358, %v1618
      %v1683 = vmul.f32 %v1359, %v1614
      %v1684 = vmul.f32 %v1360, %v1618
      %v1685 = vmul.f32 %v1361, %v1614
      %v1686 = vmul.f32 %v1362, %v1618
      %v1687 = vmul.f32 %v1363, %v1614
      %v1688 = vmul.f32 %v1364, %v1618
      %v1689 = vmul.f32 %v1365, %v1614
      %v1690 = vmul.f32 %v1366, %v1618
      %v1691 = vmul.f32 %v1367, %v1614
      %v1692 = vmul.f32 %v1368, %v1618
      %v1693 = vmul.f32 %v1369, %v1614
      %v1694 = vmul.f32 %v1370, %v1618
      %v1695 = vmul.f32 %v1371, %v1614
      %v1696 = vmul.f32 %v1372, %v1618
      %v1697 = vmul.f32 %v1373, %v1614
      %v1698 = vmul.f32 %v1374, %v1618
      %v1699 = vmul.f32 %v1375, %v1614
      %v1700 = vmul.f32 %v1376, %v1618
      %v1701 = vmul.f32 %v1377, %v1614
      %v1702 = vmul.f32 %v1378, %v1618
      %v1703 = vmul.f32 %v1379, %v1614
      %v1704 = vmul.f32 %v1380, %v1618
      %v1705 = vmul.f32 %v1381, %v1614
      %v1706 = vmul.f32 %v1382, %v1618
      %v1707 = vmul.f32 %v1383, %v1614
      %v1708 = vmul.f32 %v1384, %v1618
      %v1709 = vmul.f32 %v1385, %v1614
      %v1710 = vmul.f32 %v1386, %v1618
      %v1711 = vmul.f32 %v1387, %v1614
      %v1712 = vmul.f32 %v1388, %v1618
      %v1713 = vmul.f32 %v1389, %v1614
      %v1714 = vmul.f32 %v1390, %v1618
      %vm1811 = vcmask 1046528
      %v1812 = vrot.slane %v1619, 1
      %v1813 = vrot.slane %v1621, 1
      %v1814 = vsel %vm1811, %v1812, %v1813
      %v1815 = vrot.slane %v1620, 1
      %v1816 = vrot.slane %v1622, 1
      %v1817 = vsel %vm1811, %v1815, %v1816
      %v1818 = vrot.slane %v1623, 1
      %v1819 = vsel %vm1811, %v1813, %v1818
      %v1820 = vrot.slane %v1624, 1
      %v1821 = vsel %vm1811, %v1816, %v1820
      %v1822 = vrot.slane %v1625, 1
      %v1823 = vrot.slane %v1627, 1
      %v1824 = vsel %vm1811, %v1822, %v1823
      %v1825 = vrot.slane %v1626, 1
      %v1826 = vrot.slane %v1628, 1
      %v1827 = vsel %vm1811, %v1825, %v1826
      %v1828 = vrot.slane %v1629, 1
      %v1829 = vsel %vm1811, %v1823, %v1828
      %v1830 = vrot.slane %v1630, 1
      %v1831 = vsel %vm1811, %v1826, %v1830
      %v1832 = vrot.slane %v1631, 1
      %v1833 = vrot.slane %v1633, 1
      %v1834 = vsel %vm1811, %v1832, %v1833
      %v1835 = vrot.slane %v1632, 1
      %v1836 = vrot.slane %v1634, 1
      %v1837 = vsel %vm1811, %v1835, %v1836
      %v1838 = vrot.slane %v1635, 1
      %v1839 = vsel %vm1811, %v1833, %v1838
      %v1840 = vrot.slane %v1636, 1
      %v1841 = vsel %vm1811, %v1836, %v1840
      %v1842 = vrot.slane %v1637, 1
      %v1843 = vrot.slane %v1639, 1
      %v1844 = vsel %vm1811, %v1842, %v1843
      %v1845 = vrot.slane %v1638, 1
      %v1846 = vrot.slane %v1640, 1
      %v1847 = vsel %vm1811, %v1845, %v1846
      %v1848 = vrot.slane %v1641, 1
      %v1849 = vsel %vm1811, %v1843, %v1848
      %v1850 = vrot.slane %v1642, 1
      %v1851 = vsel %vm1811, %v1846, %v1850
      %v1852 = vrot.slane %v1643, 1
      %v1853 = vrot.slane %v1645, 1
      %v1854 = vsel %vm1811, %v1852, %v1853
      %v1855 = vrot.slane %v1644, 1
      %v1856 = vrot.slane %v1646, 1
      %v1857 = vsel %vm1811, %v1855, %v1856
      %v1858 = vrot.slane %v1647, 1
      %v1859 = vsel %vm1811, %v1853, %v1858
      %v1860 = vrot.slane %v1648, 1
      %v1861 = vsel %vm1811, %v1856, %v1860
      %v1862 = vrot.slane %v1649, 1
      %v1863 = vrot.slane %v1651, 1
      %v1864 = vsel %vm1811, %v1862, %v1863
      %v1865 = vrot.slane %v1650, 1
      %v1866 = vrot.slane %v1652, 1
      %v1867 = vsel %vm1811, %v1865, %v1866
      %v1868 = vrot.slane %v1653, 1
      %v1869 = vsel %vm1811, %v1863, %v1868
      %v1870 = vrot.slane %v1654, 1
      %v1871 = vsel %vm1811, %v1866, %v1870
      %v1872 = vrot.slane %v1655, 1
      %v1873 = vrot.slane %v1657, 1
      %v1874 = vsel %vm1811, %v1872, %v1873
      %v1875 = vrot.slane %v1656, 1
      %v1876 = vrot.slane %v1658, 1
      %v1877 = vsel %vm1811, %v1875, %v1876
      %v1878 = vrot.slane %v1659, 1
      %v1879 = vsel %vm1811, %v1873, %v1878
      %v1880 = vrot.slane %v1660, 1
      %v1881 = vsel %vm1811, %v1876, %v1880
      %v1882 = vrot.slane %v1661, 1
      %v1883 = vrot.slane %v1663, 1
      %v1884 = vsel %vm1811, %v1882, %v1883
      %v1885 = vrot.slane %v1662, 1
      %v1886 = vrot.slane %v1664, 1
      %v1887 = vsel %vm1811, %v1885, %v1886
      %v1888 = vrot.slane %v1665, 1
      %v1889 = vsel %vm1811, %v1883, %v1888
      %v1890 = vrot.slane %v1666, 1
      %v1891 = vsel %vm1811, %v1886, %v1890
      %v1892 = vrot.slane %v1667, 1
      %v1893 = vrot.slane %v1669, 1
      %v1894 = vsel %vm1811, %v1892, %v1893
      %v1895 = vrot.slane %v1668, 1
      %v1896 = vrot.slane %v1670, 1
      %v1897 = vsel %vm1811, %v1895, %v1896
      %v1898 = vrot.slane %v1671, 1
      %v1899 = vsel %vm1811, %v1893, %v1898
      %v1900 = vrot.slane %v1672, 1
      %v1901 = vsel %vm1811, %v1896, %v1900
      %v1902 = vrot.slane %v1673, 1
      %v1903 = vrot.slane %v1675, 1
      %v1904 = vsel %vm1811, %v1902, %v1903
      %v1905 = vrot.slane %v1674, 1
      %v1906 = vrot.slane %v1676, 1
      %v1907 = vsel %vm1811, %v1905, %v1906
      %v1908 = vrot.slane %v1677, 1
      %v1909 = vsel %vm1811, %v1903, %v1908
      %v1910 = vrot.slane %v1678, 1
      %v1911 = vsel %vm1811, %v1906, %v1910
      %v1912 = vrot.slane %v1679, 1
      %v1913 = vrot.slane %v1681, 1
      %v1914 = vsel %vm1811, %v1912, %v1913
      %v1915 = vrot.slane %v1680, 1
      %v1916 = vrot.slane %v1682, 1
      %v1917 = vsel %vm1811, %v1915, %v1916
      %v1918 = vrot.slane %v1683, 1
      %v1919 = vsel %vm1811, %v1913, %v1918
      %v1920 = vrot.slane %v1684, 1
      %v1921 = vsel %vm1811, %v1916, %v1920
      %v1922 = vrot.slane %v1685, 1
      %v1923 = vrot.slane %v1687, 1
      %v1924 = vsel %vm1811, %v1922, %v1923
      %v1925 = vrot.slane %v1686, 1
      %v1926 = vrot.slane %v1688, 1
      %v1927 = vsel %vm1811, %v1925, %v1926
      %v1928 = vrot.slane %v1689, 1
      %v1929 = vsel %vm1811, %v1923, %v1928
      %v1930 = vrot.slane %v1690, 1
      %v1931 = vsel %vm1811, %v1926, %v1930
      %v1932 = vrot.slane %v1691, 1
      %v1933 = vrot.slane %v1693, 1
      %v1934 = vsel %vm1811, %v1932, %v1933
      %v1935 = vrot.slane %v1692, 1
      %v1936 = vrot.slane %v1694, 1
      %v1937 = vsel %vm1811, %v1935, %v1936
      %v1938 = vrot.slane %v1695, 1
      %v1939 = vsel %vm1811, %v1933, %v1938
      %v1940 = vrot.slane %v1696, 1
      %v1941 = vsel %vm1811, %v1936, %v1940
      %v1942 = vrot.slane %v1697, 1
      %v1943 = vrot.slane %v1699, 1
      %v1944 = vsel %vm1811, %v1942, %v1943
      %v1945 = vrot.slane %v1698, 1
      %v1946 = vrot.slane %v1700, 1
      %v1947 = vsel %vm1811, %v1945, %v1946
      %v1948 = vrot.slane %v1701, 1
      %v1949 = vsel %vm1811, %v1943, %v1948
      %v1950 = vrot.slane %v1702, 1
      %v1951 = vsel %vm1811, %v1946, %v1950
      %v1952 = vrot.slane %v1703, 1
      %v1953 = vrot.slane %v1705, 1
      %v1954 = vsel %vm1811, %v1952, %v1953
      %v1955 = vrot.slane %v1704, 1
      %v1956 = vrot.slane %v1706, 1
      %v1957 = vsel %vm1811, %v1955, %v1956
      %v1958 = vrot.slane %v1707, 1
      %v1959 = vsel %vm1811, %v1953, %v1958
      %v1960 = vrot.slane %v1708, 1
      %v1961 = vsel %vm1811, %v1956, %v1960
      %v1962 = vrot.slane %v1709, 1
      %v1963 = vrot.slane %v1711, 1
      %v1964 = vsel %vm1811, %v1962, %v1963
      %v1965 = vrot.slane %v1710, 1
      %v1966 = vrot.slane %v1712, 1
      %v1967 = vsel %vm1811, %v1965, %v1966
      %v1968 = vrot.slane %v1713, 1
      %v1969 = vsel %vm1811, %v1963, %v1968
      %v1970 = vrot.slane %v1714, 1
      %v1971 = vsel %vm1811, %v1966, %v1970
      %v2036 = vadd.f32 %v1547, %v1814
      %v2037 = vadd.f32 %v1548, %v1817
      %v2038 = vadd.f32 %v1549, %v1819
      %v2039 = vadd.f32 %v1550, %v1821
      %v2040 = vadd.f32 %v1551, %v1824
      %v2041 = vadd.f32 %v1552, %v1827
      %v2042 = vadd.f32 %v1553, %v1829
      %v2043 = vadd.f32 %v1554, %v1831
      %v2044 = vadd.f32 %v1555, %v1834
      %v2045 = vadd.f32 %v1556, %v1837
      %v2046 = vadd.f32 %v1557, %v1839
      %v2047 = vadd.f32 %v1558, %v1841
      %v2048 = vadd.f32 %v1559, %v1844
      %v2049 = vadd.f32 %v1560, %v1847
      %v2050 = vadd.f32 %v1561, %v1849
      %v2051 = vadd.f32 %v1562, %v1851
      %v2052 = vadd.f32 %v1563, %v1854
      %v2053 = vadd.f32 %v1564, %v1857
      %v2054 = vadd.f32 %v1565, %v1859
      %v2055 = vadd.f32 %v1566, %v1861
      %v2056 = vadd.f32 %v1567, %v1864
      %v2057 = vadd.f32 %v1568, %v1867
      %v2058 = vadd.f32 %v1569, %v1869
      %v2059 = vadd.f32 %v1570, %v1871
      %v2060 = vadd.f32 %v1571, %v1874
      %v2061 = vadd.f32 %v1572, %v1877
      %v2062 = vadd.f32 %v1573, %v1879
      %v2063 = vadd.f32 %v1574, %v1881
      %v2064 = vadd.f32 %v1575, %v1884
      %v2065 = vadd.f32 %v1576, %v1887
      %v2066 = vadd.f32 %v1577, %v1889
      %v2067 = vadd.f32 %v1578, %v1891
      %v2068 = vadd.f32 %v1579, %v1894
      %v2069 = vadd.f32 %v1580, %v1897
      %v2070 = vadd.f32 %v1581, %v1899
      %v2071 = vadd.f32 %v1582, %v1901
      %v2072 = vadd.f32 %v1583, %v1904
      %v2073 = vadd.f32 %v1584, %v1907
      %v2074 = vadd.f32 %v1585, %v1909
      %v2075 = vadd.f32 %v1586, %v1911
      %v2076 = vadd.f32 %v1587, %v1914
      %v2077 = vadd.f32 %v1588, %v1917
      %v2078 = vadd.f32 %v1589, %v1919
      %v2079 = vadd.f32 %v1590, %v1921
      %v2080 = vadd.f32 %v1591, %v1924
      %v2081 = vadd.f32 %v1592, %v1927
      %v2082 = vadd.f32 %v1593, %v1929
      %v2083 = vadd.f32 %v1594, %v1931
      %v2084 = vadd.f32 %v1595, %v1934
      %v2085 = vadd.f32 %v1596, %v1937
      %v2086 = vadd.f32 %v1597, %v1939
      %v2087 = vadd.f32 %v1598, %v1941
      %v2088 = vadd.f32 %v1599, %v1944
      %v2089 = vadd.f32 %v1600, %v1947
      %v2090 = vadd.f32 %v1601, %v1949
      %v2091 = vadd.f32 %v1602, %v1951
      %v2092 = vadd.f32 %v1603, %v1954
      %v2093 = vadd.f32 %v1604, %v1957
      %v2094 = vadd.f32 %v1605, %v1959
      %v2095 = vadd.f32 %v1606, %v1961
      %v2096 = vadd.f32 %v1607, %v1964
      %v2097 = vadd.f32 %v1608, %v1967
      %v2098 = vadd.f32 %v1609, %v1969
      %v2099 = vadd.f32 %v1610, %v1971
      %v2100 = vlaneseq
      %v2101 = vshrl.u32 %v2100, 7
      %v2102 = vsub.s32 2, %v2101
      %v2103 = vrot.slane %v1219, %v2102
      %v2104 = vlaneseq
      %v2105 = vshrl.u32 %v2104, 7
      %v2106 = vsub.s32 2, %v2105
      %v2107 = vrot.slane %v1220, %v2106
      %v2108 = vmul.f32 %v1403, %v2103
      %v2109 = vmul.f32 %v1404, %v2107
      %v2110 = vmul.f32 %v1297, %v2103
      %v2111 = vmul.f32 %v1298, %v2107
      %v2112 = vmul.f32 %v1405, %v2103
      %v2113 = vmul.f32 %v1406, %v2107
      %v2114 = vmul.f32 %v1407, %v2103
      %v2115 = vmul.f32 %v1408, %v2107
      %v2116 = vmul.f32 %v1303, %v2103
      %v2117 = vmul.f32 %v1304, %v2107
      %v2118 = vmul.f32 %v1409, %v2103
      %v2119 = vmul.f32 %v1410, %v2107
      %v2120 = vmul.f32 %v1411, %v2103
      %v2121 = vmul.f32 %v1412, %v2107
      %v2122 = vmul.f32 %v1309, %v2103
      %v2123 = vmul.f32 %v1310, %v2107
      %v2124 = vmul.f32 %v1413, %v2103
      %v2125 = vmul.f32 %v1414, %v2107
      %v2126 = vmul.f32 %v1415, %v2103
      %v2127 = vmul.f32 %v1416, %v2107
      %v2128 = vmul.f32 %v1315, %v2103
      %v2129 = vmul.f32 %v1316, %v2107
      %v2130 = vmul.f32 %v1417, %v2103
      %v2131 = vmul.f32 %v1418, %v2107
      %v2132 = vmul.f32 %v1419, %v2103
      %v2133 = vmul.f32 %v1420, %v2107
      %v2134 = vmul.f32 %v1321, %v2103
      %v2135 = vmul.f32 %v1322, %v2107
      %v2136 = vmul.f32 %v1421, %v2103
      %v2137 = vmul.f32 %v1422, %v2107
      %v2138 = vmul.f32 %v1423, %v2103
      %v2139 = vmul.f32 %v1424, %v2107
      %v2140 = vmul.f32 %v1327, %v2103
      %v2141 = vmul.f32 %v1328, %v2107
      %v2142 = vmul.f32 %v1425, %v2103
      %v2143 = vmul.f32 %v1426, %v2107
      %v2144 = vmul.f32 %v1427, %v2103
      %v2145 = vmul.f32 %v1428, %v2107
      %v2146 = vmul.f32 %v1333, %v2103
      %v2147 = vmul.f32 %v1334, %v2107
      %v2148 = vmul.f32 %v1429, %v2103
      %v2149 = vmul.f32 %v1430, %v2107
      %v2150 = vmul.f32 %v1431, %v2103
      %v2151 = vmul.f32 %v1432, %v2107
      %v2152 = vmul.f32 %v1339, %v2103
      %v2153 = vmul.f32 %v1340, %v2107
      %v2154 = vmul.f32 %v1433, %v2103
      %v2155 = vmul.f32 %v1434, %v2107
      %v2156 = vmul.f32 %v1435, %v2103
      %v2157 = vmul.f32 %v1436, %v2107
      %v2158 = vmul.f32 %v1345, %v2103
      %v2159 = vmul.f32 %v1346, %v2107
      %v2160 = vmul.f32 %v1437, %v2103
      %v2161 = vmul.f32 %v1438, %v2107
      %v2162 = vmul.f32 %v1439, %v2103
      %v2163 = vmul.f32 %v1440, %v2107
      %v2164 = vmul.f32 %v1351, %v2103
      %v2165 = vmul.f32 %v1352, %v2107
      %v2166 = vmul.f32 %v1441, %v2103
      %v2167 = vmul.f32 %v1442, %v2107
      %v2168 = vmul.f32 %v1443, %v2103
      %v2169 = vmul.f32 %v1444, %v2107
      %v2170 = vmul.f32 %v1357, %v2103
      %v2171 = vmul.f32 %v1358, %v2107
      %v2172 = vmul.f32 %v1445, %v2103
      %v2173 = vmul.f32 %v1446, %v2107
      %v2174 = vmul.f32 %v1447, %v2103
      %v2175 = vmul.f32 %v1448, %v2107
      %v2176 = vmul.f32 %v1363, %v2103
      %v2177 = vmul.f32 %v1364, %v2107
      %v2178 = vmul.f32 %v1449, %v2103
      %v2179 = vmul.f32 %v1450, %v2107
      %v2180 = vmul.f32 %v1451, %v2103
      %v2181 = vmul.f32 %v1452, %v2107
      %v2182 = vmul.f32 %v1369, %v2103
      %v2183 = vmul.f32 %v1370, %v2107
      %v2184 = vmul.f32 %v1453, %v2103
      %v2185 = vmul.f32 %v1454, %v2107
      %v2186 = vmul.f32 %v1455, %v2103
      %v2187 = vmul.f32 %v1456, %v2107
      %v2188 = vmul.f32 %v1375, %v2103
      %v2189 = vmul.f32 %v1376, %v2107
      %v2190 = vmul.f32 %v1457, %v2103
      %v2191 = vmul.f32 %v1458, %v2107
      %v2192 = vmul.f32 %v1459, %v2103
      %v2193 = vmul.f32 %v1460, %v2107
      %v2194 = vmul.f32 %v1381, %v2103
      %v2195 = vmul.f32 %v1382, %v2107
      %v2196 = vmul.f32 %v1461, %v2103
      %v2197 = vmul.f32 %v1462, %v2107
      %v2198 = vmul.f32 %v1463, %v2103
      %v2199 = vmul.f32 %v1464, %v2107
      %v2200 = vmul.f32 %v1387, %v2103
      %v2201 = vmul.f32 %v1388, %v2107
      %v2202 = vmul.f32 %v1465, %v2103
      %v2203 = vmul.f32 %v1466, %v2107
      %vm2300 = vcmask 1045504
      %v2301 = vrot.slane %v2108, 2
      %v2302 = vrot.slane %v2110, 2
      %v2303 = vsel %vm2300, %v2301, %v2302
      %v2304 = vrot.slane %v2109, 2
      %v2305 = vrot.slane %v2111, 2
      %v2306 = vsel %vm2300, %v2304, %v2305
      %v2307 = vrot.slane %v2112, 2
      %v2308 = vsel %vm2300, %v2302, %v2307
      %v2309 = vrot.slane %v2113, 2
      %v2310 = vsel %vm2300, %v2305, %v2309
      %v2311 = vrot.slane %v2114, 2
      %v2312 = vrot.slane %v2116, 2
      %v2313 = vsel %vm2300, %v2311, %v2312
      %v2314 = vrot.slane %v2115, 2
      %v2315 = vrot.slane %v2117, 2
      %v2316 = vsel %vm2300, %v2314, %v2315
      %v2317 = vrot.slane %v2118, 2
      %v2318 = vsel %vm2300, %v2312, %v2317
      %v2319 = vrot.slane %v2119, 2
      %v2320 = vsel %vm2300, %v2315, %v2319
      %v2321 = vrot.slane %v2120, 2
      %v2322 = vrot.slane %v2122, 2
      %v2323 = vsel %vm2300, %v2321, %v2322
      %v2324 = vrot.slane %v2121, 2
      %v2325 = vrot.slane %v2123, 2
      %v2326 = vsel %vm2300, %v2324, %v2325
      %v2327 = vrot.slane %v2124, 2
      %v2328 = vsel %vm2300, %v2322, %v2327
      %v2329 = vrot.slane %v2125, 2
      %v2330 = vsel %vm2300, %v2325, %v2329
      %v2331 = vrot.slane %v2126, 2
      %v2332 = vrot.slane %v2128, 2
      %v2333 = vsel %vm2300, %v2331, %v2332
      %v2334 = vrot.slane %v2127, 2
      %v2335 = vrot.slane %v2129, 2
      %v2336 = vsel %vm2300, %v2334, %v2335
      %v2337 = vrot.slane %v2130, 2
      %v2338 = vsel %vm2300, %v2332, %v2337
      %v2339 = vrot.slane %v2131, 2
      %v2340 = vsel %vm2300, %v2335, %v2339
      %v2341 = vrot.slane %v2132, 2
      %v2342 = vrot.slane %v2134, 2
      %v2343 = vsel %vm2300, %v2341, %v2342
      %v2344 = vrot.slane %v2133, 2
      %v2345 = vrot.slane %v2135, 2
      %v2346 = vsel %vm2300, %v2344, %v2345
      %v2347 = vrot.slane %v2136, 2
      %v2348 = vsel %vm2300, %v2342, %v2347
      %v2349 = vrot.slane %v2137, 2
      %v2350 = vsel %vm2300, %v2345, %v2349
      %v2351 = vrot.slane %v2138, 2
      %v2352 = vrot.slane %v2140, 2
      %v2353 = vsel %vm2300, %v2351, %v2352
      %v2354 = vrot.slane %v2139, 2
      %v2355 = vrot.slane %v2141, 2
      %v2356 = vsel %vm2300, %v2354, %v2355
      %v2357 = vrot.slane %v2142, 2
      %v2358 = vsel %vm2300, %v2352, %v2357
      %v2359 = vrot.slane %v2143, 2
      %v2360 = vsel %vm2300, %v2355, %v2359
      %v2361 = vrot.slane %v2144, 2
      %v2362 = vrot.slane %v2146, 2
      %v2363 = vsel %vm2300, %v2361, %v2362
      %v2364 = vrot.slane %v2145, 2
      %v2365 = vrot.slane %v2147, 2
      %v2366 = vsel %vm2300, %v2364, %v2365
      %v2367 = vrot.slane %v2148, 2
      %v2368 = vsel %vm2300, %v2362, %v2367
      %v2369 = vrot.slane %v2149, 2
      %v2370 = vsel %vm2300, %v2365, %v2369
      %v2371 = vrot.slane %v2150, 2
      %v2372 = vrot.slane %v2152, 2
      %v2373 = vsel %vm2300, %v2371, %v2372
      %v2374 = vrot.slane %v2151, 2
      %v2375 = vrot.slane %v2153, 2
      %v2376 = vsel %vm2300, %v2374, %v2375
      %v2377 = vrot.slane %v2154, 2
      %v2378 = vsel %vm2300, %v2372, %v2377
      %v2379 = vrot.slane %v2155, 2
      %v2380 = vsel %vm2300, %v2375, %v2379
      %v2381 = vrot.slane %v2156, 2
      %v2382 = vrot.slane %v2158, 2
      %v2383 = vsel %vm2300, %v2381, %v2382
      %v2384 = vrot.slane %v2157, 2
      %v2385 = vrot.slane %v2159, 2
      %v2386 = vsel %vm2300, %v2384, %v2385
      %v2387 = vrot.slane %v2160, 2
      %v2388 = vsel %vm2300, %v2382, %v2387
      %v2389 = vrot.slane %v2161, 2
      %v2390 = vsel %vm2300, %v2385, %v2389
      %v2391 = vrot.slane %v2162, 2
      %v2392 = vrot.slane %v2164, 2
      %v2393 = vsel %vm2300, %v2391, %v2392
      %v2394 = vrot.slane %v2163, 2
      %v2395 = vrot.slane %v2165, 2
      %v2396 = vsel %vm2300, %v2394, %v2395
      %v2397 = vrot.slane %v2166, 2
      %v2398 = vsel %vm2300, %v2392, %v2397
      %v2399 = vrot.slane %v2167, 2
      %v2400 = vsel %vm2300, %v2395, %v2399
      %v2401 = vrot.slane %v2168, 2
      %v2402 = vrot.slane %v2170, 2
      %v2403 = vsel %vm2300, %v2401, %v2402
      %v2404 = vrot.slane %v2169, 2
      %v2405 = vrot.slane %v2171, 2
      %v2406 = vsel %vm2300, %v2404, %v2405
      %v2407 = vrot.slane %v2172, 2
      %v2408 = vsel %vm2300, %v2402, %v2407
      %v2409 = vrot.slane %v2173, 2
      %v2410 = vsel %vm2300, %v2405, %v2409
      %v2411 = vrot.slane %v2174, 2
      %v2412 = vrot.slane %v2176, 2
      %v2413 = vsel %vm2300, %v2411, %v2412
      %v2414 = vrot.slane %v2175, 2
      %v2415 = vrot.slane %v2177, 2
      %v2416 = vsel %vm2300, %v2414, %v2415
      %v2417 = vrot.slane %v2178, 2
      %v2418 = vsel %vm2300, %v2412, %v2417
      %v2419 = vrot.slane %v2179, 2
      %v2420 = vsel %vm2300, %v2415, %v2419
      %v2421 = vrot.slane %v2180, 2
      %v2422 = vrot.slane %v2182, 2
      %v2423 = vsel %vm2300, %v2421, %v2422
      %v2424 = vrot.slane %v2181, 2
      %v2425 = vrot.slane %v2183, 2
      %v2426 = vsel %vm2300, %v2424, %v2425
      %v2427 = vrot.slane %v2184, 2
      %v2428 = vsel %vm2300, %v2422, %v2427
      %v2429 = vrot.slane %v2185, 2
      %v2430 = vsel %vm2300, %v2425, %v2429
      %v2431 = vrot.slane %v2186, 2
      %v2432 = vrot.slane %v2188, 2
      %v2433 = vsel %vm2300, %v2431, %v2432
      %v2434 = vrot.slane %v2187, 2
      %v2435 = vrot.slane %v2189, 2
      %v2436 = vsel %vm2300, %v2434, %v2435
      %v2437 = vrot.slane %v2190, 2
      %v2438 = vsel %vm2300, %v2432, %v2437
      %v2439 = vrot.slane %v2191, 2
      %v2440 = vsel %vm2300, %v2435, %v2439
      %v2441 = vrot.slane %v2192, 2
      %v2442 = vrot.slane %v2194, 2
      %v2443 = vsel %vm2300, %v2441, %v2442
      %v2444 = vrot.slane %v2193, 2
      %v2445 = vrot.slane %v2195, 2
      %v2446 = vsel %vm2300, %v2444, %v2445
      %v2447 = vrot.slane %v2196, 2
      %v2448 = vsel %vm2300, %v2442, %v2447
      %v2449 = vrot.slane %v2197, 2
      %v2450 = vsel %vm2300, %v2445, %v2449
      %v2451 = vrot.slane %v2198, 2
      %v2452 = vrot.slane %v2200, 2
      %v2453 = vsel %vm2300, %v2451, %v2452
      %v2454 = vrot.slane %v2199, 2
      %v2455 = vrot.slane %v2201, 2
      %v2456 = vsel %vm2300, %v2454, %v2455
      %v2457 = vrot.slane %v2202, 2
      %v2458 = vsel %vm2300, %v2452, %v2457
      %v2459 = vrot.slane %v2203, 2
      %v2460 = vsel %vm2300, %v2455, %v2459
      %v2525 = vadd.f32 %v2036, %v2303
      %v2526 = vadd.f32 %v2037, %v2306
      %v2527 = vadd.f32 %v2038, %v2308
      %v2528 = vadd.f32 %v2039, %v2310
      %v2529 = vadd.f32 %v2040, %v2313
      %v2530 = vadd.f32 %v2041, %v2316
      %v2531 = vadd.f32 %v2042, %v2318
      %v2532 = vadd.f32 %v2043, %v2320
      %v2533 = vadd.f32 %v2044, %v2323
      %v2534 = vadd.f32 %v2045, %v2326
      %v2535 = vadd.f32 %v2046, %v2328
      %v2536 = vadd.f32 %v2047, %v2330
      %v2537 = vadd.f32 %v2048, %v2333
      %v2538 = vadd.f32 %v2049, %v2336
      %v2539 = vadd.f32 %v2050, %v2338
      %v2540 = vadd.f32 %v2051, %v2340
      %v2541 = vadd.f32 %v2052, %v2343
      %v2542 = vadd.f32 %v2053, %v2346
      %v2543 = vadd.f32 %v2054, %v2348
      %v2544 = vadd.f32 %v2055, %v2350
      %v2545 = vadd.f32 %v2056, %v2353
      %v2546 = vadd.f32 %v2057, %v2356
      %v2547 = vadd.f32 %v2058, %v2358
      %v2548 = vadd.f32 %v2059, %v2360
      %v2549 = vadd.f32 %v2060, %v2363
      %v2550 = vadd.f32 %v2061, %v2366
      %v2551 = vadd.f32 %v2062, %v2368
      %v2552 = vadd.f32 %v2063, %v2370
      %v2553 = vadd.f32 %v2064, %v2373
      %v2554 = vadd.f32 %v2065, %v2376
      %v2555 = vadd.f32 %v2066, %v2378
      %v2556 = vadd.f32 %v2067, %v2380
      %v2557 = vadd.f32 %v2068, %v2383
      %v2558 = vadd.f32 %v2069, %v2386
      %v2559 = vadd.f32 %v2070, %v2388
      %v2560 = vadd.f32 %v2071, %v2390
      %v2561 = vadd.f32 %v2072, %v2393
      %v2562 = vadd.f32 %v2073, %v2396
      %v2563 = vadd.f32 %v2074, %v2398
      %v2564 = vadd.f32 %v2075, %v2400
      %v2565 = vadd.f32 %v2076, %v2403
      %v2566 = vadd.f32 %v2077, %v2406
      %v2567 = vadd.f32 %v2078, %v2408
      %v2568 = vadd.f32 %v2079, %v2410
      %v2569 = vadd.f32 %v2080, %v2413
      %v2570 = vadd.f32 %v2081, %v2416
      %v2571 = vadd.f32 %v2082, %v2418
      %v2572 = vadd.f32 %v2083, %v2420
      %v2573 = vadd.f32 %v2084, %v2423
      %v2574 = vadd.f32 %v2085, %v2426
      %v2575 = vadd.f32 %v2086, %v2428
      %v2576 = vadd.f32 %v2087, %v2430
      %v2577 = vadd.f32 %v2088, %v2433
      %v2578 = vadd.f32 %v2089, %v2436
      %v2579 = vadd.f32 %v2090, %v2438
      %v2580 = vadd.f32 %v2091, %v2440
      %v2581 = vadd.f32 %v2092, %v2443
      %v2582 = vadd.f32 %v2093, %v2446
      %v2583 = vadd.f32 %v2094, %v2448
      %v2584 = vadd.f32 %v2095, %v2450
      %v2585 = vadd.f32 %v2096, %v2453
      %v2586 = vadd.f32 %v2097, %v2456
      %v2587 = vadd.f32 %v2098, %v2458
      %v2588 = vadd.f32 %v2099, %v2460
      %v2589 = vlaneseq
      %v2590 = vshrl.u32 %v2589, 7
      %v2591 = vsub.s32 3, %v2590
      %v2592 = vrot.slane %v1219, %v2591
      %v2593 = vlaneseq
      %v2594 = vshrl.u32 %v2593, 7
      %v2595 = vsub.s32 3, %v2594
      %v2596 = vrot.slane %v1220, %v2595
      %v2597 = vmul.f32 %v1227, %v2592
      %v2598 = vmul.f32 %v1228, %v2596
      %v2599 = vmul.f32 %v1229, %v2592
      %v2600 = vmul.f32 %v1230, %v2596
      %v2601 = vmul.f32 %v1231, %v2592
      %v2602 = vmul.f32 %v1232, %v2596
      %v2603 = vmul.f32 %v1233, %v2592
      %v2604 = vmul.f32 %v1234, %v2596
      %v2605 = vmul.f32 %v1235, %v2592
      %v2606 = vmul.f32 %v1236, %v2596
      %v2607 = vmul.f32 %v1237, %v2592
      %v2608 = vmul.f32 %v1238, %v2596
      %v2609 = vmul.f32 %v1239, %v2592
      %v2610 = vmul.f32 %v1240, %v2596
      %v2611 = vmul.f32 %v1241, %v2592
      %v2612 = vmul.f32 %v1242, %v2596
      %v2613 = vmul.f32 %v1243, %v2592
      %v2614 = vmul.f32 %v1244, %v2596
      %v2615 = vmul.f32 %v1245, %v2592
      %v2616 = vmul.f32 %v1246, %v2596
      %v2617 = vmul.f32 %v1247, %v2592
      %v2618 = vmul.f32 %v1248, %v2596
      %v2619 = vmul.f32 %v1249, %v2592
      %v2620 = vmul.f32 %v1250, %v2596
      %v2621 = vmul.f32 %v1251, %v2592
      %v2622 = vmul.f32 %v1252, %v2596
      %v2623 = vmul.f32 %v1253, %v2592
      %v2624 = vmul.f32 %v1254, %v2596
      %v2625 = vmul.f32 %v1255, %v2592
      %v2626 = vmul.f32 %v1256, %v2596
      %v2627 = vmul.f32 %v1257, %v2592
      %v2628 = vmul.f32 %v1258, %v2596
      %v2629 = vmul.f32 %v1259, %v2592
      %v2630 = vmul.f32 %v1260, %v2596
      %v2631 = vmul.f32 %v1261, %v2592
      %v2632 = vmul.f32 %v1262, %v2596
      %v2633 = vmul.f32 %v1263, %v2592
      %v2634 = vmul.f32 %v1264, %v2596
      %v2635 = vmul.f32 %v1265, %v2592
      %v2636 = vmul.f32 %v1266, %v2596
      %v2637 = vmul.f32 %v1267, %v2592
      %v2638 = vmul.f32 %v1268, %v2596
      %v2639 = vmul.f32 %v1269, %v2592
      %v2640 = vmul.f32 %v1270, %v2596
      %v2641 = vmul.f32 %v1271, %v2592
      %v2642 = vmul.f32 %v1272, %v2596
      %v2643 = vmul.f32 %v1273, %v2592
      %v2644 = vmul.f32 %v1274, %v2596
      %v2645 = vmul.f32 %v1275, %v2592
      %v2646 = vmul.f32 %v1276, %v2596
      %v2647 = vmul.f32 %v1277, %v2592
      %v2648 = vmul.f32 %v1278, %v2596
      %v2649 = vmul.f32 %v1279, %v2592
      %v2650 = vmul.f32 %v1280, %v2596
      %v2651 = vmul.f32 %v1281, %v2592
      %v2652 = vmul.f32 %v1282, %v2596
      %v2653 = vmul.f32 %v1283, %v2592
      %v2654 = vmul.f32 %v1284, %v2596
      %v2655 = vmul.f32 %v1285, %v2592
      %v2656 = vmul.f32 %v1286, %v2596
      %v2657 = vmul.f32 %v1287, %v2592
      %v2658 = vmul.f32 %v1288, %v2596
      %v2659 = vmul.f32 %v1289, %v2592
      %v2660 = vmul.f32 %v1290, %v2596
      %v2661 = vadd.f32 %v2525, %v2597
      %v2662 = vadd.f32 %v2526, %v2598
      %v2663 = vadd.f32 %v2527, %v2599
      %v2664 = vadd.f32 %v2528, %v2600
      %v2665 = vadd.f32 %v2529, %v2601
      %v2666 = vadd.f32 %v2530, %v2602
      %v2667 = vadd.f32 %v2531, %v2603
      %v2668 = vadd.f32 %v2532, %v2604
      %v2669 = vadd.f32 %v2533, %v2605
      %v2670 = vadd.f32 %v2534, %v2606
      %v2671 = vadd.f32 %v2535, %v2607
      %v2672 = vadd.f32 %v2536, %v2608
      %v2673 = vadd.f32 %v2537, %v2609
      %v2674 = vadd.f32 %v2538, %v2610
      %v2675 = vadd.f32 %v2539, %v2611
      %v2676 = vadd.f32 %v2540, %v2612
      %v2677 = vadd.f32 %v2541, %v2613
      %v2678 = vadd.f32 %v2542, %v2614
      %v2679 = vadd.f32 %v2543, %v2615
      %v2680 = vadd.f32 %v2544, %v2616
      %v2681 = vadd.f32 %v2545, %v2617
      %v2682 = vadd.f32 %v2546, %v2618
      %v2683 = vadd.f32 %v2547, %v2619
      %v2684 = vadd.f32 %v2548, %v2620
      %v2685 = vadd.f32 %v2549, %v2621
      %v2686 = vadd.f32 %v2550, %v2622
      %v2687 = vadd.f32 %v2551, %v2623
      %v2688 = vadd.f32 %v2552, %v2624
      %v2689 = vadd.f32 %v2553, %v2625
      %v2690 = vadd.f32 %v2554, %v2626
      %v2691 = vadd.f32 %v2555, %v2627
      %v2692 = vadd.f32 %v2556, %v2628
      %v2693 = vadd.f32 %v2557, %v2629
      %v2694 = vadd.f32 %v2558, %v2630
      %v2695 = vadd.f32 %v2559, %v2631
      %v2696 = vadd.f32 %v2560, %v2632
      %v2697 = vadd.f32 %v2561, %v2633
      %v2698 = vadd.f32 %v2562, %v2634
      %v2699 = vadd.f32 %v2563, %v2635
      %v2700 = vadd.f32 %v2564, %v2636
      %v2701 = vadd.f32 %v2565, %v2637
      %v2702 = vadd.f32 %v2566, %v2638
      %v2703 = vadd.f32 %v2567, %v2639
      %v2704 = vadd.f32 %v2568, %v2640
      %v2705 = vadd.f32 %v2569, %v2641
      %v2706 = vadd.f32 %v2570, %v2642
      %v2707 = vadd.f32 %v2571, %v2643
      %v2708 = vadd.f32 %v2572, %v2644
      %v2709 = vadd.f32 %v2573, %v2645
      %v2710 = vadd.f32 %v2574, %v2646
      %v2711 = vadd.f32 %v2575, %v2647
      %v2712 = vadd.f32 %v2576, %v2648
      %v2713 = vadd.f32 %v2577, %v2649
      %v2714 = vadd.f32 %v2578, %v2650
      %v2715 = vadd.f32 %v2579, %v2651
      %v2716 = vadd.f32 %v2580, %v2652
      %v2717 = vadd.f32 %v2581, %v2653
      %v2718 = vadd.f32 %v2582, %v2654
      %v2719 = vadd.f32 %v2583, %v2655
      %v2720 = vadd.f32 %v2584, %v2656
      %v2721 = vadd.f32 %v2585, %v2657
      %v2722 = vadd.f32 %v2586, %v2658
      %v2723 = vadd.f32 %v2587, %v2659
      %v2724 = vadd.f32 %v2588, %v2660
      %v2725 = vlaneseq
      %v2726 = vshrl.u32 %v2725, 7
      %v2727 = vsub.s32 4, %v2726
      %v2728 = vrot.slane %v1219, %v2727
      %v2729 = vlaneseq
      %v2730 = vshrl.u32 %v2729, 7
      %v2731 = vsub.s32 4, %v2730
      %v2732 = vrot.slane %v1220, %v2731
      %v2733 = vmul.f32 %v1301, %v2728
      %v2734 = vmul.f32 %v1302, %v2732
      %v2735 = vmul.f32 %v1303, %v2728
      %v2736 = vmul.f32 %v1304, %v2732
      %v2737 = vmul.f32 %v1305, %v2728
      %v2738 = vmul.f32 %v1306, %v2732
      %v2739 = vmul.f32 %v1307, %v2728
      %v2740 = vmul.f32 %v1308, %v2732
      %v2741 = vmul.f32 %v1309, %v2728
      %v2742 = vmul.f32 %v1310, %v2732
      %v2743 = vmul.f32 %v1311, %v2728
      %v2744 = vmul.f32 %v1312, %v2732
      %v2745 = vmul.f32 %v1313, %v2728
      %v2746 = vmul.f32 %v1314, %v2732
      %v2747 = vmul.f32 %v1315, %v2728
      %v2748 = vmul.f32 %v1316, %v2732
      %v2749 = vmul.f32 %v1317, %v2728
      %v2750 = vmul.f32 %v1318, %v2732
      %v2751 = vmul.f32 %v1319, %v2728
      %v2752 = vmul.f32 %v1320, %v2732
      %v2753 = vmul.f32 %v1321, %v2728
      %v2754 = vmul.f32 %v1322, %v2732
      %v2755 = vmul.f32 %v1323, %v2728
      %v2756 = vmul.f32 %v1324, %v2732
      %v2757 = vmul.f32 %v1325, %v2728
      %v2758 = vmul.f32 %v1326, %v2732
      %v2759 = vmul.f32 %v1327, %v2728
      %v2760 = vmul.f32 %v1328, %v2732
      %v2761 = vmul.f32 %v1329, %v2728
      %v2762 = vmul.f32 %v1330, %v2732
      %v2763 = vmul.f32 %v1331, %v2728
      %v2764 = vmul.f32 %v1332, %v2732
      %v2765 = vmul.f32 %v1333, %v2728
      %v2766 = vmul.f32 %v1334, %v2732
      %v2767 = vmul.f32 %v1335, %v2728
      %v2768 = vmul.f32 %v1336, %v2732
      %v2769 = vmul.f32 %v1337, %v2728
      %v2770 = vmul.f32 %v1338, %v2732
      %v2771 = vmul.f32 %v1339, %v2728
      %v2772 = vmul.f32 %v1340, %v2732
      %v2773 = vmul.f32 %v1341, %v2728
      %v2774 = vmul.f32 %v1342, %v2732
      %v2775 = vmul.f32 %v1343, %v2728
      %v2776 = vmul.f32 %v1344, %v2732
      %v2777 = vmul.f32 %v1345, %v2728
      %v2778 = vmul.f32 %v1346, %v2732
      %v2779 = vmul.f32 %v1347, %v2728
      %v2780 = vmul.f32 %v1348, %v2732
      %v2781 = vmul.f32 %v1349, %v2728
      %v2782 = vmul.f32 %v1350, %v2732
      %v2783 = vmul.f32 %v1351, %v2728
      %v2784 = vmul.f32 %v1352, %v2732
      %v2785 = vmul.f32 %v1353, %v2728
      %v2786 = vmul.f32 %v1354, %v2732
      %v2787 = vmul.f32 %v1355, %v2728
      %v2788 = vmul.f32 %v1356, %v2732
      %v2789 = vmul.f32 %v1357, %v2728
      %v2790 = vmul.f32 %v1358, %v2732
      %v2791 = vmul.f32 %v1359, %v2728
      %v2792 = vmul.f32 %v1360, %v2732
      %v2793 = vmul.f32 %v1361, %v2728
      %v2794 = vmul.f32 %v1362, %v2732
      %v2795 = vmul.f32 %v1363, %v2728
      %v2796 = vmul.f32 %v1364, %v2732
      %v2797 = vmul.f32 %v1365, %v2728
      %v2798 = vmul.f32 %v1366, %v2732
      %v2799 = vmul.f32 %v1367, %v2728
      %v2800 = vmul.f32 %v1368, %v2732
      %v2801 = vmul.f32 %v1369, %v2728
      %v2802 = vmul.f32 %v1370, %v2732
      %v2803 = vmul.f32 %v1371, %v2728
      %v2804 = vmul.f32 %v1372, %v2732
      %v2805 = vmul.f32 %v1373, %v2728
      %v2806 = vmul.f32 %v1374, %v2732
      %v2807 = vmul.f32 %v1375, %v2728
      %v2808 = vmul.f32 %v1376, %v2732
      %v2809 = vmul.f32 %v1377, %v2728
      %v2810 = vmul.f32 %v1378, %v2732
      %v2811 = vmul.f32 %v1379, %v2728
      %v2812 = vmul.f32 %v1380, %v2732
      %v2813 = vmul.f32 %v1381, %v2728
      %v2814 = vmul.f32 %v1382, %v2732
      %v2815 = vmul.f32 %v1383, %v2728
      %v2816 = vmul.f32 %v1384, %v2732
      %v2817 = vmul.f32 %v1385, %v2728
      %v2818 = vmul.f32 %v1386, %v2732
      %v2819 = vmul.f32 %v1387, %v2728
      %v2820 = vmul.f32 %v1388, %v2732
      %v2821 = vmul.f32 %v1389, %v2728
      %v2822 = vmul.f32 %v1390, %v2732
      %v2823 = vmul.f32 %v1391, %v2728
      %v2824 = vmul.f32 %v1392, %v2732
      %v2825 = vmul.f32 %v1393, %v2728
      %v2826 = vmul.f32 %v1394, %v2732
      %v2827 = vmul.f32 %v1395, %v2728
      %v2828 = vmul.f32 %v1396, %v2732
      %v2925 = vrot.slane %v2733, 1
      %v2926 = vrot.slane %v2735, 1
      %v2927 = vsel %vm1811, %v2925, %v2926
      %v2928 = vrot.slane %v2734, 1
      %v2929 = vrot.slane %v2736, 1
      %v2930 = vsel %vm1811, %v2928, %v2929
      %v2931 = vrot.slane %v2737, 1
      %v2932 = vsel %vm1811, %v2926, %v2931
      %v2933 = vrot.slane %v2738, 1
      %v2934 = vsel %vm1811, %v2929, %v2933
      %v2935 = vrot.slane %v2739, 1
      %v2936 = vrot.slane %v2741, 1
      %v2937 = vsel %vm1811, %v2935, %v2936
      %v2938 = vrot.slane %v2740, 1
      %v2939 = vrot.slane %v2742, 1
      %v2940 = vsel %vm1811, %v2938, %v2939
      %v2941 = vrot.slane %v2743, 1
      %v2942 = vsel %vm1811, %v2936, %v2941
      %v2943 = vrot.slane %v2744, 1
      %v2944 = vsel %vm1811, %v2939, %v2943
      %v2945 = vrot.slane %v2745, 1
      %v2946 = vrot.slane %v2747, 1
      %v2947 = vsel %vm1811, %v2945, %v2946
      %v2948 = vrot.slane %v2746, 1
      %v2949 = vrot.slane %v2748, 1
      %v2950 = vsel %vm1811, %v2948, %v2949
      %v2951 = vrot.slane %v2749, 1
      %v2952 = vsel %vm1811, %v2946, %v2951
      %v2953 = vrot.slane %v2750, 1
      %v2954 = vsel %vm1811, %v2949, %v2953
      %v2955 = vrot.slane %v2751, 1
      %v2956 = vrot.slane %v2753, 1
      %v2957 = vsel %vm1811, %v2955, %v2956
      %v2958 = vrot.slane %v2752, 1
      %v2959 = vrot.slane %v2754, 1
      %v2960 = vsel %vm1811, %v2958, %v2959
      %v2961 = vrot.slane %v2755, 1
      %v2962 = vsel %vm1811, %v2956, %v2961
      %v2963 = vrot.slane %v2756, 1
      %v2964 = vsel %vm1811, %v2959, %v2963
      %v2965 = vrot.slane %v2757, 1
      %v2966 = vrot.slane %v2759, 1
      %v2967 = vsel %vm1811, %v2965, %v2966
      %v2968 = vrot.slane %v2758, 1
      %v2969 = vrot.slane %v2760, 1
      %v2970 = vsel %vm1811, %v2968, %v2969
      %v2971 = vrot.slane %v2761, 1
      %v2972 = vsel %vm1811, %v2966, %v2971
      %v2973 = vrot.slane %v2762, 1
      %v2974 = vsel %vm1811, %v2969, %v2973
      %v2975 = vrot.slane %v2763, 1
      %v2976 = vrot.slane %v2765, 1
      %v2977 = vsel %vm1811, %v2975, %v2976
      %v2978 = vrot.slane %v2764, 1
      %v2979 = vrot.slane %v2766, 1
      %v2980 = vsel %vm1811, %v2978, %v2979
      %v2981 = vrot.slane %v2767, 1
      %v2982 = vsel %vm1811, %v2976, %v2981
      %v2983 = vrot.slane %v2768, 1
      %v2984 = vsel %vm1811, %v2979, %v2983
      %v2985 = vrot.slane %v2769, 1
      %v2986 = vrot.slane %v2771, 1
      %v2987 = vsel %vm1811, %v2985, %v2986
      %v2988 = vrot.slane %v2770, 1
      %v2989 = vrot.slane %v2772, 1
      %v2990 = vsel %vm1811, %v2988, %v2989
      %v2991 = vrot.slane %v2773, 1
      %v2992 = vsel %vm1811, %v2986, %v2991
      %v2993 = vrot.slane %v2774, 1
      %v2994 = vsel %vm1811, %v2989, %v2993
      %v2995 = vrot.slane %v2775, 1
      %v2996 = vrot.slane %v2777, 1
      %v2997 = vsel %vm1811, %v2995, %v2996
      %v2998 = vrot.slane %v2776, 1
      %v2999 = vrot.slane %v2778, 1
      %v3000 = vsel %vm1811, %v2998, %v2999
      %v3001 = vrot.slane %v2779, 1
      %v3002 = vsel %vm1811, %v2996, %v3001
      %v3003 = vrot.slane %v2780, 1
      %v3004 = vsel %vm1811, %v2999, %v3003
      %v3005 = vrot.slane %v2781, 1
      %v3006 = vrot.slane %v2783, 1
      %v3007 = vsel %vm1811, %v3005, %v3006
      %v3008 = vrot.slane %v2782, 1
      %v3009 = vrot.slane %v2784, 1
      %v3010 = vsel %vm1811, %v3008, %v3009
      %v3011 = vrot.slane %v2785, 1
      %v3012 = vsel %vm1811, %v3006, %v3011
      %v3013 = vrot.slane %v2786, 1
      %v3014 = vsel %vm1811, %v3009, %v3013
      %v3015 = vrot.slane %v2787, 1
      %v3016 = vrot.slane %v2789, 1
      %v3017 = vsel %vm1811, %v3015, %v3016
      %v3018 = vrot.slane %v2788, 1
      %v3019 = vrot.slane %v2790, 1
      %v3020 = vsel %vm1811, %v3018, %v3019
      %v3021 = vrot.slane %v2791, 1
      %v3022 = vsel %vm1811, %v3016, %v3021
      %v3023 = vrot.slane %v2792, 1
      %v3024 = vsel %vm1811, %v3019, %v3023
      %v3025 = vrot.slane %v2793, 1
      %v3026 = vrot.slane %v2795, 1
      %v3027 = vsel %vm1811, %v3025, %v3026
      %v3028 = vrot.slane %v2794, 1
      %v3029 = vrot.slane %v2796, 1
      %v3030 = vsel %vm1811, %v3028, %v3029
      %v3031 = vrot.slane %v2797, 1
      %v3032 = vsel %vm1811, %v3026, %v3031
      %v3033 = vrot.slane %v2798, 1
      %v3034 = vsel %vm1811, %v3029, %v3033
      %v3035 = vrot.slane %v2799, 1
      %v3036 = vrot.slane %v2801, 1
      %v3037 = vsel %vm1811, %v3035, %v3036
      %v3038 = vrot.slane %v2800, 1
      %v3039 = vrot.slane %v2802, 1
      %v3040 = vsel %vm1811, %v3038, %v3039
      %v3041 = vrot.slane %v2803, 1
      %v3042 = vsel %vm1811, %v3036, %v3041
      %v3043 = vrot.slane %v2804, 1
      %v3044 = vsel %vm1811, %v3039, %v3043
      %v3045 = vrot.slane %v2805, 1
      %v3046 = vrot.slane %v2807, 1
      %v3047 = vsel %vm1811, %v3045, %v3046
      %v3048 = vrot.slane %v2806, 1
      %v3049 = vrot.slane %v2808, 1
      %v3050 = vsel %vm1811, %v3048, %v3049
      %v3051 = vrot.slane %v2809, 1
      %v3052 = vsel %vm1811, %v3046, %v3051
      %v3053 = vrot.slane %v2810, 1
      %v3054 = vsel %vm1811, %v3049, %v3053
      %v3055 = vrot.slane %v2811, 1
      %v3056 = vrot.slane %v2813, 1
      %v3057 = vsel %vm1811, %v3055, %v3056
      %v3058 = vrot.slane %v2812, 1
      %v3059 = vrot.slane %v2814, 1
      %v3060 = vsel %vm1811, %v3058, %v3059
      %v3061 = vrot.slane %v2815, 1
      %v3062 = vsel %vm1811, %v3056, %v3061
      %v3063 = vrot.slane %v2816, 1
      %v3064 = vsel %vm1811, %v3059, %v3063
      %v3065 = vrot.slane %v2817, 1
      %v3066 = vrot.slane %v2819, 1
      %v3067 = vsel %vm1811, %v3065, %v3066
      %v3068 = vrot.slane %v2818, 1
      %v3069 = vrot.slane %v2820, 1
      %v3070 = vsel %vm1811, %v3068, %v3069
      %v3071 = vrot.slane %v2821, 1
      %v3072 = vsel %vm1811, %v3066, %v3071
      %v3073 = vrot.slane %v2822, 1
      %v3074 = vsel %vm1811, %v3069, %v3073
      %v3075 = vrot.slane %v2823, 1
      %v3076 = vrot.slane %v2825, 1
      %v3077 = vsel %vm1811, %v3075, %v3076
      %v3078 = vrot.slane %v2824, 1
      %v3079 = vrot.slane %v2826, 1
      %v3080 = vsel %vm1811, %v3078, %v3079
      %v3081 = vrot.slane %v2827, 1
      %v3082 = vsel %vm1811, %v3076, %v3081
      %v3083 = vrot.slane %v2828, 1
      %v3084 = vsel %vm1811, %v3079, %v3083
      %v3149 = vadd.f32 %v2661, %v2927
      %v3150 = vadd.f32 %v2662, %v2930
      %v3151 = vadd.f32 %v2663, %v2932
      %v3152 = vadd.f32 %v2664, %v2934
      %v3153 = vadd.f32 %v2665, %v2937
      %v3154 = vadd.f32 %v2666, %v2940
      %v3155 = vadd.f32 %v2667, %v2942
      %v3156 = vadd.f32 %v2668, %v2944
      %v3157 = vadd.f32 %v2669, %v2947
      %v3158 = vadd.f32 %v2670, %v2950
      %v3159 = vadd.f32 %v2671, %v2952
      %v3160 = vadd.f32 %v2672, %v2954
      %v3161 = vadd.f32 %v2673, %v2957
      %v3162 = vadd.f32 %v2674, %v2960
      %v3163 = vadd.f32 %v2675, %v2962
      %v3164 = vadd.f32 %v2676, %v2964
      %v3165 = vadd.f32 %v2677, %v2967
      %v3166 = vadd.f32 %v2678, %v2970
      %v3167 = vadd.f32 %v2679, %v2972
      %v3168 = vadd.f32 %v2680, %v2974
      %v3169 = vadd.f32 %v2681, %v2977
      %v3170 = vadd.f32 %v2682, %v2980
      %v3171 = vadd.f32 %v2683, %v2982
      %v3172 = vadd.f32 %v2684, %v2984
      %v3173 = vadd.f32 %v2685, %v2987
      %v3174 = vadd.f32 %v2686, %v2990
      %v3175 = vadd.f32 %v2687, %v2992
      %v3176 = vadd.f32 %v2688, %v2994
      %v3177 = vadd.f32 %v2689, %v2997
      %v3178 = vadd.f32 %v2690, %v3000
      %v3179 = vadd.f32 %v2691, %v3002
      %v3180 = vadd.f32 %v2692, %v3004
      %v3181 = vadd.f32 %v2693, %v3007
      %v3182 = vadd.f32 %v2694, %v3010
      %v3183 = vadd.f32 %v2695, %v3012
      %v3184 = vadd.f32 %v2696, %v3014
      %v3185 = vadd.f32 %v2697, %v3017
      %v3186 = vadd.f32 %v2698, %v3020
      %v3187 = vadd.f32 %v2699, %v3022
      %v3188 = vadd.f32 %v2700, %v3024
      %v3189 = vadd.f32 %v2701, %v3027
      %v3190 = vadd.f32 %v2702, %v3030
      %v3191 = vadd.f32 %v2703, %v3032
      %v3192 = vadd.f32 %v2704, %v3034
      %v3193 = vadd.f32 %v2705, %v3037
      %v3194 = vadd.f32 %v2706, %v3040
      %v3195 = vadd.f32 %v2707, %v3042
      %v3196 = vadd.f32 %v2708, %v3044
      %v3197 = vadd.f32 %v2709, %v3047
      %v3198 = vadd.f32 %v2710, %v3050
      %v3199 = vadd.f32 %v2711, %v3052
      %v3200 = vadd.f32 %v2712, %v3054
      %v3201 = vadd.f32 %v2713, %v3057
      %v3202 = vadd.f32 %v2714, %v3060
      %v3203 = vadd.f32 %v2715, %v3062
      %v3204 = vadd.f32 %v2716, %v3064
      %v3205 = vadd.f32 %v2717, %v3067
      %v3206 = vadd.f32 %v2718, %v3070
      %v3207 = vadd.f32 %v2719, %v3072
      %v3208 = vadd.f32 %v2720, %v3074
      %v3209 = vadd.f32 %v2721, %v3077
      %v3210 = vadd.f32 %v2722, %v3080
      %v3211 = vadd.f32 %v2723, %v3082
      %v3212 = vadd.f32 %v2724, %v3084
      %v3213 = vlaneseq
      %v3214 = vshrl.u32 %v3213, 7
      %v3215 = vsub.s32 5, %v3214
      %v3216 = vrot.slane %v1219, %v3215
      %v3217 = vlaneseq
      %v3218 = vshrl.u32 %v3217, 7
      %v3219 = vsub.s32 5, %v3218
      %v3220 = vrot.slane %v1220, %v3219
      %v3221 = vmul.f32 %v1407, %v3216
      %v3222 = vmul.f32 %v1408, %v3220
      %v3223 = vmul.f32 %v1303, %v3216
      %v3224 = vmul.f32 %v1304, %v3220
      %v3225 = vmul.f32 %v1409, %v3216
      %v3226 = vmul.f32 %v1410, %v3220
      %v3227 = vmul.f32 %v1411, %v3216
      %v3228 = vmul.f32 %v1412, %v3220
      %v3229 = vmul.f32 %v1309, %v3216
      %v3230 = vmul.f32 %v1310, %v3220
      %v3231 = vmul.f32 %v1413, %v3216
      %v3232 = vmul.f32 %v1414, %v3220
      %v3233 = vmul.f32 %v1415, %v3216
      %v3234 = vmul.f32 %v1416, %v3220
      %v3235 = vmul.f32 %v1315, %v3216
      %v3236 = vmul.f32 %v1316, %v3220
      %v3237 = vmul.f32 %v1417, %v3216
      %v3238 = vmul.f32 %v1418, %v3220
      %v3239 = vmul.f32 %v1419, %v3216
      %v3240 = vmul.f32 %v1420, %v3220
      %v3241 = vmul.f32 %v1321, %v3216
      %v3242 = vmul.f32 %v1322, %v3220
      %v3243 = vmul.f32 %v1421, %v3216
      %v3244 = vmul.f32 %v1422, %v3220
      %v3245 = vmul.f32 %v1423, %v3216
      %v3246 = vmul.f32 %v1424, %v3220
      %v3247 = vmul.f32 %v1327, %v3216
      %v3248 = vmul.f32 %v1328, %v3220
      %v3249 = vmul.f32 %v1425, %v3216
      %v3250 = vmul.f32 %v1426, %v3220
      %v3251 = vmul.f32 %v1427, %v3216
      %v3252 = vmul.f32 %v1428, %v3220
      %v3253 = vmul.f32 %v1333, %v3216
      %v3254 = vmul.f32 %v1334, %v3220
      %v3255 = vmul.f32 %v1429, %v3216
      %v3256 = vmul.f32 %v1430, %v3220
      %v3257 = vmul.f32 %v1431, %v3216
      %v3258 = vmul.f32 %v1432, %v3220
      %v3259 = vmul.f32 %v1339, %v3216
      %v3260 = vmul.f32 %v1340, %v3220
      %v3261 = vmul.f32 %v1433, %v3216
      %v3262 = vmul.f32 %v1434, %v3220
      %v3263 = vmul.f32 %v1435, %v3216
      %v3264 = vmul.f32 %v1436, %v3220
      %v3265 = vmul.f32 %v1345, %v3216
      %v3266 = vmul.f32 %v1346, %v3220
      %v3267 = vmul.f32 %v1437, %v3216
      %v3268 = vmul.f32 %v1438, %v3220
      %v3269 = vmul.f32 %v1439, %v3216
      %v3270 = vmul.f32 %v1440, %v3220
      %v3271 = vmul.f32 %v1351, %v3216
      %v3272 = vmul.f32 %v1352, %v3220
      %v3273 = vmul.f32 %v1441, %v3216
      %v3274 = vmul.f32 %v1442, %v3220
      %v3275 = vmul.f32 %v1443, %v3216
      %v3276 = vmul.f32 %v1444, %v3220
      %v3277 = vmul.f32 %v1357, %v3216
      %v3278 = vmul.f32 %v1358, %v3220
      %v3279 = vmul.f32 %v1445, %v3216
      %v3280 = vmul.f32 %v1446, %v3220
      %v3281 = vmul.f32 %v1447, %v3216
      %v3282 = vmul.f32 %v1448, %v3220
      %v3283 = vmul.f32 %v1363, %v3216
      %v3284 = vmul.f32 %v1364, %v3220
      %v3285 = vmul.f32 %v1449, %v3216
      %v3286 = vmul.f32 %v1450, %v3220
      %v3287 = vmul.f32 %v1451, %v3216
      %v3288 = vmul.f32 %v1452, %v3220
      %v3289 = vmul.f32 %v1369, %v3216
      %v3290 = vmul.f32 %v1370, %v3220
      %v3291 = vmul.f32 %v1453, %v3216
      %v3292 = vmul.f32 %v1454, %v3220
      %v3293 = vmul.f32 %v1455, %v3216
      %v3294 = vmul.f32 %v1456, %v3220
      %v3295 = vmul.f32 %v1375, %v3216
      %v3296 = vmul.f32 %v1376, %v3220
      %v3297 = vmul.f32 %v1457, %v3216
      %v3298 = vmul.f32 %v1458, %v3220
      %v3299 = vmul.f32 %v1459, %v3216
      %v3300 = vmul.f32 %v1460, %v3220
      %v3301 = vmul.f32 %v1381, %v3216
      %v3302 = vmul.f32 %v1382, %v3220
      %v3303 = vmul.f32 %v1461, %v3216
      %v3304 = vmul.f32 %v1462, %v3220
      %v3305 = vmul.f32 %v1463, %v3216
      %v3306 = vmul.f32 %v1464, %v3220
      %v3307 = vmul.f32 %v1387, %v3216
      %v3308 = vmul.f32 %v1388, %v3220
      %v3309 = vmul.f32 %v1465, %v3216
      %v3310 = vmul.f32 %v1466, %v3220
      %v3311 = vmul.f32 %v1467, %v3216
      %v3312 = vmul.f32 %v1468, %v3220
      %v3313 = vmul.f32 %v1393, %v3216
      %v3314 = vmul.f32 %v1394, %v3220
      %v3315 = vmul.f32 %v1469, %v3216
      %v3316 = vmul.f32 %v1470, %v3220
      %v3413 = vrot.slane %v3221, 2
      %v3414 = vrot.slane %v3223, 2
      %v3415 = vsel %vm2300, %v3413, %v3414
      %v3416 = vrot.slane %v3222, 2
      %v3417 = vrot.slane %v3224, 2
      %v3418 = vsel %vm2300, %v3416, %v3417
      %v3419 = vrot.slane %v3225, 2
      %v3420 = vsel %vm2300, %v3414, %v3419
      %v3421 = vrot.slane %v3226, 2
      %v3422 = vsel %vm2300, %v3417, %v3421
      %v3423 = vrot.slane %v3227, 2
      %v3424 = vrot.slane %v3229, 2
      %v3425 = vsel %vm2300, %v3423, %v3424
      %v3426 = vrot.slane %v3228, 2
      %v3427 = vrot.slane %v3230, 2
      %v3428 = vsel %vm2300, %v3426, %v3427
      %v3429 = vrot.slane %v3231, 2
      %v3430 = vsel %vm2300, %v3424, %v3429
      %v3431 = vrot.slane %v3232, 2
      %v3432 = vsel %vm2300, %v3427, %v3431
      %v3433 = vrot.slane %v3233, 2
      %v3434 = vrot.slane %v3235, 2
      %v3435 = vsel %vm2300, %v3433, %v3434
      %v3436 = vrot.slane %v3234, 2
      %v3437 = vrot.slane %v3236, 2
      %v3438 = vsel %vm2300, %v3436, %v3437
      %v3439 = vrot.slane %v3237, 2
      %v3440 = vsel %vm2300, %v3434, %v3439
      %v3441 = vrot.slane %v3238, 2
      %v3442 = vsel %vm2300, %v3437, %v3441
      %v3443 = vrot.slane %v3239, 2
      %v3444 = vrot.slane %v3241, 2
      %v3445 = vsel %vm2300, %v3443, %v3444
      %v3446 = vrot.slane %v3240, 2
      %v3447 = vrot.slane %v3242, 2
      %v3448 = vsel %vm2300, %v3446, %v3447
      %v3449 = vrot.slane %v3243, 2
      %v3450 = vsel %vm2300, %v3444, %v3449
      %v3451 = vrot.slane %v3244, 2
      %v3452 = vsel %vm2300, %v3447, %v3451
      %v3453 = vrot.slane %v3245, 2
      %v3454 = vrot.slane %v3247, 2
      %v3455 = vsel %vm2300, %v3453, %v3454
      %v3456 = vrot.slane %v3246, 2
      %v3457 = vrot.slane %v3248, 2
      %v3458 = vsel %vm2300, %v3456, %v3457
      %v3459 = vrot.slane %v3249, 2
      %v3460 = vsel %vm2300, %v3454, %v3459
      %v3461 = vrot.slane %v3250, 2
      %v3462 = vsel %vm2300, %v3457, %v3461
      %v3463 = vrot.slane %v3251, 2
      %v3464 = vrot.slane %v3253, 2
      %v3465 = vsel %vm2300, %v3463, %v3464
      %v3466 = vrot.slane %v3252, 2
      %v3467 = vrot.slane %v3254, 2
      %v3468 = vsel %vm2300, %v3466, %v3467
      %v3469 = vrot.slane %v3255, 2
      %v3470 = vsel %vm2300, %v3464, %v3469
      %v3471 = vrot.slane %v3256, 2
      %v3472 = vsel %vm2300, %v3467, %v3471
      %v3473 = vrot.slane %v3257, 2
      %v3474 = vrot.slane %v3259, 2
      %v3475 = vsel %vm2300, %v3473, %v3474
      %v3476 = vrot.slane %v3258, 2
      %v3477 = vrot.slane %v3260, 2
      %v3478 = vsel %vm2300, %v3476, %v3477
      %v3479 = vrot.slane %v3261, 2
      %v3480 = vsel %vm2300, %v3474, %v3479
      %v3481 = vrot.slane %v3262, 2
      %v3482 = vsel %vm2300, %v3477, %v3481
      %v3483 = vrot.slane %v3263, 2
      %v3484 = vrot.slane %v3265, 2
      %v3485 = vsel %vm2300, %v3483, %v3484
      %v3486 = vrot.slane %v3264, 2
      %v3487 = vrot.slane %v3266, 2
      %v3488 = vsel %vm2300, %v3486, %v3487
      %v3489 = vrot.slane %v3267, 2
      %v3490 = vsel %vm2300, %v3484, %v3489
      %v3491 = vrot.slane %v3268, 2
      %v3492 = vsel %vm2300, %v3487, %v3491
      %v3493 = vrot.slane %v3269, 2
      %v3494 = vrot.slane %v3271, 2
      %v3495 = vsel %vm2300, %v3493, %v3494
      %v3496 = vrot.slane %v3270, 2
      %v3497 = vrot.slane %v3272, 2
      %v3498 = vsel %vm2300, %v3496, %v3497
      %v3499 = vrot.slane %v3273, 2
      %v3500 = vsel %vm2300, %v3494, %v3499
      %v3501 = vrot.slane %v3274, 2
      %v3502 = vsel %vm2300, %v3497, %v3501
      %v3503 = vrot.slane %v3275, 2
      %v3504 = vrot.slane %v3277, 2
      %v3505 = vsel %vm2300, %v3503, %v3504
      %v3506 = vrot.slane %v3276, 2
      %v3507 = vrot.slane %v3278, 2
      %v3508 = vsel %vm2300, %v3506, %v3507
      %v3509 = vrot.slane %v3279, 2
      %v3510 = vsel %vm2300, %v3504, %v3509
      %v3511 = vrot.slane %v3280, 2
      %v3512 = vsel %vm2300, %v3507, %v3511
      %v3513 = vrot.slane %v3281, 2
      %v3514 = vrot.slane %v3283, 2
      %v3515 = vsel %vm2300, %v3513, %v3514
      %v3516 = vrot.slane %v3282, 2
      %v3517 = vrot.slane %v3284, 2
      %v3518 = vsel %vm2300, %v3516, %v3517
      %v3519 = vrot.slane %v3285, 2
      %v3520 = vsel %vm2300, %v3514, %v3519
      %v3521 = vrot.slane %v3286, 2
      %v3522 = vsel %vm2300, %v3517, %v3521
      %v3523 = vrot.slane %v3287, 2
      %v3524 = vrot.slane %v3289, 2
      %v3525 = vsel %vm2300, %v3523, %v3524
      %v3526 = vrot.slane %v3288, 2
      %v3527 = vrot.slane %v3290, 2
      %v3528 = vsel %vm2300, %v3526, %v3527
      %v3529 = vrot.slane %v3291, 2
      %v3530 = vsel %vm2300, %v3524, %v3529
      %v3531 = vrot.slane %v3292, 2
      %v3532 = vsel %vm2300, %v3527, %v3531
      %v3533 = vrot.slane %v3293, 2
      %v3534 = vrot.slane %v3295, 2
      %v3535 = vsel %vm2300, %v3533, %v3534
      %v3536 = vrot.slane %v3294, 2
      %v3537 = vrot.slane %v3296, 2
      %v3538 = vsel %vm2300, %v3536, %v3537
      %v3539 = vrot.slane %v3297, 2
      %v3540 = vsel %vm2300, %v3534, %v3539
      %v3541 = vrot.slane %v3298, 2
      %v3542 = vsel %vm2300, %v3537, %v3541
      %v3543 = vrot.slane %v3299, 2
      %v3544 = vrot.slane %v3301, 2
      %v3545 = vsel %vm2300, %v3543, %v3544
      %v3546 = vrot.slane %v3300, 2
      %v3547 = vrot.slane %v3302, 2
      %v3548 = vsel %vm2300, %v3546, %v3547
      %v3549 = vrot.slane %v3303, 2
      %v3550 = vsel %vm2300, %v3544, %v3549
      %v3551 = vrot.slane %v3304, 2
      %v3552 = vsel %vm2300, %v3547, %v3551
      %v3553 = vrot.slane %v3305, 2
      %v3554 = vrot.slane %v3307, 2
      %v3555 = vsel %vm2300, %v3553, %v3554
      %v3556 = vrot.slane %v3306, 2
      %v3557 = vrot.slane %v3308, 2
      %v3558 = vsel %vm2300, %v3556, %v3557
      %v3559 = vrot.slane %v3309, 2
      %v3560 = vsel %vm2300, %v3554, %v3559
      %v3561 = vrot.slane %v3310, 2
      %v3562 = vsel %vm2300, %v3557, %v3561
      %v3563 = vrot.slane %v3311, 2
      %v3564 = vrot.slane %v3313, 2
      %v3565 = vsel %vm2300, %v3563, %v3564
      %v3566 = vrot.slane %v3312, 2
      %v3567 = vrot.slane %v3314, 2
      %v3568 = vsel %vm2300, %v3566, %v3567
      %v3569 = vrot.slane %v3315, 2
      %v3570 = vsel %vm2300, %v3564, %v3569
      %v3571 = vrot.slane %v3316, 2
      %v3572 = vsel %vm2300, %v3567, %v3571
      %v3637 = vadd.f32 %v3149, %v3415
      %v3638 = vadd.f32 %v3150, %v3418
      %v3639 = vadd.f32 %v3151, %v3420
      %v3640 = vadd.f32 %v3152, %v3422
      %v3641 = vadd.f32 %v3153, %v3425
      %v3642 = vadd.f32 %v3154, %v3428
      %v3643 = vadd.f32 %v3155, %v3430
      %v3644 = vadd.f32 %v3156, %v3432
      %v3645 = vadd.f32 %v3157, %v3435
      %v3646 = vadd.f32 %v3158, %v3438
      %v3647 = vadd.f32 %v3159, %v3440
      %v3648 = vadd.f32 %v3160, %v3442
      %v3649 = vadd.f32 %v3161, %v3445
      %v3650 = vadd.f32 %v3162, %v3448
      %v3651 = vadd.f32 %v3163, %v3450
      %v3652 = vadd.f32 %v3164, %v3452
      %v3653 = vadd.f32 %v3165, %v3455
      %v3654 = vadd.f32 %v3166, %v3458
      %v3655 = vadd.f32 %v3167, %v3460
      %v3656 = vadd.f32 %v3168, %v3462
      %v3657 = vadd.f32 %v3169, %v3465
      %v3658 = vadd.f32 %v3170, %v3468
      %v3659 = vadd.f32 %v3171, %v3470
      %v3660 = vadd.f32 %v3172, %v3472
      %v3661 = vadd.f32 %v3173, %v3475
      %v3662 = vadd.f32 %v3174, %v3478
      %v3663 = vadd.f32 %v3175, %v3480
      %v3664 = vadd.f32 %v3176, %v3482
      %v3665 = vadd.f32 %v3177, %v3485
      %v3666 = vadd.f32 %v3178, %v3488
      %v3667 = vadd.f32 %v3179, %v3490
      %v3668 = vadd.f32 %v3180, %v3492
      %v3669 = vadd.f32 %v3181, %v3495
      %v3670 = vadd.f32 %v3182, %v3498
      %v3671 = vadd.f32 %v3183, %v3500
      %v3672 = vadd.f32 %v3184, %v3502
      %v3673 = vadd.f32 %v3185, %v3505
      %v3674 = vadd.f32 %v3186, %v3508
      %v3675 = vadd.f32 %v3187, %v3510
      %v3676 = vadd.f32 %v3188, %v3512
      %v3677 = vadd.f32 %v3189, %v3515
      %v3678 = vadd.f32 %v3190, %v3518
      %v3679 = vadd.f32 %v3191, %v3520
      %v3680 = vadd.f32 %v3192, %v3522
      %v3681 = vadd.f32 %v3193, %v3525
      %v3682 = vadd.f32 %v3194, %v3528
      %v3683 = vadd.f32 %v3195, %v3530
      %v3684 = vadd.f32 %v3196, %v3532
      %v3685 = vadd.f32 %v3197, %v3535
      %v3686 = vadd.f32 %v3198, %v3538
      %v3687 = vadd.f32 %v3199, %v3540
      %v3688 = vadd.f32 %v3200, %v3542
      %v3689 = vadd.f32 %v3201, %v3545
      %v3690 = vadd.f32 %v3202, %v3548
      %v3691 = vadd.f32 %v3203, %v3550
      %v3692 = vadd.f32 %v3204, %v3552
      %v3693 = vadd.f32 %v3205, %v3555
      %v3694 = vadd.f32 %v3206, %v3558
      %v3695 = vadd.f32 %v3207, %v3560
      %v3696 = vadd.f32 %v3208, %v3562
      %v3697 = vadd.f32 %v3209, %v3565
      %v3698 = vadd.f32 %v3210, %v3568
      %v3699 = vadd.f32 %v3211, %v3570
      %v3700 = vadd.f32 %v3212, %v3572
      %v3701 = vlaneseq
      %v3702 = vshrl.u32 %v3701, 7
      %v3703 = vsub.s32 6, %v3702
      %v3704 = vrot.slane %v1219, %v3703
      %v3705 = vlaneseq
      %v3706 = vshrl.u32 %v3705, 7
      %v3707 = vsub.s32 6, %v3706
      %v3708 = vrot.slane %v1220, %v3707
      %v3709 = vmul.f32 %v1231, %v3704
      %v3710 = vmul.f32 %v1232, %v3708
      %v3711 = vmul.f32 %v1233, %v3704
      %v3712 = vmul.f32 %v1234, %v3708
      %v3713 = vmul.f32 %v1235, %v3704
      %v3714 = vmul.f32 %v1236, %v3708
      %v3715 = vmul.f32 %v1237, %v3704
      %v3716 = vmul.f32 %v1238, %v3708
      %v3717 = vmul.f32 %v1239, %v3704
      %v3718 = vmul.f32 %v1240, %v3708
      %v3719 = vmul.f32 %v1241, %v3704
      %v3720 = vmul.f32 %v1242, %v3708
      %v3721 = vmul.f32 %v1243, %v3704
      %v3722 = vmul.f32 %v1244, %v3708
      %v3723 = vmul.f32 %v1245, %v3704
      %v3724 = vmul.f32 %v1246, %v3708
      %v3725 = vmul.f32 %v1247, %v3704
      %v3726 = vmul.f32 %v1248, %v3708
      %v3727 = vmul.f32 %v1249, %v3704
      %v3728 = vmul.f32 %v1250, %v3708
      %v3729 = vmul.f32 %v1251, %v3704
      %v3730 = vmul.f32 %v1252, %v3708
      %v3731 = vmul.f32 %v1253, %v3704
      %v3732 = vmul.f32 %v1254, %v3708
      %v3733 = vmul.f32 %v1255, %v3704
      %v3734 = vmul.f32 %v1256, %v3708
      %v3735 = vmul.f32 %v1257, %v3704
      %v3736 = vmul.f32 %v1258, %v3708
      %v3737 = vmul.f32 %v1259, %v3704
      %v3738 = vmul.f32 %v1260, %v3708
      %v3739 = vmul.f32 %v1261, %v3704
      %v3740 = vmul.f32 %v1262, %v3708
      %v3741 = vmul.f32 %v1263, %v3704
      %v3742 = vmul.f32 %v1264, %v3708
      %v3743 = vmul.f32 %v1265, %v3704
      %v3744 = vmul.f32 %v1266, %v3708
      %v3745 = vmul.f32 %v1267, %v3704
      %v3746 = vmul.f32 %v1268, %v3708
      %v3747 = vmul.f32 %v1269, %v3704
      %v3748 = vmul.f32 %v1270, %v3708
      %v3749 = vmul.f32 %v1271, %v3704
      %v3750 = vmul.f32 %v1272, %v3708
      %v3751 = vmul.f32 %v1273, %v3704
      %v3752 = vmul.f32 %v1274, %v3708
      %v3753 = vmul.f32 %v1275, %v3704
      %v3754 = vmul.f32 %v1276, %v3708
      %v3755 = vmul.f32 %v1277, %v3704
      %v3756 = vmul.f32 %v1278, %v3708
      %v3757 = vmul.f32 %v1279, %v3704
      %v3758 = vmul.f32 %v1280, %v3708
      %v3759 = vmul.f32 %v1281, %v3704
      %v3760 = vmul.f32 %v1282, %v3708
      %v3761 = vmul.f32 %v1283, %v3704
      %v3762 = vmul.f32 %v1284, %v3708
      %v3763 = vmul.f32 %v1285, %v3704
      %v3764 = vmul.f32 %v1286, %v3708
      %v3765 = vmul.f32 %v1287, %v3704
      %v3766 = vmul.f32 %v1288, %v3708
      %v3767 = vmul.f32 %v1289, %v3704
      %v3768 = vmul.f32 %v1290, %v3708
      %v3769 = vmul.f32 %v1291, %v3704
      %v3770 = vmul.f32 %v1292, %v3708
      %v3771 = vmul.f32 %v1293, %v3704
      %v3772 = vmul.f32 %v1294, %v3708
      %v3773 = vadd.f32 %v3637, %v3709
      %v3774 = vadd.f32 %v3638, %v3710
      %v3775 = vadd.f32 %v3639, %v3711
      %v3776 = vadd.f32 %v3640, %v3712
      %v3777 = vadd.f32 %v3641, %v3713
      %v3778 = vadd.f32 %v3642, %v3714
      %v3779 = vadd.f32 %v3643, %v3715
      %v3780 = vadd.f32 %v3644, %v3716
      %v3781 = vadd.f32 %v3645, %v3717
      %v3782 = vadd.f32 %v3646, %v3718
      %v3783 = vadd.f32 %v3647, %v3719
      %v3784 = vadd.f32 %v3648, %v3720
      %v3785 = vadd.f32 %v3649, %v3721
      %v3786 = vadd.f32 %v3650, %v3722
      %v3787 = vadd.f32 %v3651, %v3723
      %v3788 = vadd.f32 %v3652, %v3724
      %v3789 = vadd.f32 %v3653, %v3725
      %v3790 = vadd.f32 %v3654, %v3726
      %v3791 = vadd.f32 %v3655, %v3727
      %v3792 = vadd.f32 %v3656, %v3728
      %v3793 = vadd.f32 %v3657, %v3729
      %v3794 = vadd.f32 %v3658, %v3730
      %v3795 = vadd.f32 %v3659, %v3731
      %v3796 = vadd.f32 %v3660, %v3732
      %v3797 = vadd.f32 %v3661, %v3733
      %v3798 = vadd.f32 %v3662, %v3734
      %v3799 = vadd.f32 %v3663, %v3735
      %v3800 = vadd.f32 %v3664, %v3736
      %v3801 = vadd.f32 %v3665, %v3737
      %v3802 = vadd.f32 %v3666, %v3738
      %v3803 = vadd.f32 %v3667, %v3739
      %v3804 = vadd.f32 %v3668, %v3740
      %v3805 = vadd.f32 %v3669, %v3741
      %v3806 = vadd.f32 %v3670, %v3742
      %v3807 = vadd.f32 %v3671, %v3743
      %v3808 = vadd.f32 %v3672, %v3744
      %v3809 = vadd.f32 %v3673, %v3745
      %v3810 = vadd.f32 %v3674, %v3746
      %v3811 = vadd.f32 %v3675, %v3747
      %v3812 = vadd.f32 %v3676, %v3748
      %v3813 = vadd.f32 %v3677, %v3749
      %v3814 = vadd.f32 %v3678, %v3750
      %v3815 = vadd.f32 %v3679, %v3751
      %v3816 = vadd.f32 %v3680, %v3752
      %v3817 = vadd.f32 %v3681, %v3753
      %v3818 = vadd.f32 %v3682, %v3754
      %v3819 = vadd.f32 %v3683, %v3755
      %v3820 = vadd.f32 %v3684, %v3756
      %v3821 = vadd.f32 %v3685, %v3757
      %v3822 = vadd.f32 %v3686, %v3758
      %v3823 = vadd.f32 %v3687, %v3759
      %v3824 = vadd.f32 %v3688, %v3760
      %v3825 = vadd.f32 %v3689, %v3761
      %v3826 = vadd.f32 %v3690, %v3762
      %v3827 = vadd.f32 %v3691, %v3763
      %v3828 = vadd.f32 %v3692, %v3764
      %v3829 = vadd.f32 %v3693, %v3765
      %v3830 = vadd.f32 %v3694, %v3766
      %v3831 = vadd.f32 %v3695, %v3767
      %v3832 = vadd.f32 %v3696, %v3768
      %v3833 = vadd.f32 %v3697, %v3769
      %v3834 = vadd.f32 %v3698, %v3770
      %v3835 = vadd.f32 %v3699, %v3771
      %v3836 = vadd.f32 %v3700, %v3772
      %v3837 = vlaneseq
      %v3838 = vshrl.u32 %v3837, 7
      %v3839 = vsub.s32 7, %v3838
      %v3840 = vrot.slane %v1219, %v3839
      %v3841 = vlaneseq
      %v3842 = vshrl.u32 %v3841, 7
      %v3843 = vsub.s32 7, %v3842
      %v3844 = vrot.slane %v1220, %v3843
      %v3845 = vmul.f32 %v1307, %v3840
      %v3846 = vmul.f32 %v1308, %v3844
      %v3847 = vmul.f32 %v1309, %v3840
      %v3848 = vmul.f32 %v1310, %v3844
      %v3849 = vmul.f32 %v1311, %v3840
      %v3850 = vmul.f32 %v1312, %v3844
      %v3851 = vmul.f32 %v1313, %v3840
      %v3852 = vmul.f32 %v1314, %v3844
      %v3853 = vmul.f32 %v1315, %v3840
      %v3854 = vmul.f32 %v1316, %v3844
      %v3855 = vmul.f32 %v1317, %v3840
      %v3856 = vmul.f32 %v1318, %v3844
      %v3857 = vmul.f32 %v1319, %v3840
      %v3858 = vmul.f32 %v1320, %v3844
      %v3859 = vmul.f32 %v1321, %v3840
      %v3860 = vmul.f32 %v1322, %v3844
      %v3861 = vmul.f32 %v1323, %v3840
      %v3862 = vmul.f32 %v1324, %v3844
      %v3863 = vmul.f32 %v1325, %v3840
      %v3864 = vmul.f32 %v1326, %v3844
      %v3865 = vmul.f32 %v1327, %v3840
      %v3866 = vmul.f32 %v1328, %v3844
      %v3867 = vmul.f32 %v1329, %v3840
      %v3868 = vmul.f32 %v1330, %v3844
      %v3869 = vmul.f32 %v1331, %v3840
      %v3870 = vmul.f32 %v1332, %v3844
      %v3871 = vmul.f32 %v1333, %v3840
      %v3872 = vmul.f32 %v1334, %v3844
      %v3873 = vmul.f32 %v1335, %v3840
      %v3874 = vmul.f32 %v1336, %v3844
      %v3875 = vmul.f32 %v1337, %v3840
      %v3876 = vmul.f32 %v1338, %v3844
      %v3877 = vmul.f32 %v1339, %v3840
      %v3878 = vmul.f32 %v1340, %v3844
      %v3879 = vmul.f32 %v1341, %v3840
      %v3880 = vmul.f32 %v1342, %v3844
      %v3881 = vmul.f32 %v1343, %v3840
      %v3882 = vmul.f32 %v1344, %v3844
      %v3883 = vmul.f32 %v1345, %v3840
      %v3884 = vmul.f32 %v1346, %v3844
      %v3885 = vmul.f32 %v1347, %v3840
      %v3886 = vmul.f32 %v1348, %v3844
      %v3887 = vmul.f32 %v1349, %v3840
      %v3888 = vmul.f32 %v1350, %v3844
      %v3889 = vmul.f32 %v1351, %v3840
      %v3890 = vmul.f32 %v1352, %v3844
      %v3891 = vmul.f32 %v1353, %v3840
      %v3892 = vmul.f32 %v1354, %v3844
      %v3893 = vmul.f32 %v1355, %v3840
      %v3894 = vmul.f32 %v1356, %v3844
      %v3895 = vmul.f32 %v1357, %v3840
      %v3896 = vmul.f32 %v1358, %v3844
      %v3897 = vmul.f32 %v1359, %v3840
      %v3898 = vmul.f32 %v1360, %v3844
      %v3899 = vmul.f32 %v1361, %v3840
      %v3900 = vmul.f32 %v1362, %v3844
      %v3901 = vmul.f32 %v1363, %v3840
      %v3902 = vmul.f32 %v1364, %v3844
      %v3903 = vmul.f32 %v1365, %v3840
      %v3904 = vmul.f32 %v1366, %v3844
      %v3905 = vmul.f32 %v1367, %v3840
      %v3906 = vmul.f32 %v1368, %v3844
      %v3907 = vmul.f32 %v1369, %v3840
      %v3908 = vmul.f32 %v1370, %v3844
      %v3909 = vmul.f32 %v1371, %v3840
      %v3910 = vmul.f32 %v1372, %v3844
      %v3911 = vmul.f32 %v1373, %v3840
      %v3912 = vmul.f32 %v1374, %v3844
      %v3913 = vmul.f32 %v1375, %v3840
      %v3914 = vmul.f32 %v1376, %v3844
      %v3915 = vmul.f32 %v1377, %v3840
      %v3916 = vmul.f32 %v1378, %v3844
      %v3917 = vmul.f32 %v1379, %v3840
      %v3918 = vmul.f32 %v1380, %v3844
      %v3919 = vmul.f32 %v1381, %v3840
      %v3920 = vmul.f32 %v1382, %v3844
      %v3921 = vmul.f32 %v1383, %v3840
      %v3922 = vmul.f32 %v1384, %v3844
      %v3923 = vmul.f32 %v1385, %v3840
      %v3924 = vmul.f32 %v1386, %v3844
      %v3925 = vmul.f32 %v1387, %v3840
      %v3926 = vmul.f32 %v1388, %v3844
      %v3927 = vmul.f32 %v1389, %v3840
      %v3928 = vmul.f32 %v1390, %v3844
      %v3929 = vmul.f32 %v1391, %v3840
      %v3930 = vmul.f32 %v1392, %v3844
      %v3931 = vmul.f32 %v1393, %v3840
      %v3932 = vmul.f32 %v1394, %v3844
      %v3933 = vmul.f32 %v1395, %v3840
      %v3934 = vmul.f32 %v1396, %v3844
      %v3935 = vmul.f32 %v1397, %v3840
      %v3936 = vmul.f32 %v1398, %v3844
      %v3937 = vmul.f32 %v1399, %v3840
      %v3938 = vmul.f32 %v1400, %v3844
      %v3939 = vmul.f32 %v1401, %v3840
      %v3940 = vmul.f32 %v1402, %v3844
      %v4037 = vrot.slane %v3845, 1
      %v4038 = vrot.slane %v3847, 1
      %v4039 = vsel %vm1811, %v4037, %v4038
      %v4040 = vrot.slane %v3846, 1
      %v4041 = vrot.slane %v3848, 1
      %v4042 = vsel %vm1811, %v4040, %v4041
      %v4043 = vrot.slane %v3849, 1
      %v4044 = vsel %vm1811, %v4038, %v4043
      %v4045 = vrot.slane %v3850, 1
      %v4046 = vsel %vm1811, %v4041, %v4045
      %v4047 = vrot.slane %v3851, 1
      %v4048 = vrot.slane %v3853, 1
      %v4049 = vsel %vm1811, %v4047, %v4048
      %v4050 = vrot.slane %v3852, 1
      %v4051 = vrot.slane %v3854, 1
      %v4052 = vsel %vm1811, %v4050, %v4051
      %v4053 = vrot.slane %v3855, 1
      %v4054 = vsel %vm1811, %v4048, %v4053
      %v4055 = vrot.slane %v3856, 1
      %v4056 = vsel %vm1811, %v4051, %v4055
      %v4057 = vrot.slane %v3857, 1
      %v4058 = vrot.slane %v3859, 1
      %v4059 = vsel %vm1811, %v4057, %v4058
      %v4060 = vrot.slane %v3858, 1
      %v4061 = vrot.slane %v3860, 1
      %v4062 = vsel %vm1811, %v4060, %v4061
      %v4063 = vrot.slane %v3861, 1
      %v4064 = vsel %vm1811, %v4058, %v4063
      %v4065 = vrot.slane %v3862, 1
      %v4066 = vsel %vm1811, %v4061, %v4065
      %v4067 = vrot.slane %v3863, 1
      %v4068 = vrot.slane %v3865, 1
      %v4069 = vsel %vm1811, %v4067, %v4068
      %v4070 = vrot.slane %v3864, 1
      %v4071 = vrot.slane %v3866, 1
      %v4072 = vsel %vm1811, %v4070, %v4071
      %v4073 = vrot.slane %v3867, 1
      %v4074 = vsel %vm1811, %v4068, %v4073
      %v4075 = vrot.slane %v3868, 1
      %v4076 = vsel %vm1811, %v4071, %v4075
      %v4077 = vrot.slane %v3869, 1
      %v4078 = vrot.slane %v3871, 1
      %v4079 = vsel %vm1811, %v4077, %v4078
      %v4080 = vrot.slane %v3870, 1
      %v4081 = vrot.slane %v3872, 1
      %v4082 = vsel %vm1811, %v4080, %v4081
      %v4083 = vrot.slane %v3873, 1
      %v4084 = vsel %vm1811, %v4078, %v4083
      %v4085 = vrot.slane %v3874, 1
      %v4086 = vsel %vm1811, %v4081, %v4085
      %v4087 = vrot.slane %v3875, 1
      %v4088 = vrot.slane %v3877, 1
      %v4089 = vsel %vm1811, %v4087, %v4088
      %v4090 = vrot.slane %v3876, 1
      %v4091 = vrot.slane %v3878, 1
      %v4092 = vsel %vm1811, %v4090, %v4091
      %v4093 = vrot.slane %v3879, 1
      %v4094 = vsel %vm1811, %v4088, %v4093
      %v4095 = vrot.slane %v3880, 1
      %v4096 = vsel %vm1811, %v4091, %v4095
      %v4097 = vrot.slane %v3881, 1
      %v4098 = vrot.slane %v3883, 1
      %v4099 = vsel %vm1811, %v4097, %v4098
      %v4100 = vrot.slane %v3882, 1
      %v4101 = vrot.slane %v3884, 1
      %v4102 = vsel %vm1811, %v4100, %v4101
      %v4103 = vrot.slane %v3885, 1
      %v4104 = vsel %vm1811, %v4098, %v4103
      %v4105 = vrot.slane %v3886, 1
      %v4106 = vsel %vm1811, %v4101, %v4105
      %v4107 = vrot.slane %v3887, 1
      %v4108 = vrot.slane %v3889, 1
      %v4109 = vsel %vm1811, %v4107, %v4108
      %v4110 = vrot.slane %v3888, 1
      %v4111 = vrot.slane %v3890, 1
      %v4112 = vsel %vm1811, %v4110, %v4111
      %v4113 = vrot.slane %v3891, 1
      %v4114 = vsel %vm1811, %v4108, %v4113
      %v4115 = vrot.slane %v3892, 1
      %v4116 = vsel %vm1811, %v4111, %v4115
      %v4117 = vrot.slane %v3893, 1
      %v4118 = vrot.slane %v3895, 1
      %v4119 = vsel %vm1811, %v4117, %v4118
      %v4120 = vrot.slane %v3894, 1
      %v4121 = vrot.slane %v3896, 1
      %v4122 = vsel %vm1811, %v4120, %v4121
      %v4123 = vrot.slane %v3897, 1
      %v4124 = vsel %vm1811, %v4118, %v4123
      %v4125 = vrot.slane %v3898, 1
      %v4126 = vsel %vm1811, %v4121, %v4125
      %v4127 = vrot.slane %v3899, 1
      %v4128 = vrot.slane %v3901, 1
      %v4129 = vsel %vm1811, %v4127, %v4128
      %v4130 = vrot.slane %v3900, 1
      %v4131 = vrot.slane %v3902, 1
      %v4132 = vsel %vm1811, %v4130, %v4131
      %v4133 = vrot.slane %v3903, 1
      %v4134 = vsel %vm1811, %v4128, %v4133
      %v4135 = vrot.slane %v3904, 1
      %v4136 = vsel %vm1811, %v4131, %v4135
      %v4137 = vrot.slane %v3905, 1
      %v4138 = vrot.slane %v3907, 1
      %v4139 = vsel %vm1811, %v4137, %v4138
      %v4140 = vrot.slane %v3906, 1
      %v4141 = vrot.slane %v3908, 1
      %v4142 = vsel %vm1811, %v4140, %v4141
      %v4143 = vrot.slane %v3909, 1
      %v4144 = vsel %vm1811, %v4138, %v4143
      %v4145 = vrot.slane %v3910, 1
      %v4146 = vsel %vm1811, %v4141, %v4145
      %v4147 = vrot.slane %v3911, 1
      %v4148 = vrot.slane %v3913, 1
      %v4149 = vsel %vm1811, %v4147, %v4148
      %v4150 = vrot.slane %v3912, 1
      %v4151 = vrot.slane %v3914, 1
      %v4152 = vsel %vm1811, %v4150, %v4151
      %v4153 = vrot.slane %v3915, 1
      %v4154 = vsel %vm1811, %v4148, %v4153
      %v4155 = vrot.slane %v3916, 1
      %v4156 = vsel %vm1811, %v4151, %v4155
      %v4157 = vrot.slane %v3917, 1
      %v4158 = vrot.slane %v3919, 1
      %v4159 = vsel %vm1811, %v4157, %v4158
      %v4160 = vrot.slane %v3918, 1
      %v4161 = vrot.slane %v3920, 1
      %v4162 = vsel %vm1811, %v4160, %v4161
      %v4163 = vrot.slane %v3921, 1
      %v4164 = vsel %vm1811, %v4158, %v4163
      %v4165 = vrot.slane %v3922, 1
      %v4166 = vsel %vm1811, %v4161, %v4165
      %v4167 = vrot.slane %v3923, 1
      %v4168 = vrot.slane %v3925, 1
      %v4169 = vsel %vm1811, %v4167, %v4168
      %v4170 = vrot.slane %v3924, 1
      %v4171 = vrot.slane %v3926, 1
      %v4172 = vsel %vm1811, %v4170, %v4171
      %v4173 = vrot.slane %v3927, 1
      %v4174 = vsel %vm1811, %v4168, %v4173
      %v4175 = vrot.slane %v3928, 1
      %v4176 = vsel %vm1811, %v4171, %v4175
      %v4177 = vrot.slane %v3929, 1
      %v4178 = vrot.slane %v3931, 1
      %v4179 = vsel %vm1811, %v4177, %v4178
      %v4180 = vrot.slane %v3930, 1
      %v4181 = vrot.slane %v3932, 1
      %v4182 = vsel %vm1811, %v4180, %v4181
      %v4183 = vrot.slane %v3933, 1
      %v4184 = vsel %vm1811, %v4178, %v4183
      %v4185 = vrot.slane %v3934, 1
      %v4186 = vsel %vm1811, %v4181, %v4185
      %v4187 = vrot.slane %v3935, 1
      %v4188 = vrot.slane %v3937, 1
      %v4189 = vsel %vm1811, %v4187, %v4188
      %v4190 = vrot.slane %v3936, 1
      %v4191 = vrot.slane %v3938, 1
      %v4192 = vsel %vm1811, %v4190, %v4191
      %v4193 = vrot.slane %v3939, 1
      %v4194 = vsel %vm1811, %v4188, %v4193
      %v4195 = vrot.slane %v3940, 1
      %v4196 = vsel %vm1811, %v4191, %v4195
      %v4261 = vadd.f32 %v3773, %v4039
      %v4262 = vadd.f32 %v3774, %v4042
      %v4263 = vadd.f32 %v3775, %v4044
      %v4264 = vadd.f32 %v3776, %v4046
      %v4265 = vadd.f32 %v3777, %v4049
      %v4266 = vadd.f32 %v3778, %v4052
      %v4267 = vadd.f32 %v3779, %v4054
      %v4268 = vadd.f32 %v3780, %v4056
      %v4269 = vadd.f32 %v3781, %v4059
      %v4270 = vadd.f32 %v3782, %v4062
      %v4271 = vadd.f32 %v3783, %v4064
      %v4272 = vadd.f32 %v3784, %v4066
      %v4273 = vadd.f32 %v3785, %v4069
      %v4274 = vadd.f32 %v3786, %v4072
      %v4275 = vadd.f32 %v3787, %v4074
      %v4276 = vadd.f32 %v3788, %v4076
      %v4277 = vadd.f32 %v3789, %v4079
      %v4278 = vadd.f32 %v3790, %v4082
      %v4279 = vadd.f32 %v3791, %v4084
      %v4280 = vadd.f32 %v3792, %v4086
      %v4281 = vadd.f32 %v3793, %v4089
      %v4282 = vadd.f32 %v3794, %v4092
      %v4283 = vadd.f32 %v3795, %v4094
      %v4284 = vadd.f32 %v3796, %v4096
      %v4285 = vadd.f32 %v3797, %v4099
      %v4286 = vadd.f32 %v3798, %v4102
      %v4287 = vadd.f32 %v3799, %v4104
      %v4288 = vadd.f32 %v3800, %v4106
      %v4289 = vadd.f32 %v3801, %v4109
      %v4290 = vadd.f32 %v3802, %v4112
      %v4291 = vadd.f32 %v3803, %v4114
      %v4292 = vadd.f32 %v3804, %v4116
      %v4293 = vadd.f32 %v3805, %v4119
      %v4294 = vadd.f32 %v3806, %v4122
      %v4295 = vadd.f32 %v3807, %v4124
      %v4296 = vadd.f32 %v3808, %v4126
      %v4297 = vadd.f32 %v3809, %v4129
      %v4298 = vadd.f32 %v3810, %v4132
      %v4299 = vadd.f32 %v3811, %v4134
      %v4300 = vadd.f32 %v3812, %v4136
      %v4301 = vadd.f32 %v3813, %v4139
      %v4302 = vadd.f32 %v3814, %v4142
      %v4303 = vadd.f32 %v3815, %v4144
      %v4304 = vadd.f32 %v3816, %v4146
      %v4305 = vadd.f32 %v3817, %v4149
      %v4306 = vadd.f32 %v3818, %v4152
      %v4307 = vadd.f32 %v3819, %v4154
      %v4308 = vadd.f32 %v3820, %v4156
      %v4309 = vadd.f32 %v3821, %v4159
      %v4310 = vadd.f32 %v3822, %v4162
      %v4311 = vadd.f32 %v3823, %v4164
      %v4312 = vadd.f32 %v3824, %v4166
      %v4313 = vadd.f32 %v3825, %v4169
      %v4314 = vadd.f32 %v3826, %v4172
      %v4315 = vadd.f32 %v3827, %v4174
      %v4316 = vadd.f32 %v3828, %v4176
      %v4317 = vadd.f32 %v3829, %v4179
      %v4318 = vadd.f32 %v3830, %v4182
      %v4319 = vadd.f32 %v3831, %v4184
      %v4320 = vadd.f32 %v3832, %v4186
      %v4321 = vadd.f32 %v3833, %v4189
      %v4322 = vadd.f32 %v3834, %v4192
      %v4323 = vadd.f32 %v3835, %v4194
      %v4324 = vadd.f32 %v3836, %v4196
      %v4325 = vlaneseq
      %v4326 = vshrl.u32 %v4325, 7
      %v4327 = vsub.s32 0, %v4326
      %v4328 = vrot.slane %v1221, %v4327
      %v4329 = vlaneseq
      %v4330 = vshrl.u32 %v4329, 7
      %v4331 = vsub.s32 0, %v4330
      %v4332 = vrot.slane %v1222, %v4331
      %v4333 = vmul.f32 %v1411, %v4328
      %v4334 = vmul.f32 %v1412, %v4332
      %v4335 = vmul.f32 %v1309, %v4328
      %v4336 = vmul.f32 %v1310, %v4332
      %v4337 = vmul.f32 %v1413, %v4328
      %v4338 = vmul.f32 %v1414, %v4332
      %v4339 = vmul.f32 %v1415, %v4328
      %v4340 = vmul.f32 %v1416, %v4332
      %v4341 = vmul.f32 %v1315, %v4328
      %v4342 = vmul.f32 %v1316, %v4332
      %v4343 = vmul.f32 %v1417, %v4328
      %v4344 = vmul.f32 %v1418, %v4332
      %v4345 = vmul.f32 %v1419, %v4328
      %v4346 = vmul.f32 %v1420, %v4332
      %v4347 = vmul.f32 %v1321, %v4328
      %v4348 = vmul.f32 %v1322, %v4332
      %v4349 = vmul.f32 %v1421, %v4328
      %v4350 = vmul.f32 %v1422, %v4332
      %v4351 = vmul.f32 %v1423, %v4328
      %v4352 = vmul.f32 %v1424, %v4332
      %v4353 = vmul.f32 %v1327, %v4328
      %v4354 = vmul.f32 %v1328, %v4332
      %v4355 = vmul.f32 %v1425, %v4328
      %v4356 = vmul.f32 %v1426, %v4332
      %v4357 = vmul.f32 %v1427, %v4328
      %v4358 = vmul.f32 %v1428, %v4332
      %v4359 = vmul.f32 %v1333, %v4328
      %v4360 = vmul.f32 %v1334, %v4332
      %v4361 = vmul.f32 %v1429, %v4328
      %v4362 = vmul.f32 %v1430, %v4332
      %v4363 = vmul.f32 %v1431, %v4328
      %v4364 = vmul.f32 %v1432, %v4332
      %v4365 = vmul.f32 %v1339, %v4328
      %v4366 = vmul.f32 %v1340, %v4332
      %v4367 = vmul.f32 %v1433, %v4328
      %v4368 = vmul.f32 %v1434, %v4332
      %v4369 = vmul.f32 %v1435, %v4328
      %v4370 = vmul.f32 %v1436, %v4332
      %v4371 = vmul.f32 %v1345, %v4328
      %v4372 = vmul.f32 %v1346, %v4332
      %v4373 = vmul.f32 %v1437, %v4328
      %v4374 = vmul.f32 %v1438, %v4332
      %v4375 = vmul.f32 %v1439, %v4328
      %v4376 = vmul.f32 %v1440, %v4332
      %v4377 = vmul.f32 %v1351, %v4328
      %v4378 = vmul.f32 %v1352, %v4332
      %v4379 = vmul.f32 %v1441, %v4328
      %v4380 = vmul.f32 %v1442, %v4332
      %v4381 = vmul.f32 %v1443, %v4328
      %v4382 = vmul.f32 %v1444, %v4332
      %v4383 = vmul.f32 %v1357, %v4328
      %v4384 = vmul.f32 %v1358, %v4332
      %v4385 = vmul.f32 %v1445, %v4328
      %v4386 = vmul.f32 %v1446, %v4332
      %v4387 = vmul.f32 %v1447, %v4328
      %v4388 = vmul.f32 %v1448, %v4332
      %v4389 = vmul.f32 %v1363, %v4328
      %v4390 = vmul.f32 %v1364, %v4332
      %v4391 = vmul.f32 %v1449, %v4328
      %v4392 = vmul.f32 %v1450, %v4332
      %v4393 = vmul.f32 %v1451, %v4328
      %v4394 = vmul.f32 %v1452, %v4332
      %v4395 = vmul.f32 %v1369, %v4328
      %v4396 = vmul.f32 %v1370, %v4332
      %v4397 = vmul.f32 %v1453, %v4328
      %v4398 = vmul.f32 %v1454, %v4332
      %v4399 = vmul.f32 %v1455, %v4328
      %v4400 = vmul.f32 %v1456, %v4332
      %v4401 = vmul.f32 %v1375, %v4328
      %v4402 = vmul.f32 %v1376, %v4332
      %v4403 = vmul.f32 %v1457, %v4328
      %v4404 = vmul.f32 %v1458, %v4332
      %v4405 = vmul.f32 %v1459, %v4328
      %v4406 = vmul.f32 %v1460, %v4332
      %v4407 = vmul.f32 %v1381, %v4328
      %v4408 = vmul.f32 %v1382, %v4332
      %v4409 = vmul.f32 %v1461, %v4328
      %v4410 = vmul.f32 %v1462, %v4332
      %v4411 = vmul.f32 %v1463, %v4328
      %v4412 = vmul.f32 %v1464, %v4332
      %v4413 = vmul.f32 %v1387, %v4328
      %v4414 = vmul.f32 %v1388, %v4332
      %v4415 = vmul.f32 %v1465, %v4328
      %v4416 = vmul.f32 %v1466, %v4332
      %v4417 = vmul.f32 %v1467, %v4328
      %v4418 = vmul.f32 %v1468, %v4332
      %v4419 = vmul.f32 %v1393, %v4328
      %v4420 = vmul.f32 %v1394, %v4332
      %v4421 = vmul.f32 %v1469, %v4328
      %v4422 = vmul.f32 %v1470, %v4332
      %v4423 = vmul.f32 %v1471, %v4328
      %v4424 = vmul.f32 %v1472, %v4332
      %v4425 = vmul.f32 %v1399, %v4328
      %v4426 = vmul.f32 %v1400, %v4332
      %v4427 = vmul.f32 %v1473, %v4328
      %v4428 = vmul.f32 %v1474, %v4332
      %v4525 = vrot.slane %v4333, 2
      %v4526 = vrot.slane %v4335, 2
      %v4527 = vsel %vm2300, %v4525, %v4526
      %v4528 = vrot.slane %v4334, 2
      %v4529 = vrot.slane %v4336, 2
      %v4530 = vsel %vm2300, %v4528, %v4529
      %v4531 = vrot.slane %v4337, 2
      %v4532 = vsel %vm2300, %v4526, %v4531
      %v4533 = vrot.slane %v4338, 2
      %v4534 = vsel %vm2300, %v4529, %v4533
      %v4535 = vrot.slane %v4339, 2
      %v4536 = vrot.slane %v4341, 2
      %v4537 = vsel %vm2300, %v4535, %v4536
      %v4538 = vrot.slane %v4340, 2
      %v4539 = vrot.slane %v4342, 2
      %v4540 = vsel %vm2300, %v4538, %v4539
      %v4541 = vrot.slane %v4343, 2
      %v4542 = vsel %vm2300, %v4536, %v4541
      %v4543 = vrot.slane %v4344, 2
      %v4544 = vsel %vm2300, %v4539, %v4543
      %v4545 = vrot.slane %v4345, 2
      %v4546 = vrot.slane %v4347, 2
      %v4547 = vsel %vm2300, %v4545, %v4546
      %v4548 = vrot.slane %v4346, 2
      %v4549 = vrot.slane %v4348, 2
      %v4550 = vsel %vm2300, %v4548, %v4549
      %v4551 = vrot.slane %v4349, 2
      %v4552 = vsel %vm2300, %v4546, %v4551
      %v4553 = vrot.slane %v4350, 2
      %v4554 = vsel %vm2300, %v4549, %v4553
      %v4555 = vrot.slane %v4351, 2
      %v4556 = vrot.slane %v4353, 2
      %v4557 = vsel %vm2300, %v4555, %v4556
      %v4558 = vrot.slane %v4352, 2
      %v4559 = vrot.slane %v4354, 2
      %v4560 = vsel %vm2300, %v4558, %v4559
      %v4561 = vrot.slane %v4355, 2
      %v4562 = vsel %vm2300, %v4556, %v4561
      %v4563 = vrot.slane %v4356, 2
      %v4564 = vsel %vm2300, %v4559, %v4563
      %v4565 = vrot.slane %v4357, 2
      %v4566 = vrot.slane %v4359, 2
      %v4567 = vsel %vm2300, %v4565, %v4566
      %v4568 = vrot.slane %v4358, 2
      %v4569 = vrot.slane %v4360, 2
      %v4570 = vsel %vm2300, %v4568, %v4569
      %v4571 = vrot.slane %v4361, 2
      %v4572 = vsel %vm2300, %v4566, %v4571
      %v4573 = vrot.slane %v4362, 2
      %v4574 = vsel %vm2300, %v4569, %v4573
      %v4575 = vrot.slane %v4363, 2
      %v4576 = vrot.slane %v4365, 2
      %v4577 = vsel %vm2300, %v4575, %v4576
      %v4578 = vrot.slane %v4364, 2
      %v4579 = vrot.slane %v4366, 2
      %v4580 = vsel %vm2300, %v4578, %v4579
      %v4581 = vrot.slane %v4367, 2
      %v4582 = vsel %vm2300, %v4576, %v4581
      %v4583 = vrot.slane %v4368, 2
      %v4584 = vsel %vm2300, %v4579, %v4583
      %v4585 = vrot.slane %v4369, 2
      %v4586 = vrot.slane %v4371, 2
      %v4587 = vsel %vm2300, %v4585, %v4586
      %v4588 = vrot.slane %v4370, 2
      %v4589 = vrot.slane %v4372, 2
      %v4590 = vsel %vm2300, %v4588, %v4589
      %v4591 = vrot.slane %v4373, 2
      %v4592 = vsel %vm2300, %v4586, %v4591
      %v4593 = vrot.slane %v4374, 2
      %v4594 = vsel %vm2300, %v4589, %v4593
      %v4595 = vrot.slane %v4375, 2
      %v4596 = vrot.slane %v4377, 2
      %v4597 = vsel %vm2300, %v4595, %v4596
      %v4598 = vrot.slane %v4376, 2
      %v4599 = vrot.slane %v4378, 2
      %v4600 = vsel %vm2300, %v4598, %v4599
      %v4601 = vrot.slane %v4379, 2
      %v4602 = vsel %vm2300, %v4596, %v4601
      %v4603 = vrot.slane %v4380, 2
      %v4604 = vsel %vm2300, %v4599, %v4603
      %v4605 = vrot.slane %v4381, 2
      %v4606 = vrot.slane %v4383, 2
      %v4607 = vsel %vm2300, %v4605, %v4606
      %v4608 = vrot.slane %v4382, 2
      %v4609 = vrot.slane %v4384, 2
      %v4610 = vsel %vm2300, %v4608, %v4609
      %v4611 = vrot.slane %v4385, 2
      %v4612 = vsel %vm2300, %v4606, %v4611
      %v4613 = vrot.slane %v4386, 2
      %v4614 = vsel %vm2300, %v4609, %v4613
      %v4615 = vrot.slane %v4387, 2
      %v4616 = vrot.slane %v4389, 2
      %v4617 = vsel %vm2300, %v4615, %v4616
      %v4618 = vrot.slane %v4388, 2
      %v4619 = vrot.slane %v4390, 2
      %v4620 = vsel %vm2300, %v4618, %v4619
      %v4621 = vrot.slane %v4391, 2
      %v4622 = vsel %vm2300, %v4616, %v4621
      %v4623 = vrot.slane %v4392, 2
      %v4624 = vsel %vm2300, %v4619, %v4623
      %v4625 = vrot.slane %v4393, 2
      %v4626 = vrot.slane %v4395, 2
      %v4627 = vsel %vm2300, %v4625, %v4626
      %v4628 = vrot.slane %v4394, 2
      %v4629 = vrot.slane %v4396, 2
      %v4630 = vsel %vm2300, %v4628, %v4629
      %v4631 = vrot.slane %v4397, 2
      %v4632 = vsel %vm2300, %v4626, %v4631
      %v4633 = vrot.slane %v4398, 2
      %v4634 = vsel %vm2300, %v4629, %v4633
      %v4635 = vrot.slane %v4399, 2
      %v4636 = vrot.slane %v4401, 2
      %v4637 = vsel %vm2300, %v4635, %v4636
      %v4638 = vrot.slane %v4400, 2
      %v4639 = vrot.slane %v4402, 2
      %v4640 = vsel %vm2300, %v4638, %v4639
      %v4641 = vrot.slane %v4403, 2
      %v4642 = vsel %vm2300, %v4636, %v4641
      %v4643 = vrot.slane %v4404, 2
      %v4644 = vsel %vm2300, %v4639, %v4643
      %v4645 = vrot.slane %v4405, 2
      %v4646 = vrot.slane %v4407, 2
      %v4647 = vsel %vm2300, %v4645, %v4646
      %v4648 = vrot.slane %v4406, 2
      %v4649 = vrot.slane %v4408, 2
      %v4650 = vsel %vm2300, %v4648, %v4649
      %v4651 = vrot.slane %v4409, 2
      %v4652 = vsel %vm2300, %v4646, %v4651
      %v4653 = vrot.slane %v4410, 2
      %v4654 = vsel %vm2300, %v4649, %v4653
      %v4655 = vrot.slane %v4411, 2
      %v4656 = vrot.slane %v4413, 2
      %v4657 = vsel %vm2300, %v4655, %v4656
      %v4658 = vrot.slane %v4412, 2
      %v4659 = vrot.slane %v4414, 2
      %v4660 = vsel %vm2300, %v4658, %v4659
      %v4661 = vrot.slane %v4415, 2
      %v4662 = vsel %vm2300, %v4656, %v4661
      %v4663 = vrot.slane %v4416, 2
      %v4664 = vsel %vm2300, %v4659, %v4663
      %v4665 = vrot.slane %v4417, 2
      %v4666 = vrot.slane %v4419, 2
      %v4667 = vsel %vm2300, %v4665, %v4666
      %v4668 = vrot.slane %v4418, 2
      %v4669 = vrot.slane %v4420, 2
      %v4670 = vsel %vm2300, %v4668, %v4669
      %v4671 = vrot.slane %v4421, 2
      %v4672 = vsel %vm2300, %v4666, %v4671
      %v4673 = vrot.slane %v4422, 2
      %v4674 = vsel %vm2300, %v4669, %v4673
      %v4675 = vrot.slane %v4423, 2
      %v4676 = vrot.slane %v4425, 2
      %v4677 = vsel %vm2300, %v4675, %v4676
      %v4678 = vrot.slane %v4424, 2
      %v4679 = vrot.slane %v4426, 2
      %v4680 = vsel %vm2300, %v4678, %v4679
      %v4681 = vrot.slane %v4427, 2
      %v4682 = vsel %vm2300, %v4676, %v4681
      %v4683 = vrot.slane %v4428, 2
      %v4684 = vsel %vm2300, %v4679, %v4683
      %v4749 = vadd.f32 %v4261, %v4527
      %v4750 = vadd.f32 %v4262, %v4530
      %v4751 = vadd.f32 %v4263, %v4532
      %v4752 = vadd.f32 %v4264, %v4534
      %v4753 = vadd.f32 %v4265, %v4537
      %v4754 = vadd.f32 %v4266, %v4540
      %v4755 = vadd.f32 %v4267, %v4542
      %v4756 = vadd.f32 %v4268, %v4544
      %v4757 = vadd.f32 %v4269, %v4547
      %v4758 = vadd.f32 %v4270, %v4550
      %v4759 = vadd.f32 %v4271, %v4552
      %v4760 = vadd.f32 %v4272, %v4554
      %v4761 = vadd.f32 %v4273, %v4557
      %v4762 = vadd.f32 %v4274, %v4560
      %v4763 = vadd.f32 %v4275, %v4562
      %v4764 = vadd.f32 %v4276, %v4564
      %v4765 = vadd.f32 %v4277, %v4567
      %v4766 = vadd.f32 %v4278, %v4570
      %v4767 = vadd.f32 %v4279, %v4572
      %v4768 = vadd.f32 %v4280, %v4574
      %v4769 = vadd.f32 %v4281, %v4577
      %v4770 = vadd.f32 %v4282, %v4580
      %v4771 = vadd.f32 %v4283, %v4582
      %v4772 = vadd.f32 %v4284, %v4584
      %v4773 = vadd.f32 %v4285, %v4587
      %v4774 = vadd.f32 %v4286, %v4590
      %v4775 = vadd.f32 %v4287, %v4592
      %v4776 = vadd.f32 %v4288, %v4594
      %v4777 = vadd.f32 %v4289, %v4597
      %v4778 = vadd.f32 %v4290, %v4600
      %v4779 = vadd.f32 %v4291, %v4602
      %v4780 = vadd.f32 %v4292, %v4604
      %v4781 = vadd.f32 %v4293, %v4607
      %v4782 = vadd.f32 %v4294, %v4610
      %v4783 = vadd.f32 %v4295, %v4612
      %v4784 = vadd.f32 %v4296, %v4614
      %v4785 = vadd.f32 %v4297, %v4617
      %v4786 = vadd.f32 %v4298, %v4620
      %v4787 = vadd.f32 %v4299, %v4622
      %v4788 = vadd.f32 %v4300, %v4624
      %v4789 = vadd.f32 %v4301, %v4627
      %v4790 = vadd.f32 %v4302, %v4630
      %v4791 = vadd.f32 %v4303, %v4632
      %v4792 = vadd.f32 %v4304, %v4634
      %v4793 = vadd.f32 %v4305, %v4637
      %v4794 = vadd.f32 %v4306, %v4640
      %v4795 = vadd.f32 %v4307, %v4642
      %v4796 = vadd.f32 %v4308, %v4644
      %v4797 = vadd.f32 %v4309, %v4647
      %v4798 = vadd.f32 %v4310, %v4650
      %v4799 = vadd.f32 %v4311, %v4652
      %v4800 = vadd.f32 %v4312, %v4654
      %v4801 = vadd.f32 %v4313, %v4657
      %v4802 = vadd.f32 %v4314, %v4660
      %v4803 = vadd.f32 %v4315, %v4662
      %v4804 = vadd.f32 %v4316, %v4664
      %v4805 = vadd.f32 %v4317, %v4667
      %v4806 = vadd.f32 %v4318, %v4670
      %v4807 = vadd.f32 %v4319, %v4672
      %v4808 = vadd.f32 %v4320, %v4674
      %v4809 = vadd.f32 %v4321, %v4677
      %v4810 = vadd.f32 %v4322, %v4680
      %v4811 = vadd.f32 %v4323, %v4682
      %v4812 = vadd.f32 %v4324, %v4684
      %v4813 = vld [vmem:[%s4] sm:$0x3]
      %v4815 = vlaneseq
      %v4816 = vshrl.u32 %v4815, 7
      %v4817 = vsub.s32 0, %v4816
      %v4818 = vrot.slane %v4813, %v4817
      %v4819 = vlaneseq
      %v4820 = vshrl.u32 %v4819, 7
      %v4821 = vsub.s32 1, %v4820
      %v4822 = vrot.slane %v4813, %v4821
      %v4825 = vadd.f32 %v4749, %v4818
      %v4826 = vadd.f32 %v4750, %v4822
      %v4827 = vadd.f32 %v4751, %v4818
      %v4828 = vadd.f32 %v4752, %v4822
      %v4829 = vadd.f32 %v4753, %v4818
      %v4830 = vadd.f32 %v4754, %v4822
      %v4831 = vadd.f32 %v4755, %v4818
      %v4832 = vadd.f32 %v4756, %v4822
      %v4833 = vadd.f32 %v4757, %v4818
      %v4834 = vadd.f32 %v4758, %v4822
      %v4835 = vadd.f32 %v4759, %v4818
      %v4836 = vadd.f32 %v4760, %v4822
      %v4837 = vadd.f32 %v4761, %v4818
      %v4838 = vadd.f32 %v4762, %v4822
      %v4839 = vadd.f32 %v4763, %v4818
      %v4840 = vadd.f32 %v4764, %v4822
      %v4841 = vadd.f32 %v4765, %v4818
      %v4842 = vadd.f32 %v4766, %v4822
      %v4843 = vadd.f32 %v4767, %v4818
      %v4844 = vadd.f32 %v4768, %v4822
      %v4845 = vadd.f32 %v4769, %v4818
      %v4846 = vadd.f32 %v4770, %v4822
      %v4847 = vadd.f32 %v4771, %v4818
      %v4848 = vadd.f32 %v4772, %v4822
      %v4849 = vadd.f32 %v4773, %v4818
      %v4850 = vadd.f32 %v4774, %v4822
      %v4851 = vadd.f32 %v4775, %v4818
      %v4852 = vadd.f32 %v4776, %v4822
      %v4853 = vadd.f32 %v4777, %v4818
      %v4854 = vadd.f32 %v4778, %v4822
      %v4855 = vadd.f32 %v4779, %v4818
      %v4856 = vadd.f32 %v4780, %v4822
      %v4857 = vadd.f32 %v4781, %v4818
      %v4858 = vadd.f32 %v4782, %v4822
      %v4859 = vadd.f32 %v4783, %v4818
      %v4860 = vadd.f32 %v4784, %v4822
      %v4861 = vadd.f32 %v4785, %v4818
      %v4862 = vadd.f32 %v4786, %v4822
      %v4863 = vadd.f32 %v4787, %v4818
      %v4864 = vadd.f32 %v4788, %v4822
      %v4865 = vadd.f32 %v4789, %v4818
      %v4866 = vadd.f32 %v4790, %v4822
      %v4867 = vadd.f32 %v4791, %v4818
      %v4868 = vadd.f32 %v4792, %v4822
      %v4869 = vadd.f32 %v4793, %v4818
      %v4870 = vadd.f32 %v4794, %v4822
      %v4871 = vadd.f32 %v4795, %v4818
      %v4872 = vadd.f32 %v4796, %v4822
      %v4873 = vadd.f32 %v4797, %v4818
      %v4874 = vadd.f32 %v4798, %v4822
      %v4875 = vadd.f32 %v4799, %v4818
      %v4876 = vadd.f32 %v4800, %v4822
      %v4877 = vadd.f32 %v4801, %v4818
      %v4878 = vadd.f32 %v4802, %v4822
      %v4879 = vadd.f32 %v4803, %v4818
      %v4880 = vadd.f32 %v4804, %v4822
      %v4881 = vadd.f32 %v4805, %v4818
      %v4882 = vadd.f32 %v4806, %v4822
      %v4883 = vadd.f32 %v4807, %v4818
      %v4884 = vadd.f32 %v4808, %v4822
      %v4885 = vadd.f32 %v4809, %v4818
      %v4886 = vadd.f32 %v4810, %v4822
      %v4887 = vadd.f32 %v4811, %v4818
      %v4888 = vadd.f32 %v4812, %v4822
      %v4889 = vmax.f32 %v4825, 0.0
      %v4890 = vmax.f32 %v4826, 0.0
      %v4891 = vmax.f32 %v4827, 0.0
      %v4892 = vmax.f32 %v4828, 0.0
      %v4893 = vmax.f32 %v4829, 0.0
      %v4894 = vmax.f32 %v4830, 0.0
      %v4895 = vmax.f32 %v4831, 0.0
      %v4896 = vmax.f32 %v4832, 0.0
      %v4897 = vmax.f32 %v4833, 0.0
      %v4898 = vmax.f32 %v4834, 0.0
      %v4899 = vmax.f32 %v4835, 0.0
      %v4900 = vmax.f32 %v4836, 0.0
      %v4901 = vmax.f32 %v4837, 0.0
      %v4902 = vmax.f32 %v4838, 0.0
      %v4903 = vmax.f32 %v4839, 0.0
      %v4904 = vmax.f32 %v4840, 0.0
      %v4905 = vmax.f32 %v4841, 0.0
      %v4906 = vmax.f32 %v4842, 0.0
      %v4907 = vmax.f32 %v4843, 0.0
      %v4908 = vmax.f32 %v4844, 0.0
      %v4909 = vmax.f32 %v4845, 0.0
      %v4910 = vmax.f32 %v4846, 0.0
      %v4911 = vmax.f32 %v4847, 0.0
      %v4912 = vmax.f32 %v4848, 0.0
      %v4913 = vmax.f32 %v4849, 0.0
      %v4914 = vmax.f32 %v4850, 0.0
      %v4915 = vmax.f32 %v4851, 0.0
      %v4916 = vmax.f32 %v4852, 0.0
      %v4917 = vmax.f32 %v4853, 0.0
      %v4918 = vmax.f32 %v4854, 0.0
      %v4919 = vmax.f32 %v4855, 0.0
      %v4920 = vmax.f32 %v4856, 0.0
      %v4921 = vmax.f32 %v4857, 0.0
      %v4922 = vmax.f32 %v4858, 0.0
      %v4923 = vmax.f32 %v4859, 0.0
      %v4924 = vmax.f32 %v4860, 0.0
      %v4925 = vmax.f32 %v4861, 0.0
      %v4926 = vmax.f32 %v4862, 0.0
      %v4927 = vmax.f32 %v4863, 0.0
      %v4928 = vmax.f32 %v4864, 0.0
      %v4929 = vmax.f32 %v4865, 0.0
      %v4930 = vmax.f32 %v4866, 0.0
      %v4931 = vmax.f32 %v4867, 0.0
      %v4932 = vmax.f32 %v4868, 0.0
      %v4933 = vmax.f32 %v4869, 0.0
      %v4934 = vmax.f32 %v4870, 0.0
      %v4935 = vmax.f32 %v4871, 0.0
      %v4936 = vmax.f32 %v4872, 0.0
      %v4937 = vmax.f32 %v4873, 0.0
      %v4938 = vmax.f32 %v4874, 0.0
      %v4939 = vmax.f32 %v4875, 0.0
      %v4940 = vmax.f32 %v4876, 0.0
      %v4941 = vmax.f32 %v4877, 0.0
      %v4942 = vmax.f32 %v4878, 0.0
      %v4943 = vmax.f32 %v4879, 0.0
      %v4944 = vmax.f32 %v4880, 0.0
      %v4945 = vmax.f32 %v4881, 0.0
      %v4946 = vmax.f32 %v4882, 0.0
      %v4947 = vmax.f32 %v4883, 0.0
      %v4948 = vmax.f32 %v4884, 0.0
      %v4949 = vmax.f32 %v4885, 0.0
      %v4950 = vmax.f32 %v4886, 0.0
      %v4951 = vmax.f32 %v4887, 0.0
      %v4952 = vmax.f32 %v4888, 0.0
      %v4953 = vmin.f32 %v4889, 6.0
      %v4954 = vmin.f32 %v4890, 6.0
      %v4955 = vmin.f32 %v4891, 6.0
      %v4956 = vmin.f32 %v4892, 6.0
      %v4957 = vmin.f32 %v4893, 6.0
      %v4958 = vmin.f32 %v4894, 6.0
      %v4959 = vmin.f32 %v4895, 6.0
      %v4960 = vmin.f32 %v4896, 6.0
      %v4961 = vmin.f32 %v4897, 6.0
      %v4962 = vmin.f32 %v4898, 6.0
      %v4963 = vmin.f32 %v4899, 6.0
      %v4964 = vmin.f32 %v4900, 6.0
      %v4965 = vmin.f32 %v4901, 6.0
      %v4966 = vmin.f32 %v4902, 6.0
      %v4967 = vmin.f32 %v4903, 6.0
      %v4968 = vmin.f32 %v4904, 6.0
      %v4969 = vmin.f32 %v4905, 6.0
      %v4970 = vmin.f32 %v4906, 6.0
      %v4971 = vmin.f32 %v4907, 6.0
      %v4972 = vmin.f32 %v4908, 6.0
      %v4973 = vmin.f32 %v4909, 6.0
      %v4974 = vmin.f32 %v4910, 6.0
      %v4975 = vmin.f32 %v4911, 6.0
      %v4976 = vmin.f32 %v4912, 6.0
      %v4977 = vmin.f32 %v4913, 6.0
      %v4978 = vmin.f32 %v4914, 6.0
      %v4979 = vmin.f32 %v4915, 6.0
      %v4980 = vmin.f32 %v4916, 6.0
      %v4981 = vmin.f32 %v4917, 6.0
      %v4982 = vmin.f32 %v4918, 6.0
      %v4983 = vmin.f32 %v4919, 6.0
      %v4984 = vmin.f32 %v4920, 6.0
      %v4985 = vmin.f32 %v4921, 6.0
      %v4986 = vmin.f32 %v4922, 6.0
      %v4987 = vmin.f32 %v4923, 6.0
      %v4988 = vmin.f32 %v4924, 6.0
      %v4989 = vmin.f32 %v4925, 6.0
      %v4990 = vmin.f32 %v4926, 6.0
      %v4991 = vmin.f32 %v4927, 6.0
      %v4992 = vmin.f32 %v4928, 6.0
      %v4993 = vmin.f32 %v4929, 6.0
      %v4994 = vmin.f32 %v4930, 6.0
      %v4995 = vmin.f32 %v4931, 6.0
      %v4996 = vmin.f32 %v4932, 6.0
      %v4997 = vmin.f32 %v4933, 6.0
      %v4998 = vmin.f32 %v4934, 6.0
      %v4999 = vmin.f32 %v4935, 6.0
      %v5000 = vmin.f32 %v4936, 6.0
      %v5001 = vmin.f32 %v4937, 6.0
      %v5002 = vmin.f32 %v4938, 6.0
      %v5003 = vmin.f32 %v4939, 6.0
      %v5004 = vmin.f32 %v4940, 6.0
      %v5005 = vmin.f32 %v4941, 6.0
      %v5006 = vmin.f32 %v4942, 6.0
      %v5007 = vmin.f32 %v4943, 6.0
      %v5008 = vmin.f32 %v4944, 6.0
      %v5009 = vmin.f32 %v4945, 6.0
      %v5010 = vmin.f32 %v4946, 6.0
      %v5011 = vmin.f32 %v4947, 6.0
      %v5012 = vmin.f32 %v4948, 6.0
      %v5013 = vmin.f32 %v4949, 6.0
      %v5014 = vmin.f32 %v4950, 6.0
      %v5015 = vmin.f32 %v4951, 6.0
      %v5016 = vmin.f32 %v4952, 6.0
      %v5017 = vpack.c.bf16 %v4955, %v4953
      %v5018 = vpack.c.bf16 %v4956, %v4954
      %v5019 = vpack.c.bf16 %v4959, %v4957
      %v5020 = vpack.c.bf16 %v4960, %v4958
      %v5021 = vpack.c.bf16 %v4963, %v4961
      %v5022 = vpack.c.bf16 %v4964, %v4962
      %v5023 = vpack.c.bf16 %v4967, %v4965
      %v5024 = vpack.c.bf16 %v4968, %v4966
      %v5025 = vpack.c.bf16 %v4971, %v4969
      %v5026 = vpack.c.bf16 %v4972, %v4970
      %v5027 = vpack.c.bf16 %v4975, %v4973
      %v5028 = vpack.c.bf16 %v4976, %v4974
      %v5029 = vpack.c.bf16 %v4979, %v4977
      %v5030 = vpack.c.bf16 %v4980, %v4978
      %v5031 = vpack.c.bf16 %v4983, %v4981
      %v5032 = vpack.c.bf16 %v4984, %v4982
      %v5033 = vpack.c.bf16 %v4987, %v4985
      %v5034 = vpack.c.bf16 %v4988, %v4986
      %v5035 = vpack.c.bf16 %v4991, %v4989
      %v5036 = vpack.c.bf16 %v4992, %v4990
      %v5037 = vpack.c.bf16 %v4995, %v4993
      %v5038 = vpack.c.bf16 %v4996, %v4994
      %v5039 = vpack.c.bf16 %v4999, %v4997
      %v5040 = vpack.c.bf16 %v5000, %v4998
      %v5041 = vpack.c.bf16 %v5003, %v5001
      %v5042 = vpack.c.bf16 %v5004, %v5002
      %v5043 = vpack.c.bf16 %v5007, %v5005
      %v5044 = vpack.c.bf16 %v5008, %v5006
      %v5045 = vpack.c.bf16 %v5011, %v5009
      %v5046 = vpack.c.bf16 %v5012, %v5010
      %v5047 = vpack.c.bf16 %v5015, %v5013
      %v5048 = vpack.c.bf16 %v5016, %v5014
      %v5049 = vld [vmem:[%s5] sm:$0xf]
      %v5050 = vld [vmem:[%s5 + $0x4] sm:$0xf]
      %v5051 = vld [vmem:[%s5 + $0x8] sm:$0xf]
      %v5052 = vld [vmem:[%s5 + $0xc] sm:$0xf]
      %v5053 = vld [vmem:[%s5 + $0x10] sm:$0xf]
      %v5054 = vld [vmem:[%s5 + $0x14] sm:$0xf]
      %v5055 = vld [vmem:[%s5 + $0x18] sm:$0xf]
      %v5056 = vld [vmem:[%s5 + $0x1c] sm:$0xf]
      %v5057 = vld [vmem:[%s5 + $0x20] sm:$0xf]
      %v5058 = vld [vmem:[%s5 + $0x24] sm:$0xf]
      %v5059 = vld [vmem:[%s5 + $0x28] sm:$0xf]
      %v5060 = vld [vmem:[%s5 + $0x2c] sm:$0xf]
      %v5061 = vld [vmem:[%s5 + $0x30] sm:$0xf]
      %v5062 = vld [vmem:[%s5 + $0x34] sm:$0xf]
      %v5063 = vld [vmem:[%s5 + $0x38] sm:$0xf]
      %v5064 = vld [vmem:[%s5 + $0x3c] sm:$0xf]
      %v5065 = vld [vmem:[%s5 + $0x40] sm:$0xf]
      %v5066 = vld [vmem:[%s5 + $0x44] sm:$0xf]
      %v5067 = vld [vmem:[%s5 + $0x48] sm:$0xf]
      %v5068 = vld [vmem:[%s5 + $0x4c] sm:$0xf]
      %v5069 = vld [vmem:[%s5 + $0x50] sm:$0xf]
      %v5070 = vld [vmem:[%s5 + $0x54] sm:$0xf]
      %v5071 = vld [vmem:[%s5 + $0x58] sm:$0xf]
      %v5072 = vld [vmem:[%s5 + $0x5c] sm:$0xf]
      %v5073 = vld [vmem:[%s5 + $0x60] sm:$0xf]
      %v5074 = vld [vmem:[%s5 + $0x64] sm:$0xf]
      %v5075 = vld [vmem:[%s5 + $0x68] sm:$0xf]
      %v5076 = vld [vmem:[%s5 + $0x6c] sm:$0xf]
      %v5077 = vld [vmem:[%s5 + $0x70] sm:$0xf]
      %v5078 = vld [vmem:[%s5 + $0x74] sm:$0xf]
      %v5079 = vld [vmem:[%s5 + $0x78] sm:$0xf]
      %v5080 = vld [vmem:[%s5 + $0x7c] sm:$0xf]
      %v5081 = vld [vmem:[%s6] sm:$0x1]
      %v5083 = vlaneseq
      %v5084 = vshrl.u32 %v5083, 7
      %v5085 = vsub.s32 0, %v5084
      %v5086 = vrot.slane %v5081, %v5085
      %v5120 = vunpack.c.l.b16 %v5049
      %v5121 = vunpack.c.l.b16 %v5050
      %v5122 = vunpack.c.l.b16 %v5051
      %v5123 = vunpack.c.l.b16 %v5052
      %v5124 = vunpack.c.l.b16 %v5053
      %v5125 = vunpack.c.l.b16 %v5054
      %v5126 = vunpack.c.l.b16 %v5055
      %v5127 = vunpack.c.l.b16 %v5056
      %v5128 = vunpack.c.l.b16 %v5057
      %v5129 = vunpack.c.l.b16 %v5058
      %v5130 = vunpack.c.l.b16 %v5059
      %v5131 = vunpack.c.l.b16 %v5060
      %v5132 = vunpack.c.l.b16 %v5061
      %v5133 = vunpack.c.l.b16 %v5062
      %v5134 = vunpack.c.l.b16 %v5063
      %v5135 = vunpack.c.l.b16 %v5064
      %v5136 = vunpack.c.l.b16 %v5065
      %v5137 = vunpack.c.l.b16 %v5066
      %v5138 = vunpack.c.l.b16 %v5067
      %v5139 = vunpack.c.l.b16 %v5068
      %v5140 = vunpack.c.l.b16 %v5069
      %v5141 = vunpack.c.l.b16 %v5070
      %v5142 = vunpack.c.l.b16 %v5071
      %v5143 = vunpack.c.l.b16 %v5072
      %v5144 = vunpack.c.l.b16 %v5073
      %v5145 = vunpack.c.l.b16 %v5074
      %v5146 = vunpack.c.l.b16 %v5075
      %v5147 = vunpack.c.l.b16 %v5076
      %v5148 = vunpack.c.l.b16 %v5077
      %v5149 = vunpack.c.l.b16 %v5078
      %v5150 = vunpack.c.l.b16 %v5079
      %v5151 = vunpack.c.l.b16 %v5080
      %v5152 = vpack.c.b16 %v5121, %v5120
      %v5153 = vpack.c.b16 %v5123, %v5122
      %v5154 = vpack.c.b16 %v5125, %v5124
      %v5155 = vpack.c.b16 %v5127, %v5126
      %v5156 = vpack.c.b16 %v5129, %v5128
      %v5157 = vpack.c.b16 %v5131, %v5130
      %v5158 = vpack.c.b16 %v5133, %v5132
      %v5159 = vpack.c.b16 %v5135, %v5134
      %v5160 = vpack.c.b16 %v5137, %v5136
      %v5161 = vpack.c.b16 %v5139, %v5138
      %v5162 = vpack.c.b16 %v5141, %v5140
      %v5163 = vpack.c.b16 %v5143, %v5142
      %v5164 = vpack.c.b16 %v5145, %v5144
      %v5165 = vpack.c.b16 %v5147, %v5146
      %v5166 = vpack.c.b16 %v5149, %v5148
      %v5167 = vpack.c.b16 %v5151, %v5150
      %5184 = vmatprep.subr.bf16.mxu0 0
      %5185 = vmatpush1.bf16.msra.mxu0 %v5152
      %5186 = vmatprep.subr.bf16.mxu0 0
      %5187 = vmatpush1.bf16.msra.mxu0 %v5153
      %5188 = vmatprep.subr.bf16.mxu0 0
      %5189 = vmatpush1.bf16.msra.mxu0 %v5154
      %5190 = vmatprep.subr.bf16.mxu0 0
      %5191 = vmatpush1.bf16.msra.mxu0 %v5155
      %5192 = vmatprep.subr.bf16.mxu0 0
      %5193 = vmatpush1.bf16.msra.mxu0 %v5156
      %5194 = vmatprep.subr.bf16.mxu0 0
      %5195 = vmatpush1.bf16.msra.mxu0 %v5157
      %5196 = vmatprep.subr.bf16.mxu0 0
      %5197 = vmatpush1.bf16.msra.mxu0 %v5158
      %5198 = vmatprep.subr.bf16.mxu0 0
      %5199 = vmatpush1.bf16.msra.mxu0 %v5159
      %5200 = vmatprep.subr.bf16.mxu0 0
      %5201 = vmatpush1.bf16.msra.mxu0 %v5160
      %5202 = vmatprep.subr.bf16.mxu0 0
      %5203 = vmatpush1.bf16.msra.mxu0 %v5161
      %5204 = vmatprep.subr.bf16.mxu0 0
      %5205 = vmatpush1.bf16.msra.mxu0 %v5162
      %5206 = vmatprep.subr.bf16.mxu0 0
      %5207 = vmatpush1.bf16.msra.mxu0 %v5163
      %5208 = vmatprep.subr.bf16.mxu0 0
      %5209 = vmatpush1.bf16.msra.mxu0 %v5164
      %5210 = vmatprep.subr.bf16.mxu0 0
      %5211 = vmatpush1.bf16.msra.mxu0 %v5165
      %5212 = vmatprep.subr.bf16.mxu0 0
      %5213 = vmatpush1.bf16.msra.mxu0 %v5166
      %5214 = vmatprep.subr.bf16.mxu0 0
      %5215 = vmatpush1.bf16.msra.mxu0 %v5167
      %5216 = vmatprep.mubr.bf16.mxu0 %v5018
      %5217 = vmatmul.mubr.bf16.gmra.mrb[0].mxu0 %v5017
      %v5218 = vpop.f32.mrb[0].mxu0
      %v5219 = vadd.f32 %v5086, %v5218
      %v5220 = vpop.f32.mrb[0].mxu0
      %v5221 = vpop.f32.mrb[0].mxu0
      %v5222 = vadd.f32 %v5086, %v5221
      %v5223 = vpop.f32.mrb[0].mxu0
      %5224 = vmatprep.mubr.bf16.mxu0 %v5020
      %5225 = vmatmul.mubr.bf16.gmra.mrb[0].mxu0 %v5019
      %v5226 = vpop.f32.mrb[0].mxu0
      %v5227 = vadd.f32 %v5086, %v5226
      %v5228 = vpop.f32.mrb[0].mxu0
      %v5229 = vpop.f32.mrb[0].mxu0
      %v5230 = vadd.f32 %v5086, %v5229
      %v5231 = vpop.f32.mrb[0].mxu0
      %5232 = vmatprep.mubr.bf16.mxu0 %v5022
      %5233 = vmatmul.mubr.bf16.gmra.mrb[0].mxu0 %v5021
      %v5234 = vpop.f32.mrb[0].mxu0
      %v5235 = vadd.f32 %v5086, %v5234
      %v5236 = vpop.f32.mrb[0].mxu0
      %v5237 = vpop.f32.mrb[0].mxu0
      %v5238 = vadd.f32 %v5086, %v5237
      %v5239 = vpop.f32.mrb[0].mxu0
      %5240 = vmatprep.mubr.bf16.mxu0 %v5024
      %5241 = vmatmul.mubr.bf16.gmra.mrb[0].mxu0 %v5023
      %v5242 = vpop.f32.mrb[0].mxu0
      %v5243 = vadd.f32 %v5086, %v5242
      %v5244 = vpop.f32.mrb[0].mxu0
      %v5245 = vpop.f32.mrb[0].mxu0
      %v5246 = vadd.f32 %v5086, %v5245
      %v5247 = vpop.f32.mrb[0].mxu0
      %5248 = vmatprep.mubr.bf16.mxu0 %v5026
      %5249 = vmatmul.mubr.bf16.gmra.mrb[0].mxu0 %v5025
      %v5250 = vpop.f32.mrb[0].mxu0
      %v5251 = vadd.f32 %v5086, %v5250
      %v5252 = vpop.f32.mrb[0].mxu0
      %v5253 = vpop.f32.mrb[0].mxu0
      %v5254 = vadd.f32 %v5086, %v5253
      %v5255 = vpop.f32.mrb[0].mxu0
      %5256 = vmatprep.mubr.bf16.mxu0 %v5028
      %5257 = vmatmul.mubr.bf16.gmra.mrb[0].mxu0 %v5027
      %v5258 = vpop.f32.mrb[0].mxu0
      %v5259 = vadd.f32 %v5086, %v5258
      %v5260 = vpop.f32.mrb[0].mxu0
      %v5261 = vpop.f32.mrb[0].mxu0
      %v5262 = vadd.f32 %v5086, %v5261
      %v5263 = vpop.f32.mrb[0].mxu0
      %5264 = vmatprep.mubr.bf16.mxu0 %v5030
      %5265 = vmatmul.mubr.bf16.gmra.mrb[0].mxu0 %v5029
      %v5266 = vpop.f32.mrb[0].mxu0
      %v5267 = vadd.f32 %v5086, %v5266
      %v5268 = vpop.f32.mrb[0].mxu0
      %v5269 = vpop.f32.mrb[0].mxu0
      %v5270 = vadd.f32 %v5086, %v5269
      %v5271 = vpop.f32.mrb[0].mxu0
      %5272 = vmatprep.mubr.bf16.mxu0 %v5032
      %5273 = vmatmul.mubr.bf16.gmra.mrb[0].mxu0 %v5031
      %v5274 = vpop.f32.mrb[0].mxu0
      %v5275 = vadd.f32 %v5086, %v5274
      %v5276 = vpop.f32.mrb[0].mxu0
      %v5277 = vpop.f32.mrb[0].mxu0
      %v5278 = vadd.f32 %v5086, %v5277
      %v5279 = vpop.f32.mrb[0].mxu0
      %5280 = vmatprep.mubr.bf16.mxu0 %v5034
      %5281 = vmatmul.mubr.bf16.gmra.mrb[0].mxu0 %v5033
      %v5282 = vpop.f32.mrb[0].mxu0
      %v5283 = vadd.f32 %v5086, %v5282
      %v5284 = vpop.f32.mrb[0].mxu0
      %v5285 = vpop.f32.mrb[0].mxu0
      %v5286 = vadd.f32 %v5086, %v5285
      %v5287 = vpop.f32.mrb[0].mxu0
      %5288 = vmatprep.mubr.bf16.mxu0 %v5036
      %5289 = vmatmul.mubr.bf16.gmra.mrb[0].mxu0 %v5035
      %v5290 = vpop.f32.mrb[0].mxu0
      %v5291 = vadd.f32 %v5086, %v5290
      %v5292 = vpop.f32.mrb[0].mxu0
      %v5293 = vpop.f32.mrb[0].mxu0
      %v5294 = vadd.f32 %v5086, %v5293
      %v5295 = vpop.f32.mrb[0].mxu0
      %5296 = vmatprep.mubr.bf16.mxu0 %v5038
      %5297 = vmatmul.mubr.bf16.gmra.mrb[0].mxu0 %v5037
      %v5298 = vpop.f32.mrb[0].mxu0
      %v5299 = vadd.f32 %v5086, %v5298
      %v5300 = vpop.f32.mrb[0].mxu0
      %v5301 = vpop.f32.mrb[0].mxu0
      %v5302 = vadd.f32 %v5086, %v5301
      %v5303 = vpop.f32.mrb[0].mxu0
      %5304 = vmatprep.mubr.bf16.mxu0 %v5040
      %5305 = vmatmul.mubr.bf16.gmra.mrb[0].mxu0 %v5039
      %v5306 = vpop.f32.mrb[0].mxu0
      %v5307 = vadd.f32 %v5086, %v5306
      %v5308 = vpop.f32.mrb[0].mxu0
      %v5309 = vpop.f32.mrb[0].mxu0
      %v5310 = vadd.f32 %v5086, %v5309
      %v5311 = vpop.f32.mrb[0].mxu0
      %5312 = vmatprep.mubr.bf16.mxu0 %v5042
      %5313 = vmatmul.mubr.bf16.gmra.mrb[0].mxu0 %v5041
      %v5314 = vpop.f32.mrb[0].mxu0
      %v5315 = vadd.f32 %v5086, %v5314
      %v5316 = vpop.f32.mrb[0].mxu0
      %v5317 = vpop.f32.mrb[0].mxu0
      %v5318 = vadd.f32 %v5086, %v5317
      %v5319 = vpop.f32.mrb[0].mxu0
      %5320 = vmatprep.mubr.bf16.mxu0 %v5044
      %5321 = vmatmul.mubr.bf16.gmra.mrb[0].mxu0 %v5043
      %v5322 = vpop.f32.mrb[0].mxu0
      %v5323 = vadd.f32 %v5086, %v5322
      %v5324 = vpop.f32.mrb[0].mxu0
      %v5325 = vpop.f32.mrb[0].mxu0
      %v5326 = vadd.f32 %v5086, %v5325
      %v5327 = vpop.f32.mrb[0].mxu0
      %5328 = vmatprep.mubr.bf16.mxu0 %v5046
      %5329 = vmatmul.mubr.bf16.gmra.mrb[0].mxu0 %v5045
      %v5330 = vpop.f32.mrb[0].mxu0
      %v5331 = vadd.f32 %v5086, %v5330
      %v5332 = vpop.f32.mrb[0].mxu0
      %v5333 = vpop.f32.mrb[0].mxu0
      %v5334 = vadd.f32 %v5086, %v5333
      %v5335 = vpop.f32.mrb[0].mxu0
      %5336 = vmatprep.mubr.bf16.mxu0 %v5048
      %5337 = vmatmul.mubr.bf16.gmra.mrb[0].mxu0 %v5047
      %v5338 = vpop.f32.mrb[0].mxu0
      %v5339 = vadd.f32 %v5086, %v5338
      %v5340 = vpop.f32.mrb[0].mxu0
      %v5341 = vpop.f32.mrb[0].mxu0
      %v5342 = vadd.f32 %v5086, %v5341
      %v5343 = vpop.f32.mrb[0].mxu0
      %5344 = vdwg.mxu0
      %v5345 = vadd.f32 %v5219, %v280
      %v5346 = vadd.f32 %v5222, %v281
      %v5347 = vadd.f32 %v5227, %v282
      %v5348 = vadd.f32 %v5230, %v283
      %v5349 = vadd.f32 %v5235, %v284
      %v5350 = vadd.f32 %v5238, %v285
      %v5351 = vadd.f32 %v5243, %v286
      %v5352 = vadd.f32 %v5246, %v287
      %v5353 = vadd.f32 %v5251, %v288
      %v5354 = vadd.f32 %v5254, %v289
      %v5355 = vadd.f32 %v5259, %v290
      %v5356 = vadd.f32 %v5262, %v291
      %v5357 = vadd.f32 %v5267, %v292
      %v5358 = vadd.f32 %v5270, %v293
      %v5359 = vadd.f32 %v5275, %v294
      %v5360 = vadd.f32 %v5278, %v295
      %v5361 = vadd.f32 %v5283, %v296
      %v5362 = vadd.f32 %v5286, %v297
      %v5363 = vadd.f32 %v5291, %v298
      %v5364 = vadd.f32 %v5294, %v299
      %v5365 = vadd.f32 %v5299, %v300
      %v5366 = vadd.f32 %v5302, %v301
      %v5367 = vadd.f32 %v5307, %v302
      %v5368 = vadd.f32 %v5310, %v303
      %v5369 = vadd.f32 %v5315, %v304
      %v5370 = vadd.f32 %v5318, %v305
      %v5371 = vadd.f32 %v5323, %v306
      %v5372 = vadd.f32 %v5326, %v307
      %v5373 = vadd.f32 %v5331, %v308
      %v5374 = vadd.f32 %v5334, %v309
      %v5375 = vadd.f32 %v5339, %v310
      %v5376 = vadd.f32 %v5342, %v311
      %5377 = vst [vmem:[%s278] sm:$0xff] %v5345
      %5378 = vst [vmem:[%s278 + $0x8] sm:$0xff] %v5346
      %5379 = vst [vmem:[%s278 + $0x10] sm:$0xff] %v5347
      %5380 = vst [vmem:[%s278 + $0x18] sm:$0xff] %v5348
      %5381 = vst [vmem:[%s278 + $0x20] sm:$0xff] %v5349
      %5382 = vst [vmem:[%s278 + $0x28] sm:$0xff] %v5350
      %5383 = vst [vmem:[%s278 + $0x30] sm:$0xff] %v5351
      %5384 = vst [vmem:[%s278 + $0x38] sm:$0xff] %v5352
      %5385 = vst [vmem:[%s278 + $0x40] sm:$0xff] %v5353
      %5386 = vst [vmem:[%s278 + $0x48] sm:$0xff] %v5354
      %5387 = vst [vmem:[%s278 + $0x50] sm:$0xff] %v5355
      %5388 = vst [vmem:[%s278 + $0x58] sm:$0xff] %v5356
      %5389 = vst [vmem:[%s278 + $0x60] sm:$0xff] %v5357
      %5390 = vst [vmem:[%s278 + $0x68] sm:$0xff] %v5358
      %5391 = vst [vmem:[%s278 + $0x70] sm:$0xff] %v5359
      %5392 = vst [vmem:[%s278 + $0x78] sm:$0xff] %v5360
      %5393 = vst [vmem:[%s278 + $0x80] sm:$0xff] %v5361
      %5394 = vst [vmem:[%s278 + $0x88] sm:$0xff] %v5362
      %5395 = vst [vmem:[%s278 + $0x90] sm:$0xff] %v5363
      %5396 = vst [vmem:[%s278 + $0x98] sm:$0xff] %v5364
      %5397 = vst [vmem:[%s278 + $0xa0] sm:$0xff] %v5365
      %5398 = vst [vmem:[%s278 + $0xa8] sm:$0xff] %v5366
      %5399 = vst [vmem:[%s278 + $0xb0] sm:$0xff] %v5367
      %5400 = vst [vmem:[%s278 + $0xb8] sm:$0xff] %v5368
      %5401 = vst [vmem:[%s278 + $0xc0] sm:$0xff] %v5369
      %5402 = vst [vmem:[%s278 + $0xc8] sm:$0xff] %v5370
      %5403 = vst [vmem:[%s278 + $0xd0] sm:$0xff] %v5371
      %5404 = vst [vmem:[%s278 + $0xd8] sm:$0xff] %v5372
      %5405 = vst [vmem:[%s278 + $0xe0] sm:$0xff] %v5373
      %5406 = vst [vmem:[%s278 + $0xe8] sm:$0xff] %v5374
      %5407 = vst [vmem:[%s278 + $0xf0] sm:$0xff] %v5375
      %5408 = vst [vmem:[%s278 + $0xf8] sm:$0xff] %v5376
      %p5409 = scmp.lt.s32.totalorder %s18, 1
      %s5410 = scalar_select %p5409, %s18, 1
      %s5411 = smul.addr %s5410, 32
      %s5412 = smul.addr %s5411, 8
      %s5413 = scalar_lea.vmem %s7, %s5412
      // Predicated region
      $region49: #{_lambda_.1} parent=47 // pred_check
        %p5414 = pneg %p188
      $region50: #{_lambda_.1} parent=47 // pred_check_branch
        %5416 = sbr.rel (%p5414) target = $region52
      $region51: #{_lambda_.1} parent=47 // pred_region
        _
      $region52: #{_lambda_.1} parent=47 // pred_fallthru
        _
    $region48: #{_lambda_.1} parent=5 // pred_fallthru
      _
    %p5417 = scmp.le.s32.totalorder 2, %s13
    // Predicated region
    $region53: #{_lambda_.1} parent=5 // pred_check
      %p5418 = pneg %p5417
    $region54: #{_lambda_.1} parent=5 // pred_check_branch
      %5420 = sbr.rel (%p5418) target = $region56
    $region55: #{_lambda_.1} parent=5 // pred_region
      %s5421 = ssub.s32 %s13, 2
      // Predicated region
      $region57: #{_lambda_.1} parent=55 // pred_check
        %p5422 = pneg %p194
      $region58: #{_lambda_.1} parent=55 // pred_check_branch
        %5424 = sbr.rel (%p5422) target = $region60
      $region59: #{_lambda_.1} parent=55 // pred_region
        %p5425 = scmp.lt.s32.totalorder %s19, 1
        %s5426 = scalar_select %p5425, %s19, 1
        %s5427 = smul.addr %s5426, 32
        %s5428 = smul.addr %s5427, 8
        %s5429 = scalar_lea.vmem %s7, %s5428
      $region60: #{_lambda_.1} parent=55 // pred_fallthru
        _
    $region56: #{_lambda_.1} parent=5 // pred_fallthru
      _
  $region6: #{_lambda_.1} parent=0 // loop_footer
    %s17 = sadd.s32 1, %s13
  $region7: #{_lambda_.1} parent=0 // loop_footer_branch
    %12 = sbr.rel target = $region3
  $region8: #{_lambda_.1} parent=0 // loop_exit
    _

</llo_original>
